<compile_context>
chip_gen: v7x
topology: tpu7x:2x2x1
jax: 0.10.0
libtpu: 0.0.40
codegen_flags: <defaults>
</compile_context>

<pallas_src>
import jax
import jax.numpy as jnp
import numpy as np
from jax.experimental import pallas as pl
from jax.experimental.pallas import tpu as pltpu

# ----------------------------- static network geometry ------------------------
IN_H = IN_W = 28          # fc1 = Linear(32*4*4, 10) forces a 1x28x28 input (MNIST)
KS = 5                    # conv kernel size
C1, C2 = 16, 32           # conv output channels
NCLS = 10

H1 = IN_H - KS + 1                      # 24 : conv1 valid output H/W
L1 = (H1 - 1) * IN_W + (H1 - 1) + 1     # 668: flat lanes covering all valid conv1 outputs
PB1 = (H1 - 2) * IN_W + (H1 - 2) + 1    # 639: pool1 2x2-window base positions
HP1 = H1 // 2                           # 12 : pool1 output H/W

H2 = HP1 - KS + 1                       # 8  : conv2 valid output H/W
L2 = (H2 - 1) * HP1 + (H2 - 1) + 1      # 92
PB2 = (H2 - 2) * HP1 + (H2 - 2) + 1     # 79
HP2 = H2 // 2                           # 4
FEAT = C2 * HP2 * HP2                   # 512
K1 = KS * KS                            # 25
K2 = C1 * KS * KS                       # 400


# ------------------------------ fused kernel ----------------------------------
def _cnn_fused_kernel(x_ref, w1_ref, b1_ref, w2_ref, b2_ref, wf_ref, bf_ref,
                      s1_ref, s2_ref, o_ref,
                      p1_ref, a1_ref, pool1_ref, p2_ref, a2_ref, pool2_ref,
                      feat_ref):
    # ---- conv1 + ReLU: im2col built in VMEM, one MXU matmul --------------------
    # Tap (kh,kw) is a contiguous slice of the flat image:
    #   patch[t, q] = x_flat[q + kh*28 + kw],  q = ho*28 + wo  (valid for wo < 24).
    for kh in range(KS):
        for kw in range(KS):
            t = kh * KS + kw
            off = kh * IN_W + kw
            p1_ref[t:t + 1, :] = x_ref[0, :, off:off + L1]
    a1 = jnp.dot(w1_ref[...], p1_ref[...], preferred_element_type=jnp.float32)
    a1_ref[...] = jnp.maximum(a1 + b1_ref[...], 0.0)

    # ---- maxpool1 (2x2 stride 2), fused: shifted maxes + 0/1 compaction matmul --
    m1 = jnp.maximum(
        jnp.maximum(a1_ref[:, 0:PB1], a1_ref[:, 1:PB1 + 1]),
        jnp.maximum(a1_ref[:, IN_W:IN_W + PB1],
                    a1_ref[:, IN_W + 1:IN_W + 1 + PB1]))
    pool1_ref[...] = jnp.dot(m1, s1_ref[...], preferred_element_type=jnp.float32)

    # ---- conv2 + ReLU -----------------------------------------------------------
    # pooled1 is a dense 12x12 grid; tap (kh,kw) is again a contiguous slice.
    for kh in range(KS):
        for kw in range(KS):
            t = kh * KS + kw
            off = kh * HP1 + kw
            p2_ref[t * C1:(t + 1) * C1, :] = pool1_ref[:, off:off + L2]
    a2 = jnp.dot(w2_ref[...], p2_ref[...], preferred_element_type=jnp.float32)
    a2_ref[...] = jnp.maximum(a2 + b2_ref[...], 0.0)

    # ---- maxpool2 ---------------------------------------------------------------
    m2 = jnp.maximum(
        jnp.maximum(a2_ref[:, 0:PB2], a2_ref[:, 1:PB2 + 1]),
        jnp.maximum(a2_ref[:, HP1:HP1 + PB2],
                    a2_ref[:, HP1 + 1:HP1 + 1 + PB2]))
    pool2_ref[...] = jnp.dot(m2, s2_ref[...], preferred_element_type=jnp.float32)

    # ---- flatten in torch (c, h, w) order, then fc1 -----------------------------
    for c in range(C2):
        feat_ref[:, c * HP2 * HP2:(c + 1) * HP2 * HP2] = pool2_ref[c:c + 1, :]
    logits = jnp.dot(feat_ref[...], wf_ref[...],
                     preferred_element_type=jnp.float32) + bf_ref[...]
    o_ref[0] = logits


# ------------------------------ wrapper ---------------------------------------
def _pool_select(grid_w, out_w, n_bases):
    """0/1 matrix S[q, r] = 1 iff q == 2*(r//out_w)*grid_w + 2*(r%out_w)."""
    q = jnp.arange(n_bases, dtype=jnp.int32)[:, None]
    r = jnp.arange(out_w * out_w, dtype=jnp.int32)[None, :]
    sel = 2 * (r // out_w) * grid_w + 2 * (r % out_w)
    return (q == sel).astype(jnp.float32)


def cnn_forward(x, params):
    w1, b1, w2, b2, wf, bf = params
    B, Cin, H, W = x.shape
    assert (Cin, H, W) == (1, IN_H, IN_W), "CNNModel's fc1 implies 1x28x28 inputs"

    x_flat = x.reshape(B, 1, IN_H * IN_W).astype(jnp.float32)
    w1_2d = w1.reshape(C1, K1)                                # K order (kh, kw); Cin=1
    w2_2d = jnp.transpose(w2, (0, 2, 3, 1)).reshape(C2, K2)   # K order (kh, kw, cin)
    wf_t = jnp.transpose(wf)                                  # [512, 10]
    b1c = b1.reshape(C1, 1)
    b2c = b2.reshape(C2, 1)
    bfr = bf.reshape(1, NCLS)
    s1 = _pool_select(IN_W, HP1, PB1)                         # [639, 144]
    s2 = _pool_select(HP1, HP2, PB2)                          # [79, 16]

    const2d = lambda b: (0, 0)
    out = pl.pallas_call(
        _cnn_fused_kernel,
        out_shape=jax.ShapeDtypeStruct((B, 1, NCLS), jnp.float32),
        grid_spec=pltpu.PrefetchScalarGridSpec(
            num_scalar_prefetch=0,
            grid=(B,),
            in_specs=[
                pl.BlockSpec((1, 1, IN_H * IN_W), lambda b: (b, 0, 0)),  # image
                pl.BlockSpec((C1, K1), const2d),                         # w1
                pl.BlockSpec((C1, 1), const2d),                          # b1
                pl.BlockSpec((C2, K2), const2d),                         # w2
                pl.BlockSpec((C2, 1), const2d),                          # b2
                pl.BlockSpec((FEAT, NCLS), const2d),                     # fc weight^T
                pl.BlockSpec((1, NCLS), const2d),                        # fc bias
                pl.BlockSpec((PB1, HP1 * HP1), const2d),                 # pool1 select
                pl.BlockSpec((PB2, HP2 * HP2), const2d),                 # pool2 select
            ],
            out_specs=pl.BlockSpec((1, 1, NCLS), lambda b: (b, 0, 0)),
            scratch_shapes=[
                pltpu.VMEM((K1, L1), jnp.float32),          # conv1 patch matrix
                pltpu.VMEM((C1, L1), jnp.float32),          # conv1 activations
                pltpu.VMEM((C1, HP1 * HP1), jnp.float32),   # pooled1 (dense 12x12)
                pltpu.VMEM((K2, L2), jnp.float32),          # conv2 patch matrix
                pltpu.VMEM((C2, L2), jnp.float32),          # conv2 activations
                pltpu.VMEM((C2, HP2 * HP2), jnp.float32),   # pooled2 (dense 4x4)
                pltpu.VMEM((1, FEAT), jnp.float32),         # flattened features
            ],
        ),
        compiler_params=pltpu.CompilerParams(
            dimension_semantics=("parallel",),
            vmem_limit_bytes=32 * 1024 * 1024,
        ),
    )(x_flat, w1_2d, b1c, w2_2d, b2c, wf_t, bfr, s1, s2)
    return out.reshape(B, NCLS)


# ------------------------------ params / reference ----------------------------
def init_params(key):
    k1, k2, k3, k4, k5, k6 = jax.random.split(key, 6)
    w1 = jax.random.normal(k1, (C1, 1, KS, KS), jnp.float32) * 0.1
    b1 = jax.random.normal(k2, (C1,), jnp.float32) * 0.1
    w2 = jax.random.normal(k3, (C2, C1, KS, KS), jnp.float32) * 0.05
    b2 = jax.random.normal(k4, (C2,), jnp.float32) * 0.05
    wf = jax.random.normal(k5, (NCLS, FEAT), jnp.float32) * 0.05
    bf = jax.random.normal(k6, (NCLS,), jnp.float32) * 0.05
    return w1, b1, w2, b2, wf, bf


def reference_forward(x, params):
    """Pure-JAX reference with the same semantics as the PyTorch module."""
    w1, b1, w2, b2, wf, bf = params

    def conv(x, w, b):
        y = jax.lax.conv_general_dilated(
            x, w, (1, 1), "VALID", dimension_numbers=("NCHW", "OIHW", "NCHW"))
        return jax.nn.relu(y + b[None, :, None, None])

    def pool(x):
        return jax.lax.reduce_window(x, -jnp.inf, jax.lax.max,
                                     (1, 1, 2, 2), (1, 1, 2, 2), "VALID")

    out = pool(conv(x, w1, b1))
    out = pool(conv(out, w2, b2))
    out = out.reshape(out.shape[0], -1)
    return out @ wf.T + bf


if __name__ == "__main__":
    key = jax.random.PRNGKey(0)
    kx, kp = jax.random.split(key)
    x = jax.random.normal(kx, (2, 1, 28, 28), jnp.float32)
    params = init_params(kp)

    y = jax.jit(cnn_forward)(x, params)
    y = jax.block_until_ready(y)

    y_ref = reference_forward(x, params)
    assert y.shape == (2, 10), y.shape
    np.testing.assert_allclose(np.asarray(y), np.asarray(y_ref),
                               atol=2e-3, rtol=2e-3)
    print("KERNEL_OK")
</pallas_src>

<mosaic_0001>
module attributes {stable_mosaic.version = 11 : i64} {
  func.func @_cnn_fused_kernel(%arg0: i32, %arg1: memref<1x1x784xf32, #tpu.memory_space<vmem>>, %arg2: memref<16x25xf32, #tpu.memory_space<vmem>>, %arg3: memref<16x1xf32, #tpu.memory_space<vmem>>, %arg4: memref<32x400xf32, #tpu.memory_space<vmem>>, %arg5: memref<32x1xf32, #tpu.memory_space<vmem>>, %arg6: memref<512x10xf32, #tpu.memory_space<vmem>>, %arg7: memref<1x10xf32, #tpu.memory_space<vmem>>, %arg8: memref<639x144xf32, #tpu.memory_space<vmem>>, %arg9: memref<79x16xf32, #tpu.memory_space<vmem>>, %arg10: memref<1x1x10xf32, #tpu.memory_space<vmem>>, %arg11: memref<25x668xf32, #tpu.memory_space<vmem>>, %arg12: memref<16x668xf32, #tpu.memory_space<vmem>>, %arg13: memref<16x144xf32, #tpu.memory_space<vmem>>, %arg14: memref<400x92xf32, #tpu.memory_space<vmem>>, %arg15: memref<32x92xf32, #tpu.memory_space<vmem>>, %arg16: memref<32x16xf32, #tpu.memory_space<vmem>>, %arg17: memref<1x512xf32, #tpu.memory_space<vmem>>) attributes {dimension_semantics = [#tpu.dimension_semantics<parallel>], iteration_bounds = array<i64: 2>, scalar_prefetch = 0 : i64, scratch_operands = 7 : i64, tpu.core_type = #tpu.core_type<tc>, window_params = [{transform_indices = @transform_0, window_bounds = array<i64: 1, 1, 784>}, {pipeline_mode = #tpu.pipeline_mode<synchronous>, transform_indices = @transform_1, window_bounds = array<i64: 16, 25>}, {pipeline_mode = #tpu.pipeline_mode<synchronous>, transform_indices = @transform_2, window_bounds = array<i64: 16, 1>}, {pipeline_mode = #tpu.pipeline_mode<synchronous>, transform_indices = @transform_3, window_bounds = array<i64: 32, 400>}, {pipeline_mode = #tpu.pipeline_mode<synchronous>, transform_indices = @transform_4, window_bounds = array<i64: 32, 1>}, {pipeline_mode = #tpu.pipeline_mode<synchronous>, transform_indices = @transform_5, window_bounds = array<i64: 512, 10>}, {pipeline_mode = #tpu.pipeline_mode<synchronous>, transform_indices = @transform_6, window_bounds = array<i64: 1, 10>}, {pipeline_mode = #tpu.pipeline_mode<synchronous>, transform_indices = @transform_7, window_bounds = array<i64: 639, 144>}, {pipeline_mode = #tpu.pipeline_mode<synchronous>, transform_indices = @transform_8, window_bounds = array<i64: 79, 16>}, {transform_indices = @transform_9, window_bounds = array<i64: 1, 1, 10>}]} {
    %c0 = arith.constant 0 : index
    %c0_0 = arith.constant 0 : index
    %c0_1 = arith.constant 0 : index
    %0 = vector.load %arg1[%c0, %c0_0, %c0_1] : memref<1x1x784xf32, #tpu.memory_space<vmem>>, vector<1x1x668xf32>
    %1 = vector.shape_cast %0 : vector<1x1x668xf32> to vector<1x668xf32>
    %c0_2 = arith.constant 0 : index
    %c0_3 = arith.constant 0 : index
    %2 = vector.load %arg11[%c0_2, %c0_3] : memref<25x668xf32, #tpu.memory_space<vmem>>, vector<1x668xf32>
    tpu.vector_store %arg11[%c0_2, %c0_3], %1 {strides = array<i32>} : memref<25x668xf32, #tpu.memory_space<vmem>>, vector<1x668xf32>,
    %c0_4 = arith.constant 0 : index
    %c0_5 = arith.constant 0 : index
    %c1 = arith.constant 1 : index
    %3 = vector.load %arg1[%c0_4, %c0_5, %c1] : memref<1x1x784xf32, #tpu.memory_space<vmem>>, vector<1x1x668xf32>
    %4 = vector.shape_cast %3 : vector<1x1x668xf32> to vector<1x668xf32>
    %c1_6 = arith.constant 1 : index
    %c0_7 = arith.constant 0 : index
    %5 = vector.load %arg11[%c1_6, %c0_7] : memref<25x668xf32, #tpu.memory_space<vmem>>, vector<1x668xf32>
    tpu.vector_store %arg11[%c1_6, %c0_7], %4 {strides = array<i32>} : memref<25x668xf32, #tpu.memory_space<vmem>>, vector<1x668xf32>,
    %c0_8 = arith.constant 0 : index
    %c0_9 = arith.constant 0 : index
    %c2 = arith.constant 2 : index
    %6 = vector.load %arg1[%c0_8, %c0_9, %c2] : memref<1x1x784xf32, #tpu.memory_space<vmem>>, vector<1x1x668xf32>
    %7 = vector.shape_cast %6 : vector<1x1x668xf32> to vector<1x668xf32>
    %c2_10 = arith.constant 2 : index
    %c0_11 = arith.constant 0 : index
    %8 = vector.load %arg11[%c2_10, %c0_11] : memref<25x668xf32, #tpu.memory_space<vmem>>, vector<1x668xf32>
    tpu.vector_store %arg11[%c2_10, %c0_11], %7 {strides = array<i32>} : memref<25x668xf32, #tpu.memory_space<vmem>>, vector<1x668xf32>,
    %c0_12 = arith.constant 0 : index
    %c0_13 = arith.constant 0 : index
    %c3 = arith.constant 3 : index
    %9 = vector.load %arg1[%c0_12, %c0_13, %c3] : memref<1x1x784xf32, #tpu.memory_space<vmem>>, vector<1x1x668xf32>
    %10 = vector.shape_cast %9 : vector<1x1x668xf32> to vector<1x668xf32>
    %c3_14 = arith.constant 3 : index
    %c0_15 = arith.constant 0 : index
    %11 = vector.load %arg11[%c3_14, %c0_15] : memref<25x668xf32, #tpu.memory_space<vmem>>, vector<1x668xf32>
    tpu.vector_store %arg11[%c3_14, %c0_15], %10 {strides = array<i32>} : memref<25x668xf32, #tpu.memory_space<vmem>>, vector<1x668xf32>,
    %c0_16 = arith.constant 0 : index
    %c0_17 = arith.constant 0 : index
    %c4 = arith.constant 4 : index
    %12 = vector.load %arg1[%c0_16, %c0_17, %c4] : memref<1x1x784xf32, #tpu.memory_space<vmem>>, vector<1x1x668xf32>
    %13 = vector.shape_cast %12 : vector<1x1x668xf32> to vector<1x668xf32>
    %c4_18 = arith.constant 4 : index
    %c0_19 = arith.constant 0 : index
    %14 = vector.load %arg11[%c4_18, %c0_19] : memref<25x668xf32, #tpu.memory_space<vmem>>, vector<1x668xf32>
    tpu.vector_store %arg11[%c4_18, %c0_19], %13 {strides = array<i32>} : memref<25x668xf32, #tpu.memory_space<vmem>>, vector<1x668xf32>,
    %c0_20 = arith.constant 0 : index
    %c0_21 = arith.constant 0 : index
    %c28 = arith.constant 28 : index
    %15 = vector.load %arg1[%c0_20, %c0_21, %c28] : memref<1x1x784xf32, #tpu.memory_space<vmem>>, vector<1x1x668xf32>
    %16 = vector.shape_cast %15 : vector<1x1x668xf32> to vector<1x668xf32>
    %c5 = arith.constant 5 : index
    %c0_22 = arith.constant 0 : index
    %17 = vector.load %arg11[%c5, %c0_22] : memref<25x668xf32, #tpu.memory_space<vmem>>, vector<1x668xf32>
    tpu.vector_store %arg11[%c5, %c0_22], %16 {strides = array<i32>} : memref<25x668xf32, #tpu.memory_space<vmem>>, vector<1x668xf32>,
    %c0_23 = arith.constant 0 : index
    %c0_24 = arith.constant 0 : index
    %c29 = arith.constant 29 : index
    %18 = vector.load %arg1[%c0_23, %c0_24, %c29] : memref<1x1x784xf32, #tpu.memory_space<vmem>>, vector<1x1x668xf32>
    %19 = vector.shape_cast %18 : vector<1x1x668xf32> to vector<1x668xf32>
    %c6 = arith.constant 6 : index
    %c0_25 = arith.constant 0 : index
    %20 = vector.load %arg11[%c6, %c0_25] : memref<25x668xf32, #tpu.memory_space<vmem>>, vector<1x668xf32>
    tpu.vector_store %arg11[%c6, %c0_25], %19 {strides = array<i32>} : memref<25x668xf32, #tpu.memory_space<vmem>>, vector<1x668xf32>,
    %c0_26 = arith.constant 0 : index
    %c0_27 = arith.constant 0 : index
    %c30 = arith.constant 30 : index
    %21 = vector.load %arg1[%c0_26, %c0_27, %c30] : memref<1x1x784xf32, #tpu.memory_space<vmem>>, vector<1x1x668xf32>
    %22 = vector.shape_cast %21 : vector<1x1x668xf32> to vector<1x668xf32>
    %c7 = arith.constant 7 : index
    %c0_28 = arith.constant 0 : index
    %23 = vector.load %arg11[%c7, %c0_28] : memref<25x668xf32, #tpu.memory_space<vmem>>, vector<1x668xf32>
    tpu.vector_store %arg11[%c7, %c0_28], %22 {strides = array<i32>} : memref<25x668xf32, #tpu.memory_space<vmem>>, vector<1x668xf32>,
    %c0_29 = arith.constant 0 : index
    %c0_30 = arith.constant 0 : index
    %c31 = arith.constant 31 : index
    %24 = vector.load %arg1[%c0_29, %c0_30, %c31] : memref<1x1x784xf32, #tpu.memory_space<vmem>>, vector<1x1x668xf32>
    %25 = vector.shape_cast %24 : vector<1x1x668xf32> to vector<1x668xf32>
    %c8 = arith.constant 8 : index
    %c0_31 = arith.constant 0 : index
    %26 = vector.load %arg11[%c8, %c0_31] : memref<25x668xf32, #tpu.memory_space<vmem>>, vector<1x668xf32>
    tpu.vector_store %arg11[%c8, %c0_31], %25 {strides = array<i32>} : memref<25x668xf32, #tpu.memory_space<vmem>>, vector<1x668xf32>,
    %c0_32 = arith.constant 0 : index
    %c0_33 = arith.constant 0 : index
    %c32 = arith.constant 32 : index
    %27 = vector.load %arg1[%c0_32, %c0_33, %c32] : memref<1x1x784xf32, #tpu.memory_space<vmem>>, vector<1x1x668xf32>
    %28 = vector.shape_cast %27 : vector<1x1x668xf32> to vector<1x668xf32>
    %c9 = arith.constant 9 : index
    %c0_34 = arith.constant 0 : index
    %29 = vector.load %arg11[%c9, %c0_34] : memref<25x668xf32, #tpu.memory_space<vmem>>, vector<1x668xf32>
    tpu.vector_store %arg11[%c9, %c0_34], %28 {strides = array<i32>} : memref<25x668xf32, #tpu.memory_space<vmem>>, vector<1x668xf32>,
    %c0_35 = arith.constant 0 : index
    %c0_36 = arith.constant 0 : index
    %c56 = arith.constant 56 : index
    %30 = vector.load %arg1[%c0_35, %c0_36, %c56] : memref<1x1x784xf32, #tpu.memory_space<vmem>>, vector<1x1x668xf32>
    %31 = vector.shape_cast %30 : vector<1x1x668xf32> to vector<1x668xf32>
    %c10 = arith.constant 10 : index
    %c0_37 = arith.constant 0 : index
    %32 = vector.load %arg11[%c10, %c0_37] : memref<25x668xf32, #tpu.memory_space<vmem>>, vector<1x668xf32>
    tpu.vector_store %arg11[%c10, %c0_37], %31 {strides = array<i32>} : memref<25x668xf32, #tpu.memory_space<vmem>>, vector<1x668xf32>,
    %c0_38 = arith.constant 0 : index
    %c0_39 = arith.constant 0 : index
    %c57 = arith.constant 57 : index
    %33 = vector.load %arg1[%c0_38, %c0_39, %c57] : memref<1x1x784xf32, #tpu.memory_space<vmem>>, vector<1x1x668xf32>
    %34 = vector.shape_cast %33 : vector<1x1x668xf32> to vector<1x668xf32>
    %c11 = arith.constant 11 : index
    %c0_40 = arith.constant 0 : index
    %35 = vector.load %arg11[%c11, %c0_40] : memref<25x668xf32, #tpu.memory_space<vmem>>, vector<1x668xf32>
    tpu.vector_store %arg11[%c11, %c0_40], %34 {strides = array<i32>} : memref<25x668xf32, #tpu.memory_space<vmem>>, vector<1x668xf32>,
    %c0_41 = arith.constant 0 : index
    %c0_42 = arith.constant 0 : index
    %c58 = arith.constant 58 : index
    %36 = vector.load %arg1[%c0_41, %c0_42, %c58] : memref<1x1x784xf32, #tpu.memory_space<vmem>>, vector<1x1x668xf32>
    %37 = vector.shape_cast %36 : vector<1x1x668xf32> to vector<1x668xf32>
    %c12 = arith.constant 12 : index
    %c0_43 = arith.constant 0 : index
    %38 = vector.load %arg11[%c12, %c0_43] : memref<25x668xf32, #tpu.memory_space<vmem>>, vector<1x668xf32>
    tpu.vector_store %arg11[%c12, %c0_43], %37 {strides = array<i32>} : memref<25x668xf32, #tpu.memory_space<vmem>>, vector<1x668xf32>,
    %c0_44 = arith.constant 0 : index
    %c0_45 = arith.constant 0 : index
    %c59 = arith.constant 59 : index
    %39 = vector.load %arg1[%c0_44, %c0_45, %c59] : memref<1x1x784xf32, #tpu.memory_space<vmem>>, vector<1x1x668xf32>
    %40 = vector.shape_cast %39 : vector<1x1x668xf32> to vector<1x668xf32>
    %c13 = arith.constant 13 : index
    %c0_46 = arith.constant 0 : index
    %41 = vector.load %arg11[%c13, %c0_46] : memref<25x668xf32, #tpu.memory_space<vmem>>, vector<1x668xf32>
    tpu.vector_store %arg11[%c13, %c0_46], %40 {strides = array<i32>} : memref<25x668xf32, #tpu.memory_space<vmem>>, vector<1x668xf32>,
    %c0_47 = arith.constant 0 : index
    %c0_48 = arith.constant 0 : index
    %c60 = arith.constant 60 : index
    %42 = vector.load %arg1[%c0_47, %c0_48, %c60] : memref<1x1x784xf32, #tpu.memory_space<vmem>>, vector<1x1x668xf32>
    %43 = vector.shape_cast %42 : vector<1x1x668xf32> to vector<1x668xf32>
    %c14 = arith.constant 14 : index
    %c0_49 = arith.constant 0 : index
    %44 = vector.load %arg11[%c14, %c0_49] : memref<25x668xf32, #tpu.memory_space<vmem>>, vector<1x668xf32>
    tpu.vector_store %arg11[%c14, %c0_49], %43 {strides = array<i32>} : memref<25x668xf32, #tpu.memory_space<vmem>>, vector<1x668xf32>,
    %c0_50 = arith.constant 0 : index
    %c0_51 = arith.constant 0 : index
    %c84 = arith.constant 84 : index
    %45 = vector.load %arg1[%c0_50, %c0_51, %c84] : memref<1x1x784xf32, #tpu.memory_space<vmem>>, vector<1x1x668xf32>
    %46 = vector.shape_cast %45 : vector<1x1x668xf32> to vector<1x668xf32>
    %c15 = arith.constant 15 : index
    %c0_52 = arith.constant 0 : index
    %47 = vector.load %arg11[%c15, %c0_52] : memref<25x668xf32, #tpu.memory_space<vmem>>, vector<1x668xf32>
    tpu.vector_store %arg11[%c15, %c0_52], %46 {strides = array<i32>} : memref<25x668xf32, #tpu.memory_space<vmem>>, vector<1x668xf32>,
    %c0_53 = arith.constant 0 : index
    %c0_54 = arith.constant 0 : index
    %c85 = arith.constant 85 : index
    %48 = vector.load %arg1[%c0_53, %c0_54, %c85] : memref<1x1x784xf32, #tpu.memory_space<vmem>>, vector<1x1x668xf32>
    %49 = vector.shape_cast %48 : vector<1x1x668xf32> to vector<1x668xf32>
    %c16 = arith.constant 16 : index
    %c0_55 = arith.constant 0 : index
    %50 = vector.load %arg11[%c16, %c0_55] : memref<25x668xf32, #tpu.memory_space<vmem>>, vector<1x668xf32>
    tpu.vector_store %arg11[%c16, %c0_55], %49 {strides = array<i32>} : memref<25x668xf32, #tpu.memory_space<vmem>>, vector<1x668xf32>,
    %c0_56 = arith.constant 0 : index
    %c0_57 = arith.constant 0 : index
    %c86 = arith.constant 86 : index
    %51 = vector.load %arg1[%c0_56, %c0_57, %c86] : memref<1x1x784xf32, #tpu.memory_space<vmem>>, vector<1x1x668xf32>
    %52 = vector.shape_cast %51 : vector<1x1x668xf32> to vector<1x668xf32>
    %c17 = arith.constant 17 : index
    %c0_58 = arith.constant 0 : index
    %53 = vector.load %arg11[%c17, %c0_58] : memref<25x668xf32, #tpu.memory_space<vmem>>, vector<1x668xf32>
    tpu.vector_store %arg11[%c17, %c0_58], %52 {strides = array<i32>} : memref<25x668xf32, #tpu.memory_space<vmem>>, vector<1x668xf32>,
    %c0_59 = arith.constant 0 : index
    %c0_60 = arith.constant 0 : index
    %c87 = arith.constant 87 : index
    %54 = vector.load %arg1[%c0_59, %c0_60, %c87] : memref<1x1x784xf32, #tpu.memory_space<vmem>>, vector<1x1x668xf32>
    %55 = vector.shape_cast %54 : vector<1x1x668xf32> to vector<1x668xf32>
    %c18 = arith.constant 18 : index
    %c0_61 = arith.constant 0 : index
    %56 = vector.load %arg11[%c18, %c0_61] : memref<25x668xf32, #tpu.memory_space<vmem>>, vector<1x668xf32>
    tpu.vector_store %arg11[%c18, %c0_61], %55 {strides = array<i32>} : memref<25x668xf32, #tpu.memory_space<vmem>>, vector<1x668xf32>,
    %c0_62 = arith.constant 0 : index
    %c0_63 = arith.constant 0 : index
    %c88 = arith.constant 88 : index
    %57 = vector.load %arg1[%c0_62, %c0_63, %c88] : memref<1x1x784xf32, #tpu.memory_space<vmem>>, vector<1x1x668xf32>
    %58 = vector.shape_cast %57 : vector<1x1x668xf32> to vector<1x668xf32>
    %c19 = arith.constant 19 : index
    %c0_64 = arith.constant 0 : index
    %59 = vector.load %arg11[%c19, %c0_64] : memref<25x668xf32, #tpu.memory_space<vmem>>, vector<1x668xf32>
    tpu.vector_store %arg11[%c19, %c0_64], %58 {strides = array<i32>} : memref<25x668xf32, #tpu.memory_space<vmem>>, vector<1x668xf32>,
    %c0_65 = arith.constant 0 : index
    %c0_66 = arith.constant 0 : index
    %c112 = arith.constant 112 : index
    %60 = vector.load %arg1[%c0_65, %c0_66, %c112] : memref<1x1x784xf32, #tpu.memory_space<vmem>>, vector<1x1x668xf32>
    %61 = vector.shape_cast %60 : vector<1x1x668xf32> to vector<1x668xf32>
    %c20 = arith.constant 20 : index
    %c0_67 = arith.constant 0 : index
    %62 = vector.load %arg11[%c20, %c0_67] : memref<25x668xf32, #tpu.memory_space<vmem>>, vector<1x668xf32>
    tpu.vector_store %arg11[%c20, %c0_67], %61 {strides = array<i32>} : memref<25x668xf32, #tpu.memory_space<vmem>>, vector<1x668xf32>,
    %c0_68 = arith.constant 0 : index
    %c0_69 = arith.constant 0 : index
    %c113 = arith.constant 113 : index
    %63 = vector.load %arg1[%c0_68, %c0_69, %c113] : memref<1x1x784xf32, #tpu.memory_space<vmem>>, vector<1x1x668xf32>
    %64 = vector.shape_cast %63 : vector<1x1x668xf32> to vector<1x668xf32>
    %c21 = arith.constant 21 : index
    %c0_70 = arith.constant 0 : index
    %65 = vector.load %arg11[%c21, %c0_70] : memref<25x668xf32, #tpu.memory_space<vmem>>, vector<1x668xf32>
    tpu.vector_store %arg11[%c21, %c0_70], %64 {strides = array<i32>} : memref<25x668xf32, #tpu.memory_space<vmem>>, vector<1x668xf32>,
    %c0_71 = arith.constant 0 : index
    %c0_72 = arith.constant 0 : index
    %c114 = arith.constant 114 : index
    %66 = vector.load %arg1[%c0_71, %c0_72, %c114] : memref<1x1x784xf32, #tpu.memory_space<vmem>>, vector<1x1x668xf32>
    %67 = vector.shape_cast %66 : vector<1x1x668xf32> to vector<1x668xf32>
    %c22 = arith.constant 22 : index
    %c0_73 = arith.constant 0 : index
    %68 = vector.load %arg11[%c22, %c0_73] : memref<25x668xf32, #tpu.memory_space<vmem>>, vector<1x668xf32>
    tpu.vector_store %arg11[%c22, %c0_73], %67 {strides = array<i32>} : memref<25x668xf32, #tpu.memory_space<vmem>>, vector<1x668xf32>,
    %c0_74 = arith.constant 0 : index
    %c0_75 = arith.constant 0 : index
    %c115 = arith.constant 115 : index
    %69 = vector.load %arg1[%c0_74, %c0_75, %c115] : memref<1x1x784xf32, #tpu.memory_space<vmem>>, vector<1x1x668xf32>
    %70 = vector.shape_cast %69 : vector<1x1x668xf32> to vector<1x668xf32>
    %c23 = arith.constant 23 : index
    %c0_76 = arith.constant 0 : index
    %71 = vector.load %arg11[%c23, %c0_76] : memref<25x668xf32, #tpu.memory_space<vmem>>, vector<1x668xf32>
    tpu.vector_store %arg11[%c23, %c0_76], %70 {strides = array<i32>} : memref<25x668xf32, #tpu.memory_space<vmem>>, vector<1x668xf32>,
    %c0_77 = arith.constant 0 : index
    %c0_78 = arith.constant 0 : index
    %c116 = arith.constant 116 : index
    %72 = vector.load %arg1[%c0_77, %c0_78, %c116] : memref<1x1x784xf32, #tpu.memory_space<vmem>>, vector<1x1x668xf32>
    %73 = vector.shape_cast %72 : vector<1x1x668xf32> to vector<1x668xf32>
    %c24 = arith.constant 24 : index
    %c0_79 = arith.constant 0 : index
    %74 = vector.load %arg11[%c24, %c0_79] : memref<25x668xf32, #tpu.memory_space<vmem>>, vector<1x668xf32>
    tpu.vector_store %arg11[%c24, %c0_79], %73 {strides = array<i32>} : memref<25x668xf32, #tpu.memory_space<vmem>>, vector<1x668xf32>,
    %c0_80 = arith.constant 0 : index
    %c0_81 = arith.constant 0 : index
    %75 = vector.load %arg2[%c0_80, %c0_81] : memref<16x25xf32, #tpu.memory_space<vmem>>, vector<16x25xf32>
    %c0_82 = arith.constant 0 : index
    %c0_83 = arith.constant 0 : index
    %76 = vector.load %arg11[%c0_82, %c0_83] : memref<25x668xf32, #tpu.memory_space<vmem>>, vector<25x668xf32>
    %cst = arith.constant dense<0.000000e+00> : vector<16x668xf32>
    %77 = tpu.matmul %75, %76, %cst {dimension_numbers = #tpu.dot_dimension_numbers<[1], [0], [0], [1], [0, 0, 1, 1], [], []>} : vector<16x25xf32>, vector<25x668xf32>, vector<16x668xf32> -> vector<16x668xf32>
    %c0_84 = arith.constant 0 : index
    %c0_85 = arith.constant 0 : index
    %78 = vector.load %arg3[%c0_84, %c0_85] : memref<16x1xf32, #tpu.memory_space<vmem>>, vector<16x1xf32>
    %79 = vector.broadcast %78 : vector<16x1xf32> to vector<16x668xf32>
    %80 = arith.addf %77, %79 : vector<16x668xf32>
    %cst_86 = arith.constant 0.000000e+00 : f32
    %81 = vector.broadcast %cst_86 : f32 to vector<16x668xf32>
    %82 = arith.maximumf %80, %81 : vector<16x668xf32>
    %c0_87 = arith.constant 0 : index
    %c0_88 = arith.constant 0 : index
    %83 = vector.load %arg12[%c0_87, %c0_88] : memref<16x668xf32, #tpu.memory_space<vmem>>, vector<16x668xf32>
    tpu.vector_store %arg12[%c0_87, %c0_88], %82 {strides = array<i32>} : memref<16x668xf32, #tpu.memory_space<vmem>>, vector<16x668xf32>,
    %c0_89 = arith.constant 0 : index
    %c0_90 = arith.constant 0 : index
    %84 = vector.load %arg12[%c0_89, %c0_90] : memref<16x668xf32, #tpu.memory_space<vmem>>, vector<16x639xf32>
    %c0_91 = arith.constant 0 : index
    %c1_92 = arith.constant 1 : index
    %85 = vector.load %arg12[%c0_91, %c1_92] : memref<16x668xf32, #tpu.memory_space<vmem>>, vector<16x639xf32>
    %86 = arith.maximumf %84, %85 : vector<16x639xf32>
    %c0_93 = arith.constant 0 : index
    %c28_94 = arith.constant 28 : index
    %87 = vector.load %arg12[%c0_93, %c28_94] : memref<16x668xf32, #tpu.memory_space<vmem>>, vector<16x639xf32>
    %c0_95 = arith.constant 0 : index
    %c29_96 = arith.constant 29 : index
    %88 = vector.load %arg12[%c0_95, %c29_96] : memref<16x668xf32, #tpu.memory_space<vmem>>, vector<16x639xf32>
    %89 = arith.maximumf %87, %88 : vector<16x639xf32>
    %90 = arith.maximumf %86, %89 : vector<16x639xf32>
    %c0_97 = arith.constant 0 : index
    %c0_98 = arith.constant 0 : index
    %91 = vector.load %arg8[%c0_97, %c0_98] : memref<639x144xf32, #tpu.memory_space<vmem>>, vector<639x144xf32>
    %cst_99 = arith.constant dense<0.000000e+00> : vector<16x144xf32>
    %92 = tpu.matmul %90, %91, %cst_99 {dimension_numbers = #tpu.dot_dimension_numbers<[1], [0], [0], [1], [0, 0, 1, 1], [], []>} : vector<16x639xf32>, vector<639x144xf32>, vector<16x144xf32> -> vector<16x144xf32>
    %c0_100 = arith.constant 0 : index
    %c0_101 = arith.constant 0 : index
    %93 = vector.load %arg13[%c0_100, %c0_101] : memref<16x144xf32, #tpu.memory_space<vmem>>, vector<16x144xf32>
    tpu.vector_store %arg13[%c0_100, %c0_101], %92 {strides = array<i32>} : memref<16x144xf32, #tpu.memory_space<vmem>>, vector<16x144xf32>,
    %c0_102 = arith.constant 0 : index
    %c0_103 = arith.constant 0 : index
    %94 = vector.load %arg13[%c0_102, %c0_103] : memref<16x144xf32, #tpu.memory_space<vmem>>, vector<16x92xf32>
    %c0_104 = arith.constant 0 : index
    %c0_105 = arith.constant 0 : index
    %95 = vector.load %arg14[%c0_104, %c0_105] : memref<400x92xf32, #tpu.memory_space<vmem>>, vector<16x92xf32>
    tpu.vector_store %arg14[%c0_104, %c0_105], %94 {strides = array<i32>} : memref<400x92xf32, #tpu.memory_space<vmem>>, vector<16x92xf32>,
    %c0_106 = arith.constant 0 : index
    %c1_107 = arith.constant 1 : index
    %96 = vector.load %arg13[%c0_106, %c1_107] : memref<16x144xf32, #tpu.memory_space<vmem>>, vector<16x92xf32>
    %c16_108 = arith.constant 16 : index
    %c0_109 = arith.constant 0 : index
    %97 = vector.load %arg14[%c16_108, %c0_109] : memref<400x92xf32, #tpu.memory_space<vmem>>, vector<16x92xf32>
    tpu.vector_store %arg14[%c16_108, %c0_109], %96 {strides = array<i32>} : memref<400x92xf32, #tpu.memory_space<vmem>>, vector<16x92xf32>,
    %c0_110 = arith.constant 0 : index
    %c2_111 = arith.constant 2 : index
    %98 = vector.load %arg13[%c0_110, %c2_111] : memref<16x144xf32, #tpu.memory_space<vmem>>, vector<16x92xf32>
    %c32_112 = arith.constant 32 : index
    %c0_113 = arith.constant 0 : index
    %99 = vector.load %arg14[%c32_112, %c0_113] : memref<400x92xf32, #tpu.memory_space<vmem>>, vector<16x92xf32>
    tpu.vector_store %arg14[%c32_112, %c0_113], %98 {strides = array<i32>} : memref<400x92xf32, #tpu.memory_space<vmem>>, vector<16x92xf32>,
    %c0_114 = arith.constant 0 : index
    %c3_115 = arith.constant 3 : index
    %100 = vector.load %arg13[%c0_114, %c3_115] : memref<16x144xf32, #tpu.memory_space<vmem>>, vector<16x92xf32>
    %c48 = arith.constant 48 : index
    %c0_116 = arith.constant 0 : index
    %101 = vector.load %arg14[%c48, %c0_116] : memref<400x92xf32, #tpu.memory_space<vmem>>, vector<16x92xf32>
    tpu.vector_store %arg14[%c48, %c0_116], %100 {strides = array<i32>} : memref<400x92xf32, #tpu.memory_space<vmem>>, vector<16x92xf32>,
    %c0_117 = arith.constant 0 : index
    %c4_118 = arith.constant 4 : index
    %102 = vector.load %arg13[%c0_117, %c4_118] : memref<16x144xf32, #tpu.memory_space<vmem>>, vector<16x92xf32>
    %c64 = arith.constant 64 : index
    %c0_119 = arith.constant 0 : index
    %103 = vector.load %arg14[%c64, %c0_119] : memref<400x92xf32, #tpu.memory_space<vmem>>, vector<16x92xf32>
    tpu.vector_store %arg14[%c64, %c0_119], %102 {strides = array<i32>} : memref<400x92xf32, #tpu.memory_space<vmem>>, vector<16x92xf32>,
    %c0_120 = arith.constant 0 : index
    %c12_121 = arith.constant 12 : index
    %104 = vector.load %arg13[%c0_120, %c12_121] : memref<16x144xf32, #tpu.memory_space<vmem>>, vector<16x92xf32>
    %c80 = arith.constant 80 : index
    %c0_122 = arith.constant 0 : index
    %105 = vector.load %arg14[%c80, %c0_122] : memref<400x92xf32, #tpu.memory_space<vmem>>, vector<16x92xf32>
    tpu.vector_store %arg14[%c80, %c0_122], %104 {strides = array<i32>} : memref<400x92xf32, #tpu.memory_space<vmem>>, vector<16x92xf32>,
    %c0_123 = arith.constant 0 : index
    %c13_124 = arith.constant 13 : index
    %106 = vector.load %arg13[%c0_123, %c13_124] : memref<16x144xf32, #tpu.memory_space<vmem>>, vector<16x92xf32>
    %c96 = arith.constant 96 : index
    %c0_125 = arith.constant 0 : index
    %107 = vector.load %arg14[%c96, %c0_125] : memref<400x92xf32, #tpu.memory_space<vmem>>, vector<16x92xf32>
    tpu.vector_store %arg14[%c96, %c0_125], %106 {strides = array<i32>} : memref<400x92xf32, #tpu.memory_space<vmem>>, vector<16x92xf32>,
    %c0_126 = arith.constant 0 : index
    %c14_127 = arith.constant 14 : index
    %108 = vector.load %arg13[%c0_126, %c14_127] : memref<16x144xf32, #tpu.memory_space<vmem>>, vector<16x92xf32>
    %c112_128 = arith.constant 112 : index
    %c0_129 = arith.constant 0 : index
    %109 = vector.load %arg14[%c112_128, %c0_129] : memref<400x92xf32, #tpu.memory_space<vmem>>, vector<16x92xf32>
    tpu.vector_store %arg14[%c112_128, %c0_129], %108 {strides = array<i32>} : memref<400x92xf32, #tpu.memory_space<vmem>>, vector<16x92xf32>,
    %c0_130 = arith.constant 0 : index
    %c15_131 = arith.constant 15 : index
    %110 = vector.load %arg13[%c0_130, %c15_131] : memref<16x144xf32, #tpu.memory_space<vmem>>, vector<16x92xf32>
    %c128 = arith.constant 128 : index
    %c0_132 = arith.constant 0 : index
    %111 = vector.load %arg14[%c128, %c0_132] : memref<400x92xf32, #tpu.memory_space<vmem>>, vector<16x92xf32>
    tpu.vector_store %arg14[%c128, %c0_132], %110 {strides = array<i32>} : memref<400x92xf32, #tpu.memory_space<vmem>>, vector<16x92xf32>,
    %c0_133 = arith.constant 0 : index
    %c16_134 = arith.constant 16 : index
    %112 = vector.load %arg13[%c0_133, %c16_134] : memref<16x144xf32, #tpu.memory_space<vmem>>, vector<16x92xf32>
    %c144 = arith.constant 144 : index
    %c0_135 = arith.constant 0 : index
    %113 = vector.load %arg14[%c144, %c0_135] : memref<400x92xf32, #tpu.memory_space<vmem>>, vector<16x92xf32>
    tpu.vector_store %arg14[%c144, %c0_135], %112 {strides = array<i32>} : memref<400x92xf32, #tpu.memory_space<vmem>>, vector<16x92xf32>,
    %c0_136 = arith.constant 0 : index
    %c24_137 = arith.constant 24 : index
    %114 = vector.load %arg13[%c0_136, %c24_137] : memref<16x144xf32, #tpu.memory_space<vmem>>, vector<16x92xf32>
    %c160 = arith.constant 160 : index
    %c0_138 = arith.constant 0 : index
    %115 = vector.load %arg14[%c160, %c0_138] : memref<400x92xf32, #tpu.memory_space<vmem>>, vector<16x92xf32>
    tpu.vector_store %arg14[%c160, %c0_138], %114 {strides = array<i32>} : memref<400x92xf32, #tpu.memory_space<vmem>>, vector<16x92xf32>,
    %c0_139 = arith.constant 0 : index
    %c25 = arith.constant 25 : index
    %116 = vector.load %arg13[%c0_139, %c25] : memref<16x144xf32, #tpu.memory_space<vmem>>, vector<16x92xf32>
    %c176 = arith.constant 176 : index
    %c0_140 = arith.constant 0 : index
    %117 = vector.load %arg14[%c176, %c0_140] : memref<400x92xf32, #tpu.memory_space<vmem>>, vector<16x92xf32>
    tpu.vector_store %arg14[%c176, %c0_140], %116 {strides = array<i32>} : memref<400x92xf32, #tpu.memory_space<vmem>>, vector<16x92xf32>,
    %c0_141 = arith.constant 0 : index
    %c26 = arith.constant 26 : index
    %118 = vector.load %arg13[%c0_141, %c26] : memref<16x144xf32, #tpu.memory_space<vmem>>, vector<16x92xf32>
    %c192 = arith.constant 192 : index
    %c0_142 = arith.constant 0 : index
    %119 = vector.load %arg14[%c192, %c0_142] : memref<400x92xf32, #tpu.memory_space<vmem>>, vector<16x92xf32>
    tpu.vector_store %arg14[%c192, %c0_142], %118 {strides = array<i32>} : memref<400x92xf32, #tpu.memory_space<vmem>>, vector<16x92xf32>,
    %c0_143 = arith.constant 0 : index
    %c27 = arith.constant 27 : index
    %120 = vector.load %arg13[%c0_143, %c27] : memref<16x144xf32, #tpu.memory_space<vmem>>, vector<16x92xf32>
    %c208 = arith.constant 208 : index
    %c0_144 = arith.constant 0 : index
    %121 = vector.load %arg14[%c208, %c0_144] : memref<400x92xf32, #tpu.memory_space<vmem>>, vector<16x92xf32>
    tpu.vector_store %arg14[%c208, %c0_144], %120 {strides = array<i32>} : memref<400x92xf32, #tpu.memory_space<vmem>>, vector<16x92xf32>,
    %c0_145 = arith.constant 0 : index
    %c28_146 = arith.constant 28 : index
    %122 = vector.load %arg13[%c0_145, %c28_146] : memref<16x144xf32, #tpu.memory_space<vmem>>, vector<16x92xf32>
    %c224 = arith.constant 224 : index
    %c0_147 = arith.constant 0 : index
    %123 = vector.load %arg14[%c224, %c0_147] : memref<400x92xf32, #tpu.memory_space<vmem>>, vector<16x92xf32>
    tpu.vector_store %arg14[%c224, %c0_147], %122 {strides = array<i32>} : memref<400x92xf32, #tpu.memory_space<vmem>>, vector<16x92xf32>,
    %c0_148 = arith.constant 0 : index
    %c36 = arith.constant 36 : index
    %124 = vector.load %arg13[%c0_148, %c36] : memref<16x144xf32, #tpu.memory_space<vmem>>, vector<16x92xf32>
    %c240 = arith.constant 240 : index
    %c0_149 = arith.constant 0 : index
    %125 = vector.load %arg14[%c240, %c0_149] : memref<400x92xf32, #tpu.memory_space<vmem>>, vector<16x92xf32>
    tpu.vector_store %arg14[%c240, %c0_149], %124 {strides = array<i32>} : memref<400x92xf32, #tpu.memory_space<vmem>>, vector<16x92xf32>,
    %c0_150 = arith.constant 0 : index
    %c37 = arith.constant 37 : index
    %126 = vector.load %arg13[%c0_150, %c37] : memref<16x144xf32, #tpu.memory_space<vmem>>, vector<16x92xf32>
    %c256 = arith.constant 256 : index
    %c0_151 = arith.constant 0 : index
    %127 = vector.load %arg14[%c256, %c0_151] : memref<400x92xf32, #tpu.memory_space<vmem>>, vector<16x92xf32>
    tpu.vector_store %arg14[%c256, %c0_151], %126 {strides = array<i32>} : memref<400x92xf32, #tpu.memory_space<vmem>>, vector<16x92xf32>,
    %c0_152 = arith.constant 0 : index
    %c38 = arith.constant 38 : index
    %128 = vector.load %arg13[%c0_152, %c38] : memref<16x144xf32, #tpu.memory_space<vmem>>, vector<16x92xf32>
    %c272 = arith.constant 272 : index
    %c0_153 = arith.constant 0 : index
    %129 = vector.load %arg14[%c272, %c0_153] : memref<400x92xf32, #tpu.memory_space<vmem>>, vector<16x92xf32>
    tpu.vector_store %arg14[%c272, %c0_153], %128 {strides = array<i32>} : memref<400x92xf32, #tpu.memory_space<vmem>>, vector<16x92xf32>,
    %c0_154 = arith.constant 0 : index
    %c39 = arith.constant 39 : index
    %130 = vector.load %arg13[%c0_154, %c39] : memref<16x144xf32, #tpu.memory_space<vmem>>, vector<16x92xf32>
    %c288 = arith.constant 288 : index
    %c0_155 = arith.constant 0 : index
    %131 = vector.load %arg14[%c288, %c0_155] : memref<400x92xf32, #tpu.memory_space<vmem>>, vector<16x92xf32>
    tpu.vector_store %arg14[%c288, %c0_155], %130 {strides = array<i32>} : memref<400x92xf32, #tpu.memory_space<vmem>>, vector<16x92xf32>,
    %c0_156 = arith.constant 0 : index
    %c40 = arith.constant 40 : index
    %132 = vector.load %arg13[%c0_156, %c40] : memref<16x144xf32, #tpu.memory_space<vmem>>, vector<16x92xf32>
    %c304 = arith.constant 304 : index
    %c0_157 = arith.constant 0 : index
    %133 = vector.load %arg14[%c304, %c0_157] : memref<400x92xf32, #tpu.memory_space<vmem>>, vector<16x92xf32>
    tpu.vector_store %arg14[%c304, %c0_157], %132 {strides = array<i32>} : memref<400x92xf32, #tpu.memory_space<vmem>>, vector<16x92xf32>,
    %c0_158 = arith.constant 0 : index
    %c48_159 = arith.constant 48 : index
    %134 = vector.load %arg13[%c0_158, %c48_159] : memref<16x144xf32, #tpu.memory_space<vmem>>, vector<16x92xf32>
    %c320 = arith.constant 320 : index
    %c0_160 = arith.constant 0 : index
    %135 = vector.load %arg14[%c320, %c0_160] : memref<400x92xf32, #tpu.memory_space<vmem>>, vector<16x92xf32>
    tpu.vector_store %arg14[%c320, %c0_160], %134 {strides = array<i32>} : memref<400x92xf32, #tpu.memory_space<vmem>>, vector<16x92xf32>,
    %c0_161 = arith.constant 0 : index
    %c49 = arith.constant 49 : index
    %136 = vector.load %arg13[%c0_161, %c49] : memref<16x144xf32, #tpu.memory_space<vmem>>, vector<16x92xf32>
    %c336 = arith.constant 336 : index
    %c0_162 = arith.constant 0 : index
    %137 = vector.load %arg14[%c336, %c0_162] : memref<400x92xf32, #tpu.memory_space<vmem>>, vector<16x92xf32>
    tpu.vector_store %arg14[%c336, %c0_162], %136 {strides = array<i32>} : memref<400x92xf32, #tpu.memory_space<vmem>>, vector<16x92xf32>,
    %c0_163 = arith.constant 0 : index
    %c50 = arith.constant 50 : index
    %138 = vector.load %arg13[%c0_163, %c50] : memref<16x144xf32, #tpu.memory_space<vmem>>, vector<16x92xf32>
    %c352 = arith.constant 352 : index
    %c0_164 = arith.constant 0 : index
    %139 = vector.load %arg14[%c352, %c0_164] : memref<400x92xf32, #tpu.memory_space<vmem>>, vector<16x92xf32>
    tpu.vector_store %arg14[%c352, %c0_164], %138 {strides = array<i32>} : memref<400x92xf32, #tpu.memory_space<vmem>>, vector<16x92xf32>,
    %c0_165 = arith.constant 0 : index
    %c51 = arith.constant 51 : index
    %140 = vector.load %arg13[%c0_165, %c51] : memref<16x144xf32, #tpu.memory_space<vmem>>, vector<16x92xf32>
    %c368 = arith.constant 368 : index
    %c0_166 = arith.constant 0 : index
    %141 = vector.load %arg14[%c368, %c0_166] : memref<400x92xf32, #tpu.memory_space<vmem>>, vector<16x92xf32>
    tpu.vector_store %arg14[%c368, %c0_166], %140 {strides = array<i32>} : memref<400x92xf32, #tpu.memory_space<vmem>>, vector<16x92xf32>,
    %c0_167 = arith.constant 0 : index
    %c52 = arith.constant 52 : index
    %142 = vector.load %arg13[%c0_167, %c52] : memref<16x144xf32, #tpu.memory_space<vmem>>, vector<16x92xf32>
    %c384 = arith.constant 384 : index
    %c0_168 = arith.constant 0 : index
    %143 = vector.load %arg14[%c384, %c0_168] : memref<400x92xf32, #tpu.memory_space<vmem>>, vector<16x92xf32>
    tpu.vector_store %arg14[%c384, %c0_168], %142 {strides = array<i32>} : memref<400x92xf32, #tpu.memory_space<vmem>>, vector<16x92xf32>,
    %c0_169 = arith.constant 0 : index
    %c0_170 = arith.constant 0 : index
    %144 = vector.load %arg4[%c0_169, %c0_170] : memref<32x400xf32, #tpu.memory_space<vmem>>, vector<32x400xf32>
    %c0_171 = arith.constant 0 : index
    %c0_172 = arith.constant 0 : index
    %145 = vector.load %arg14[%c0_171, %c0_172] : memref<400x92xf32, #tpu.memory_space<vmem>>, vector<400x92xf32>
    %cst_173 = arith.constant dense<0.000000e+00> : vector<32x92xf32>
    %146 = tpu.matmul %144, %145, %cst_173 {dimension_numbers = #tpu.dot_dimension_numbers<[1], [0], [0], [1], [0, 0, 1, 1], [], []>} : vector<32x400xf32>, vector<400x92xf32>, vector<32x92xf32> -> vector<32x92xf32>
    %c0_174 = arith.constant 0 : index
    %c0_175 = arith.constant 0 : index
    %147 = vector.load %arg5[%c0_174, %c0_175] : memref<32x1xf32, #tpu.memory_space<vmem>>, vector<32x1xf32>
    %148 = vector.broadcast %147 : vector<32x1xf32> to vector<32x92xf32>
    %149 = arith.addf %146, %148 : vector<32x92xf32>
    %cst_176 = arith.constant 0.000000e+00 : f32
    %150 = vector.broadcast %cst_176 : f32 to vector<32x92xf32>
    %151 = arith.maximumf %149, %150 : vector<32x92xf32>
    %c0_177 = arith.constant 0 : index
    %c0_178 = arith.constant 0 : index
    %152 = vector.load %arg15[%c0_177, %c0_178] : memref<32x92xf32, #tpu.memory_space<vmem>>, vector<32x92xf32>
    tpu.vector_store %arg15[%c0_177, %c0_178], %151 {strides = array<i32>} : memref<32x92xf32, #tpu.memory_space<vmem>>, vector<32x92xf32>,
    %c0_179 = arith.constant 0 : index
    %c0_180 = arith.constant 0 : index
    %153 = vector.load %arg15[%c0_179, %c0_180] : memref<32x92xf32, #tpu.memory_space<vmem>>, vector<32x79xf32>
    %c0_181 = arith.constant 0 : index
    %c1_182 = arith.constant 1 : index
    %154 = vector.load %arg15[%c0_181, %c1_182] : memref<32x92xf32, #tpu.memory_space<vmem>>, vector<32x79xf32>
    %155 = arith.maximumf %153, %154 : vector<32x79xf32>
    %c0_183 = arith.constant 0 : index
    %c12_184 = arith.constant 12 : index
    %156 = vector.load %arg15[%c0_183, %c12_184] : memref<32x92xf32, #tpu.memory_space<vmem>>, vector<32x79xf32>
    %c0_185 = arith.constant 0 : index
    %c13_186 = arith.constant 13 : index
    %157 = vector.load %arg15[%c0_185, %c13_186] : memref<32x92xf32, #tpu.memory_space<vmem>>, vector<32x79xf32>
    %158 = arith.maximumf %156, %157 : vector<32x79xf32>
    %159 = arith.maximumf %155, %158 : vector<32x79xf32>
    %c0_187 = arith.constant 0 : index
    %c0_188 = arith.constant 0 : index
    %160 = vector.load %arg9[%c0_187, %c0_188] : memref<79x16xf32, #tpu.memory_space<vmem>>, vector<79x16xf32>
    %cst_189 = arith.constant dense<0.000000e+00> : vector<32x16xf32>
    %161 = tpu.matmul %159, %160, %cst_189 {dimension_numbers = #tpu.dot_dimension_numbers<[1], [0], [0], [1], [0, 0, 1, 1], [], []>} : vector<32x79xf32>, vector<79x16xf32>, vector<32x16xf32> -> vector<32x16xf32>
    %c0_190 = arith.constant 0 : index
    %c0_191 = arith.constant 0 : index
    %162 = vector.load %arg16[%c0_190, %c0_191] : memref<32x16xf32, #tpu.memory_space<vmem>>, vector<32x16xf32>
    tpu.vector_store %arg16[%c0_190, %c0_191], %161 {strides = array<i32>} : memref<32x16xf32, #tpu.memory_space<vmem>>, vector<32x16xf32>,
    %c0_192 = arith.constant 0 : index
    %c0_193 = arith.constant 0 : index
    %163 = vector.load %arg16[%c0_192, %c0_193] : memref<32x16xf32, #tpu.memory_space<vmem>>, vector<1x16xf32>
    %c0_194 = arith.constant 0 : index
    %c0_195 = arith.constant 0 : index
    %164 = vector.load %arg17[%c0_194, %c0_195] : memref<1x512xf32, #tpu.memory_space<vmem>>, vector<1x16xf32>
    tpu.vector_store %arg17[%c0_194, %c0_195], %163 {strides = array<i32>} : memref<1x512xf32, #tpu.memory_space<vmem>>, vector<1x16xf32>,
    %c1_196 = arith.constant 1 : index
    %c0_197 = arith.constant 0 : index
    %165 = vector.load %arg16[%c1_196, %c0_197] : memref<32x16xf32, #tpu.memory_space<vmem>>, vector<1x16xf32>
    %c0_198 = arith.constant 0 : index
    %c16_199 = arith.constant 16 : index
    %166 = vector.load %arg17[%c0_198, %c16_199] : memref<1x512xf32, #tpu.memory_space<vmem>>, vector<1x16xf32>
    tpu.vector_store %arg17[%c0_198, %c16_199], %165 {strides = array<i32>} : memref<1x512xf32, #tpu.memory_space<vmem>>, vector<1x16xf32>,
    %c2_200 = arith.constant 2 : index
    %c0_201 = arith.constant 0 : index
    %167 = vector.load %arg16[%c2_200, %c0_201] : memref<32x16xf32, #tpu.memory_space<vmem>>, vector<1x16xf32>
    %c0_202 = arith.constant 0 : index
    %c32_203 = arith.constant 32 : index
    %168 = vector.load %arg17[%c0_202, %c32_203] : memref<1x512xf32, #tpu.memory_space<vmem>>, vector<1x16xf32>
    tpu.vector_store %arg17[%c0_202, %c32_203], %167 {strides = array<i32>} : memref<1x512xf32, #tpu.memory_space<vmem>>, vector<1x16xf32>,
    %c3_204 = arith.constant 3 : index
    %c0_205 = arith.constant 0 : index
    %169 = vector.load %arg16[%c3_204, %c0_205] : memref<32x16xf32, #tpu.memory_space<vmem>>, vector<1x16xf32>
    %c0_206 = arith.constant 0 : index
    %c48_207 = arith.constant 48 : index
    %170 = vector.load %arg17[%c0_206, %c48_207] : memref<1x512xf32, #tpu.memory_space<vmem>>, vector<1x16xf32>
    tpu.vector_store %arg17[%c0_206, %c48_207], %169 {strides = array<i32>} : memref<1x512xf32, #tpu.memory_space<vmem>>, vector<1x16xf32>,
    %c4_208 = arith.constant 4 : index
    %c0_209 = arith.constant 0 : index
    %171 = vector.load %arg16[%c4_208, %c0_209] : memref<32x16xf32, #tpu.memory_space<vmem>>, vector<1x16xf32>
    %c0_210 = arith.constant 0 : index
    %c64_211 = arith.constant 64 : index
    %172 = vector.load %arg17[%c0_210, %c64_211] : memref<1x512xf32, #tpu.memory_space<vmem>>, vector<1x16xf32>
    tpu.vector_store %arg17[%c0_210, %c64_211], %171 {strides = array<i32>} : memref<1x512xf32, #tpu.memory_space<vmem>>, vector<1x16xf32>,
    %c5_212 = arith.constant 5 : index
    %c0_213 = arith.constant 0 : index
    %173 = vector.load %arg16[%c5_212, %c0_213] : memref<32x16xf32, #tpu.memory_space<vmem>>, vector<1x16xf32>
    %c0_214 = arith.constant 0 : index
    %c80_215 = arith.constant 80 : index
    %174 = vector.load %arg17[%c0_214, %c80_215] : memref<1x512xf32, #tpu.memory_space<vmem>>, vector<1x16xf32>
    tpu.vector_store %arg17[%c0_214, %c80_215], %173 {strides = array<i32>} : memref<1x512xf32, #tpu.memory_space<vmem>>, vector<1x16xf32>,
    %c6_216 = arith.constant 6 : index
    %c0_217 = arith.constant 0 : index
    %175 = vector.load %arg16[%c6_216, %c0_217] : memref<32x16xf32, #tpu.memory_space<vmem>>, vector<1x16xf32>
    %c0_218 = arith.constant 0 : index
    %c96_219 = arith.constant 96 : index
    %176 = vector.load %arg17[%c0_218, %c96_219] : memref<1x512xf32, #tpu.memory_space<vmem>>, vector<1x16xf32>
    tpu.vector_store %arg17[%c0_218, %c96_219], %175 {strides = array<i32>} : memref<1x512xf32, #tpu.memory_space<vmem>>, vector<1x16xf32>,
    %c7_220 = arith.constant 7 : index
    %c0_221 = arith.constant 0 : index
    %177 = vector.load %arg16[%c7_220, %c0_221] : memref<32x16xf32, #tpu.memory_space<vmem>>, vector<1x16xf32>
    %c0_222 = arith.constant 0 : index
    %c112_223 = arith.constant 112 : index
    %178 = vector.load %arg17[%c0_222, %c112_223] : memref<1x512xf32, #tpu.memory_space<vmem>>, vector<1x16xf32>
    tpu.vector_store %arg17[%c0_222, %c112_223], %177 {strides = array<i32>} : memref<1x512xf32, #tpu.memory_space<vmem>>, vector<1x16xf32>,
    %c8_224 = arith.constant 8 : index
    %c0_225 = arith.constant 0 : index
    %179 = vector.load %arg16[%c8_224, %c0_225] : memref<32x16xf32, #tpu.memory_space<vmem>>, vector<1x16xf32>
    %c0_226 = arith.constant 0 : index
    %c128_227 = arith.constant 128 : index
    %180 = vector.load %arg17[%c0_226, %c128_227] : memref<1x512xf32, #tpu.memory_space<vmem>>, vector<1x16xf32>
    tpu.vector_store %arg17[%c0_226, %c128_227], %179 {strides = array<i32>} : memref<1x512xf32, #tpu.memory_space<vmem>>, vector<1x16xf32>,
    %c9_228 = arith.constant 9 : index
    %c0_229 = arith.constant 0 : index
    %181 = vector.load %arg16[%c9_228, %c0_229] : memref<32x16xf32, #tpu.memory_space<vmem>>, vector<1x16xf32>
    %c0_230 = arith.constant 0 : index
    %c144_231 = arith.constant 144 : index
    %182 = vector.load %arg17[%c0_230, %c144_231] : memref<1x512xf32, #tpu.memory_space<vmem>>, vector<1x16xf32>
    tpu.vector_store %arg17[%c0_230, %c144_231], %181 {strides = array<i32>} : memref<1x512xf32, #tpu.memory_space<vmem>>, vector<1x16xf32>,
    %c10_232 = arith.constant 10 : index
    %c0_233 = arith.constant 0 : index
    %183 = vector.load %arg16[%c10_232, %c0_233] : memref<32x16xf32, #tpu.memory_space<vmem>>, vector<1x16xf32>
    %c0_234 = arith.constant 0 : index
    %c160_235 = arith.constant 160 : index
    %184 = vector.load %arg17[%c0_234, %c160_235] : memref<1x512xf32, #tpu.memory_space<vmem>>, vector<1x16xf32>
    tpu.vector_store %arg17[%c0_234, %c160_235], %183 {strides = array<i32>} : memref<1x512xf32, #tpu.memory_space<vmem>>, vector<1x16xf32>,
    %c11_236 = arith.constant 11 : index
    %c0_237 = arith.constant 0 : index
    %185 = vector.load %arg16[%c11_236, %c0_237] : memref<32x16xf32, #tpu.memory_space<vmem>>, vector<1x16xf32>
    %c0_238 = arith.constant 0 : index
    %c176_239 = arith.constant 176 : index
    %186 = vector.load %arg17[%c0_238, %c176_239] : memref<1x512xf32, #tpu.memory_space<vmem>>, vector<1x16xf32>
    tpu.vector_store %arg17[%c0_238, %c176_239], %185 {strides = array<i32>} : memref<1x512xf32, #tpu.memory_space<vmem>>, vector<1x16xf32>,
    %c12_240 = arith.constant 12 : index
    %c0_241 = arith.constant 0 : index
    %187 = vector.load %arg16[%c12_240, %c0_241] : memref<32x16xf32, #tpu.memory_space<vmem>>, vector<1x16xf32>
    %c0_242 = arith.constant 0 : index
    %c192_243 = arith.constant 192 : index
    %188 = vector.load %arg17[%c0_242, %c192_243] : memref<1x512xf32, #tpu.memory_space<vmem>>, vector<1x16xf32>
    tpu.vector_store %arg17[%c0_242, %c192_243], %187 {strides = array<i32>} : memref<1x512xf32, #tpu.memory_space<vmem>>, vector<1x16xf32>,
    %c13_244 = arith.constant 13 : index
    %c0_245 = arith.constant 0 : index
    %189 = vector.load %arg16[%c13_244, %c0_245] : memref<32x16xf32, #tpu.memory_space<vmem>>, vector<1x16xf32>
    %c0_246 = arith.constant 0 : index
    %c208_247 = arith.constant 208 : index
    %190 = vector.load %arg17[%c0_246, %c208_247] : memref<1x512xf32, #tpu.memory_space<vmem>>, vector<1x16xf32>
    tpu.vector_store %arg17[%c0_246, %c208_247], %189 {strides = array<i32>} : memref<1x512xf32, #tpu.memory_space<vmem>>, vector<1x16xf32>,
    %c14_248 = arith.constant 14 : index
    %c0_249 = arith.constant 0 : index
    %191 = vector.load %arg16[%c14_248, %c0_249] : memref<32x16xf32, #tpu.memory_space<vmem>>, vector<1x16xf32>
    %c0_250 = arith.constant 0 : index
    %c224_251 = arith.constant 224 : index
    %192 = vector.load %arg17[%c0_250, %c224_251] : memref<1x512xf32, #tpu.memory_space<vmem>>, vector<1x16xf32>
    tpu.vector_store %arg17[%c0_250, %c224_251], %191 {strides = array<i32>} : memref<1x512xf32, #tpu.memory_space<vmem>>, vector<1x16xf32>,
    %c15_252 = arith.constant 15 : index
    %c0_253 = arith.constant 0 : index
    %193 = vector.load %arg16[%c15_252, %c0_253] : memref<32x16xf32, #tpu.memory_space<vmem>>, vector<1x16xf32>
    %c0_254 = arith.constant 0 : index
    %c240_255 = arith.constant 240 : index
    %194 = vector.load %arg17[%c0_254, %c240_255] : memref<1x512xf32, #tpu.memory_space<vmem>>, vector<1x16xf32>
    tpu.vector_store %arg17[%c0_254, %c240_255], %193 {strides = array<i32>} : memref<1x512xf32, #tpu.memory_space<vmem>>, vector<1x16xf32>,
    %c16_256 = arith.constant 16 : index
    %c0_257 = arith.constant 0 : index
    %195 = vector.load %arg16[%c16_256, %c0_257] : memref<32x16xf32, #tpu.memory_space<vmem>>, vector<1x16xf32>
    %c0_258 = arith.constant 0 : index
    %c256_259 = arith.constant 256 : index
    %196 = vector.load %arg17[%c0_258, %c256_259] : memref<1x512xf32, #tpu.memory_space<vmem>>, vector<1x16xf32>
    tpu.vector_store %arg17[%c0_258, %c256_259], %195 {strides = array<i32>} : memref<1x512xf32, #tpu.memory_space<vmem>>, vector<1x16xf32>,
    %c17_260 = arith.constant 17 : index
    %c0_261 = arith.constant 0 : index
    %197 = vector.load %arg16[%c17_260, %c0_261] : memref<32x16xf32, #tpu.memory_space<vmem>>, vector<1x16xf32>
    %c0_262 = arith.constant 0 : index
    %c272_263 = arith.constant 272 : index
    %198 = vector.load %arg17[%c0_262, %c272_263] : memref<1x512xf32, #tpu.memory_space<vmem>>, vector<1x16xf32>
    tpu.vector_store %arg17[%c0_262, %c272_263], %197 {strides = array<i32>} : memref<1x512xf32, #tpu.memory_space<vmem>>, vector<1x16xf32>,
    %c18_264 = arith.constant 18 : index
    %c0_265 = arith.constant 0 : index
    %199 = vector.load %arg16[%c18_264, %c0_265] : memref<32x16xf32, #tpu.memory_space<vmem>>, vector<1x16xf32>
    %c0_266 = arith.constant 0 : index
    %c288_267 = arith.constant 288 : index
    %200 = vector.load %arg17[%c0_266, %c288_267] : memref<1x512xf32, #tpu.memory_space<vmem>>, vector<1x16xf32>
    tpu.vector_store %arg17[%c0_266, %c288_267], %199 {strides = array<i32>} : memref<1x512xf32, #tpu.memory_space<vmem>>, vector<1x16xf32>,
    %c19_268 = arith.constant 19 : index
    %c0_269 = arith.constant 0 : index
    %201 = vector.load %arg16[%c19_268, %c0_269] : memref<32x16xf32, #tpu.memory_space<vmem>>, vector<1x16xf32>
    %c0_270 = arith.constant 0 : index
    %c304_271 = arith.constant 304 : index
    %202 = vector.load %arg17[%c0_270, %c304_271] : memref<1x512xf32, #tpu.memory_space<vmem>>, vector<1x16xf32>
    tpu.vector_store %arg17[%c0_270, %c304_271], %201 {strides = array<i32>} : memref<1x512xf32, #tpu.memory_space<vmem>>, vector<1x16xf32>,
    %c20_272 = arith.constant 20 : index
    %c0_273 = arith.constant 0 : index
    %203 = vector.load %arg16[%c20_272, %c0_273] : memref<32x16xf32, #tpu.memory_space<vmem>>, vector<1x16xf32>
    %c0_274 = arith.constant 0 : index
    %c320_275 = arith.constant 320 : index
    %204 = vector.load %arg17[%c0_274, %c320_275] : memref<1x512xf32, #tpu.memory_space<vmem>>, vector<1x16xf32>
    tpu.vector_store %arg17[%c0_274, %c320_275], %203 {strides = array<i32>} : memref<1x512xf32, #tpu.memory_space<vmem>>, vector<1x16xf32>,
    %c21_276 = arith.constant 21 : index
    %c0_277 = arith.constant 0 : index
    %205 = vector.load %arg16[%c21_276, %c0_277] : memref<32x16xf32, #tpu.memory_space<vmem>>, vector<1x16xf32>
    %c0_278 = arith.constant 0 : index
    %c336_279 = arith.constant 336 : index
    %206 = vector.load %arg17[%c0_278, %c336_279] : memref<1x512xf32, #tpu.memory_space<vmem>>, vector<1x16xf32>
    tpu.vector_store %arg17[%c0_278, %c336_279], %205 {strides = array<i32>} : memref<1x512xf32, #tpu.memory_space<vmem>>, vector<1x16xf32>,
    %c22_280 = arith.constant 22 : index
    %c0_281 = arith.constant 0 : index
    %207 = vector.load %arg16[%c22_280, %c0_281] : memref<32x16xf32, #tpu.memory_space<vmem>>, vector<1x16xf32>
    %c0_282 = arith.constant 0 : index
    %c352_283 = arith.constant 352 : index
    %208 = vector.load %arg17[%c0_282, %c352_283] : memref<1x512xf32, #tpu.memory_space<vmem>>, vector<1x16xf32>
    tpu.vector_store %arg17[%c0_282, %c352_283], %207 {strides = array<i32>} : memref<1x512xf32, #tpu.memory_space<vmem>>, vector<1x16xf32>,
    %c23_284 = arith.constant 23 : index
    %c0_285 = arith.constant 0 : index
    %209 = vector.load %arg16[%c23_284, %c0_285] : memref<32x16xf32, #tpu.memory_space<vmem>>, vector<1x16xf32>
    %c0_286 = arith.constant 0 : index
    %c368_287 = arith.constant 368 : index
    %210 = vector.load %arg17[%c0_286, %c368_287] : memref<1x512xf32, #tpu.memory_space<vmem>>, vector<1x16xf32>
    tpu.vector_store %arg17[%c0_286, %c368_287], %209 {strides = array<i32>} : memref<1x512xf32, #tpu.memory_space<vmem>>, vector<1x16xf32>,
    %c24_288 = arith.constant 24 : index
    %c0_289 = arith.constant 0 : index
    %211 = vector.load %arg16[%c24_288, %c0_289] : memref<32x16xf32, #tpu.memory_space<vmem>>, vector<1x16xf32>
    %c0_290 = arith.constant 0 : index
    %c384_291 = arith.constant 384 : index
    %212 = vector.load %arg17[%c0_290, %c384_291] : memref<1x512xf32, #tpu.memory_space<vmem>>, vector<1x16xf32>
    tpu.vector_store %arg17[%c0_290, %c384_291], %211 {strides = array<i32>} : memref<1x512xf32, #tpu.memory_space<vmem>>, vector<1x16xf32>,
    %c25_292 = arith.constant 25 : index
    %c0_293 = arith.constant 0 : index
    %213 = vector.load %arg16[%c25_292, %c0_293] : memref<32x16xf32, #tpu.memory_space<vmem>>, vector<1x16xf32>
    %c0_294 = arith.constant 0 : index
    %c400 = arith.constant 400 : index
    %214 = vector.load %arg17[%c0_294, %c400] : memref<1x512xf32, #tpu.memory_space<vmem>>, vector<1x16xf32>
    tpu.vector_store %arg17[%c0_294, %c400], %213 {strides = array<i32>} : memref<1x512xf32, #tpu.memory_space<vmem>>, vector<1x16xf32>,
    %c26_295 = arith.constant 26 : index
    %c0_296 = arith.constant 0 : index
    %215 = vector.load %arg16[%c26_295, %c0_296] : memref<32x16xf32, #tpu.memory_space<vmem>>, vector<1x16xf32>
    %c0_297 = arith.constant 0 : index
    %c416 = arith.constant 416 : index
    %216 = vector.load %arg17[%c0_297, %c416] : memref<1x512xf32, #tpu.memory_space<vmem>>, vector<1x16xf32>
    tpu.vector_store %arg17[%c0_297, %c416], %215 {strides = array<i32>} : memref<1x512xf32, #tpu.memory_space<vmem>>, vector<1x16xf32>,
    %c27_298 = arith.constant 27 : index
    %c0_299 = arith.constant 0 : index
    %217 = vector.load %arg16[%c27_298, %c0_299] : memref<32x16xf32, #tpu.memory_space<vmem>>, vector<1x16xf32>
    %c0_300 = arith.constant 0 : index
    %c432 = arith.constant 432 : index
    %218 = vector.load %arg17[%c0_300, %c432] : memref<1x512xf32, #tpu.memory_space<vmem>>, vector<1x16xf32>
    tpu.vector_store %arg17[%c0_300, %c432], %217 {strides = array<i32>} : memref<1x512xf32, #tpu.memory_space<vmem>>, vector<1x16xf32>,
    %c28_301 = arith.constant 28 : index
    %c0_302 = arith.constant 0 : index
    %219 = vector.load %arg16[%c28_301, %c0_302] : memref<32x16xf32, #tpu.memory_space<vmem>>, vector<1x16xf32>
    %c0_303 = arith.constant 0 : index
    %c448 = arith.constant 448 : index
    %220 = vector.load %arg17[%c0_303, %c448] : memref<1x512xf32, #tpu.memory_space<vmem>>, vector<1x16xf32>
    tpu.vector_store %arg17[%c0_303, %c448], %219 {strides = array<i32>} : memref<1x512xf32, #tpu.memory_space<vmem>>, vector<1x16xf32>,
    %c29_304 = arith.constant 29 : index
    %c0_305 = arith.constant 0 : index
    %221 = vector.load %arg16[%c29_304, %c0_305] : memref<32x16xf32, #tpu.memory_space<vmem>>, vector<1x16xf32>
    %c0_306 = arith.constant 0 : index
    %c464 = arith.constant 464 : index
    %222 = vector.load %arg17[%c0_306, %c464] : memref<1x512xf32, #tpu.memory_space<vmem>>, vector<1x16xf32>
    tpu.vector_store %arg17[%c0_306, %c464], %221 {strides = array<i32>} : memref<1x512xf32, #tpu.memory_space<vmem>>, vector<1x16xf32>,
    %c30_307 = arith.constant 30 : index
    %c0_308 = arith.constant 0 : index
    %223 = vector.load %arg16[%c30_307, %c0_308] : memref<32x16xf32, #tpu.memory_space<vmem>>, vector<1x16xf32>
    %c0_309 = arith.constant 0 : index
    %c480 = arith.constant 480 : index
    %224 = vector.load %arg17[%c0_309, %c480] : memref<1x512xf32, #tpu.memory_space<vmem>>, vector<1x16xf32>
    tpu.vector_store %arg17[%c0_309, %c480], %223 {strides = array<i32>} : memref<1x512xf32, #tpu.memory_space<vmem>>, vector<1x16xf32>,
    %c31_310 = arith.constant 31 : index
    %c0_311 = arith.constant 0 : index
    %225 = vector.load %arg16[%c31_310, %c0_311] : memref<32x16xf32, #tpu.memory_space<vmem>>, vector<1x16xf32>
    %c0_312 = arith.constant 0 : index
    %c496 = arith.constant 496 : index
    %226 = vector.load %arg17[%c0_312, %c496] : memref<1x512xf32, #tpu.memory_space<vmem>>, vector<1x16xf32>
    tpu.vector_store %arg17[%c0_312, %c496], %225 {strides = array<i32>} : memref<1x512xf32, #tpu.memory_space<vmem>>, vector<1x16xf32>,
    %c0_313 = arith.constant 0 : index
    %c0_314 = arith.constant 0 : index
    %227 = vector.load %arg17[%c0_313, %c0_314] : memref<1x512xf32, #tpu.memory_space<vmem>>, vector<1x512xf32>
    %c0_315 = arith.constant 0 : index
    %c0_316 = arith.constant 0 : index
    %228 = vector.load %arg6[%c0_315, %c0_316] : memref<512x10xf32, #tpu.memory_space<vmem>>, vector<512x10xf32>
    %cst_317 = arith.constant dense<0.000000e+00> : vector<1x10xf32>
    %229 = tpu.matmul %227, %228, %cst_317 {dimension_numbers = #tpu.dot_dimension_numbers<[1], [0], [0], [1], [0, 0, 1, 1], [], []>} : vector<1x512xf32>, vector<512x10xf32>, vector<1x10xf32> -> vector<1x10xf32>
    %c0_318 = arith.constant 0 : index
    %c0_319 = arith.constant 0 : index
    %230 = vector.load %arg7[%c0_318, %c0_319] : memref<1x10xf32, #tpu.memory_space<vmem>>, vector<1x10xf32>
    %231 = arith.addf %229, %230 : vector<1x10xf32>
    %c0_320 = arith.constant 0 : index
    %c0_321 = arith.constant 0 : index
    %c0_322 = arith.constant 0 : index
    %232 = vector.load %arg10[%c0_320, %c0_321, %c0_322] : memref<1x1x10xf32, #tpu.memory_space<vmem>>, vector<1x1x10xf32>
    %233 = vector.shape_cast %232 : vector<1x1x10xf32> to vector<1x10xf32>
    %234 = vector.shape_cast %231 : vector<1x10xf32> to vector<1x1x10xf32>
    tpu.vector_store %arg10[%c0_320, %c0_321, %c0_322], %234 {strides = array<i32>} : memref<1x1x10xf32, #tpu.memory_space<vmem>>, vector<1x1x10xf32>,
    return
  }
  func.func @transform_0(%arg0: i32) -> (i32, i32, i32) {
    %c0_i32 = arith.constant 0 : i32
    %c0_i32_0 = arith.constant 0 : i32
    %c0_i32_1 = arith.constant 0 : i32
    return %arg0, %c0_i32, %c0_i32_0 : i32, i32, i32
  }
  func.func @transform_1(%arg0: i32) -> (i32, i32) {
    %c0_i32 = arith.constant 0 : i32
    %c0_i32_0 = arith.constant 0 : i32
    %c0_i32_1 = arith.constant 0 : i32
    return %c0_i32, %c0_i32_0 : i32, i32
  }
  func.func @transform_2(%arg0: i32) -> (i32, i32) {
    %c0_i32 = arith.constant 0 : i32
    %c0_i32_0 = arith.constant 0 : i32
    %c0_i32_1 = arith.constant 0 : i32
    return %c0_i32, %c0_i32_0 : i32, i32
  }
  func.func @transform_3(%arg0: i32) -> (i32, i32) {
    %c0_i32 = arith.constant 0 : i32
    %c0_i32_0 = arith.constant 0 : i32
    %c0_i32_1 = arith.constant 0 : i32
    return %c0_i32, %c0_i32_0 : i32, i32
  }
  func.func @transform_4(%arg0: i32) -> (i32, i32) {
    %c0_i32 = arith.constant 0 : i32
    %c0_i32_0 = arith.constant 0 : i32
    %c0_i32_1 = arith.constant 0 : i32
    return %c0_i32, %c0_i32_0 : i32, i32
  }
  func.func @transform_5(%arg0: i32) -> (i32, i32) {
    %c0_i32 = arith.constant 0 : i32
    %c0_i32_0 = arith.constant 0 : i32
    %c0_i32_1 = arith.constant 0 : i32
    return %c0_i32, %c0_i32_0 : i32, i32
  }
  func.func @transform_6(%arg0: i32) -> (i32, i32) {
    %c0_i32 = arith.constant 0 : i32
    %c0_i32_0 = arith.constant 0 : i32
    %c0_i32_1 = arith.constant 0 : i32
    return %c0_i32, %c0_i32_0 : i32, i32
  }
  func.func @transform_7(%arg0: i32) -> (i32, i32) {
    %c0_i32 = arith.constant 0 : i32
    %c0_i32_0 = arith.constant 0 : i32
    %c0_i32_1 = arith.constant 0 : i32
    return %c0_i32, %c0_i32_0 : i32, i32
  }
  func.func @transform_8(%arg0: i32) -> (i32, i32) {
    %c0_i32 = arith.constant 0 : i32
    %c0_i32_0 = arith.constant 0 : i32
    %c0_i32_1 = arith.constant 0 : i32
    return %c0_i32, %c0_i32_0 : i32, i32
  }
  func.func @transform_9(%arg0: i32) -> (i32, i32, i32) {
    %c0_i32 = arith.constant 0 : i32
    %c0_i32_0 = arith.constant 0 : i32
    %c0_i32_1 = arith.constant 0 : i32
    return %arg0, %c0_i32, %c0_i32_0 : i32, i32, i32
  }
}

</mosaic_0001>

<llo_original>
// kernel: cnn_forward.1
$region0: #{cnn_forward.1}
  #allocation0 [shape = 'u32[]', space=smem, size = 0x4, offset = 0x4, fixed_abs, tag = 'smem constant byte address 0x4 - core index']
  #allocation1 [shape = 'u32[144,128]{1,0:T(1,128)}', space=vmem, size = 0x12000, scoped, tag = 'internal scratch']
  #allocation2 [shape = 'f32[25,668]{1,0:T(8,128)}', space=vmem, size = 0x18000, scoped, tag = 'scratch operand']
  #allocation3 [shape = 'f32[16,668]{1,0:T(8,128)}', space=vmem, size = 0xc000, scoped, tag = 'scratch operand']
  #allocation4 [shape = 'f32[16,144]{1,0:T(8,128)}', space=vmem, size = 0x4000, scoped, tag = 'scratch operand']
  #allocation5 [shape = 'f32[400,92]{1,0:T(8,128)}', space=vmem, size = 0x32000, scoped, tag = 'scratch operand']
  #allocation6 [shape = 'f32[32,92]{1,0:T(8,128)}', space=vmem, size = 0x4000, scoped, tag = 'scratch operand']
  #allocation7 [shape = 'f32[32,16]{1,0:T(8,128)}', space=vmem, size = 0x4000, scoped, tag = 'scratch operand']
  #allocation8 [shape = 'f32[1,512]{1,0:T(1,128)}', space=vmem, size = 0x800, scoped, tag = 'scratch operand']
  %s0 = inlined_call_operand.vmem [shape: f32[2,1,784], index: 0, kind: input, shape index: {}]
  %s1 = inlined_call_operand.vmem [shape: f32[16,25], index: 1, kind: input, shape index: {}]
  %s2 = inlined_call_operand.vmem [shape: f32[16,1], index: 2, kind: input, shape index: {}]
  %s3 = inlined_call_operand.vmem [shape: f32[32,400], index: 3, kind: input, shape index: {}]
  %s4 = inlined_call_operand.vmem [shape: f32[32,1], index: 4, kind: input, shape index: {}]
  %s5 = inlined_call_operand.vmem [shape: f32[512,10], index: 5, kind: input, shape index: {}]
  %s6 = inlined_call_operand.vmem [shape: f32[1,10], index: 6, kind: input, shape index: {}]
  %s7 = inlined_call_operand.vmem [shape: f32[639,144], index: 7, kind: input, shape index: {}]
  %s8 = inlined_call_operand.vmem [shape: f32[79,16], index: 8, kind: input, shape index: {}]
  %s9 = inlined_call_operand.hbm [shape: f32[2,1,10], index: 9, kind: output, shape index: {}]
  %s10 = sld [smem:[#allocation0]]
  $region69: #{cnn_forward.1} parent=0
    _
  %s12 = ssub.s32 1, %s10
  %s13 = scalar_select 0, %s12, %s10
  $region1: #{cnn_forward.1} parent=0
    #allocation9 [shape = 'u8[1024]{0}', space=vmem, size = 0x400, scoped, tag = 'output window, operand 0']
    #allocation10 [shape = 's32[2]{0}', space=sflag, size = 0x8, scoped, tag = 'scoped memory for cnn_forward.1']
    %14 = vsyncpa [#allocation10], 0
    %s15 = scalar_lea.sflag [#allocation10], 1
    %16 = vsyncpa %s15, 0
    loop: start=0, step=1, limit=4
    $region2: #{cnn_forward.1} parent=1 // loop_pre_header
      _
    $region3: #{cnn_forward.1} parent=1 // loop_header
      %s18 = sphi 0, %s22
      %p19 = scmp.ge.s32.totalorder %s18, 4
      %s28 = sphi 0, %s30
      %s31 = sphi 0, %s28
      %s32 = sphi 0, %s31
      %s48 = sphi 0, %s32
      %s52 = sphi 0, %s52
      %s54 = sphi 0, %s52
      %s55 = sphi 0, %s54
      %s69 = sphi 0, %s55
      %s73 = sphi 0, %s73
      %s75 = sphi 0, %s73
      %s76 = sphi 0, %s75
      %s90 = sphi 0, %s76
      %s94 = sphi 0, %s94
      %s96 = sphi 0, %s94
      %s97 = sphi 0, %s96
      %s111 = sphi 0, %s97
      %s115 = sphi 0, %s115
      %s117 = sphi 0, %s115
      %s118 = sphi 0, %s117
      %s132 = sphi 0, %s118
      %s136 = sphi 0, %s136
      %s138 = sphi 0, %s136
      %s139 = sphi 0, %s138
      %s153 = sphi 0, %s139
      %s157 = sphi 0, %s157
      %s159 = sphi 0, %s157
      %s160 = sphi 0, %s159
      %s174 = sphi 0, %s160
      %s178 = sphi 0, %s178
      %s180 = sphi 0, %s178
      %s181 = sphi 0, %s180
      %s195 = sphi 0, %s181
      %s199 = sphi 0, %s199
      %s201 = sphi 0, %s199
      %s202 = sphi 0, %s201
      %s216 = sphi 0, %s202
      %s222 = sphi 0, %s224
      %s225 = sphi 0, %s222
      %s226 = sphi 0, %s225
      %s242 = sphi 0, %s226
    $region4: #{cnn_forward.1} parent=1 // loop_header_branch
      %21 = sbr.rel (%p19) target = $region8
    $region5: #{cnn_forward.1} parent=1 // loop_body
      %s23 = ssub.s32 %s18, 1
      %s24 = ssub.s32 %s18, 2
      %s25 = sadd.s32 %s18, 1
      %s26 = ssub.s32 %s18, %s25
      %p27 = scmp.eq.s32.totalorder %s26, 0
      %s29 = sadd.s32 %s28, 1
      %s30 = scalar_select %p27, %s28, %s29
      %p33 = pneg %p27
      %p34 = scmp.eq.s32.totalorder %s18, 1
      %p35 = por %p33, %p34
      %p36 = scmp.ne.s32.totalorder %s28, %s31
      %p37 = scmp.eq.s32.totalorder %s18, 0
      %p38 = por %p36, %p37
      %p39 = scmp.ne.s32.totalorder %s28, %s31
      %p40 = scmp.eq.s32.totalorder %s23, 1
      %p41 = por %p39, %p40
      %p42 = scmp.ne.s32.totalorder %s31, %s32
      %p43 = scmp.eq.s32.totalorder %s23, 0
      %p44 = por %p42, %p43
      %p45 = scmp.ne.s32.totalorder %s31, %s32
      %p46 = scmp.eq.s32.totalorder %s24, 1
      %p47 = por %p45, %p46
      %p49 = scmp.ne.s32.totalorder %s32, %s48
      %p50 = scmp.eq.s32.totalorder %s24, 0
      %p51 = por %p49, %p50
      %s53 = sadd.s32 %s52, 1
      %p56 = scmp.eq.s32.totalorder %s18, 1
      %p57 = scmp.ne.s32.totalorder %s52, %s54
      %p58 = scmp.eq.s32.totalorder %s18, 0
      %p59 = por %p57, %p58
      %p60 = scmp.ne.s32.totalorder %s52, %s54
      %p61 = scmp.eq.s32.totalorder %s23, 1
      %p62 = por %p60, %p61
      %p63 = scmp.ne.s32.totalorder %s54, %s55
      %p64 = scmp.eq.s32.totalorder %s23, 0
      %p65 = por %p63, %p64
      %p66 = scmp.ne.s32.totalorder %s54, %s55
      %p67 = scmp.eq.s32.totalorder %s24, 1
      %p68 = por %p66, %p67
      %p70 = scmp.ne.s32.totalorder %s55, %s69
      %p71 = scmp.eq.s32.totalorder %s24, 0
      %p72 = por %p70, %p71
      %s74 = sadd.s32 %s73, 1
      %p77 = scmp.eq.s32.totalorder %s18, 1
      %p78 = scmp.ne.s32.totalorder %s73, %s75
      %p79 = scmp.eq.s32.totalorder %s18, 0
      %p80 = por %p78, %p79
      %p81 = scmp.ne.s32.totalorder %s73, %s75
      %p82 = scmp.eq.s32.totalorder %s23, 1
      %p83 = por %p81, %p82
      %p84 = scmp.ne.s32.totalorder %s75, %s76
      %p85 = scmp.eq.s32.totalorder %s23, 0
      %p86 = por %p84, %p85
      %p87 = scmp.ne.s32.totalorder %s75, %s76
      %p88 = scmp.eq.s32.totalorder %s24, 1
      %p89 = por %p87, %p88
      %p91 = scmp.ne.s32.totalorder %s76, %s90
      %p92 = scmp.eq.s32.totalorder %s24, 0
      %p93 = por %p91, %p92
      %s95 = sadd.s32 %s94, 1
      %p98 = scmp.eq.s32.totalorder %s18, 1
      %p99 = scmp.ne.s32.totalorder %s94, %s96
      %p100 = scmp.eq.s32.totalorder %s18, 0
      %p101 = por %p99, %p100
      %p102 = scmp.ne.s32.totalorder %s94, %s96
      %p103 = scmp.eq.s32.totalorder %s23, 1
      %p104 = por %p102, %p103
      %p105 = scmp.ne.s32.totalorder %s96, %s97
      %p106 = scmp.eq.s32.totalorder %s23, 0
      %p107 = por %p105, %p106
      %p108 = scmp.ne.s32.totalorder %s96, %s97
      %p109 = scmp.eq.s32.totalorder %s24, 1
      %p110 = por %p108, %p109
      %p112 = scmp.ne.s32.totalorder %s97, %s111
      %p113 = scmp.eq.s32.totalorder %s24, 0
      %p114 = por %p112, %p113
      %s116 = sadd.s32 %s115, 1
      %p119 = scmp.eq.s32.totalorder %s18, 1
      %p120 = scmp.ne.s32.totalorder %s115, %s117
      %p121 = scmp.eq.s32.totalorder %s18, 0
      %p122 = por %p120, %p121
      %p123 = scmp.ne.s32.totalorder %s115, %s117
      %p124 = scmp.eq.s32.totalorder %s23, 1
      %p125 = por %p123, %p124
      %p126 = scmp.ne.s32.totalorder %s117, %s118
      %p127 = scmp.eq.s32.totalorder %s23, 0
      %p128 = por %p126, %p127
      %p129 = scmp.ne.s32.totalorder %s117, %s118
      %p130 = scmp.eq.s32.totalorder %s24, 1
      %p131 = por %p129, %p130
      %p133 = scmp.ne.s32.totalorder %s118, %s132
      %p134 = scmp.eq.s32.totalorder %s24, 0
      %p135 = por %p133, %p134
      %s137 = sadd.s32 %s136, 1
      %p140 = scmp.eq.s32.totalorder %s18, 1
      %p141 = scmp.ne.s32.totalorder %s136, %s138
      %p142 = scmp.eq.s32.totalorder %s18, 0
      %p143 = por %p141, %p142
      %p144 = scmp.ne.s32.totalorder %s136, %s138
      %p145 = scmp.eq.s32.totalorder %s23, 1
      %p146 = por %p144, %p145
      %p147 = scmp.ne.s32.totalorder %s138, %s139
      %p148 = scmp.eq.s32.totalorder %s23, 0
      %p149 = por %p147, %p148
      %p150 = scmp.ne.s32.totalorder %s138, %s139
      %p151 = scmp.eq.s32.totalorder %s24, 1
      %p152 = por %p150, %p151
      %p154 = scmp.ne.s32.totalorder %s139, %s153
      %p155 = scmp.eq.s32.totalorder %s24, 0
      %p156 = por %p154, %p155
      %s158 = sadd.s32 %s157, 1
      %p161 = scmp.eq.s32.totalorder %s18, 1
      %p162 = scmp.ne.s32.totalorder %s157, %s159
      %p163 = scmp.eq.s32.totalorder %s18, 0
      %p164 = por %p162, %p163
      %p165 = scmp.ne.s32.totalorder %s157, %s159
      %p166 = scmp.eq.s32.totalorder %s23, 1
      %p167 = por %p165, %p166
      %p168 = scmp.ne.s32.totalorder %s159, %s160
      %p169 = scmp.eq.s32.totalorder %s23, 0
      %p170 = por %p168, %p169
      %p171 = scmp.ne.s32.totalorder %s159, %s160
      %p172 = scmp.eq.s32.totalorder %s24, 1
      %p173 = por %p171, %p172
      %p175 = scmp.ne.s32.totalorder %s160, %s174
      %p176 = scmp.eq.s32.totalorder %s24, 0
      %p177 = por %p175, %p176
      %s179 = sadd.s32 %s178, 1
      %p182 = scmp.eq.s32.totalorder %s18, 1
      %p183 = scmp.ne.s32.totalorder %s178, %s180
      %p184 = scmp.eq.s32.totalorder %s18, 0
      %p185 = por %p183, %p184
      %p186 = scmp.ne.s32.totalorder %s178, %s180
      %p187 = scmp.eq.s32.totalorder %s23, 1
      %p188 = por %p186, %p187
      %p189 = scmp.ne.s32.totalorder %s180, %s181
      %p190 = scmp.eq.s32.totalorder %s23, 0
      %p191 = por %p189, %p190
      %p192 = scmp.ne.s32.totalorder %s180, %s181
      %p193 = scmp.eq.s32.totalorder %s24, 1
      %p194 = por %p192, %p193
      %p196 = scmp.ne.s32.totalorder %s181, %s195
      %p197 = scmp.eq.s32.totalorder %s24, 0
      %p198 = por %p196, %p197
      %s200 = sadd.s32 %s199, 1
      %p203 = scmp.eq.s32.totalorder %s18, 1
      %p204 = scmp.ne.s32.totalorder %s199, %s201
      %p205 = scmp.eq.s32.totalorder %s18, 0
      %p206 = por %p204, %p205
      %p207 = scmp.ne.s32.totalorder %s199, %s201
      %p208 = scmp.eq.s32.totalorder %s23, 1
      %p209 = por %p207, %p208
      %p210 = scmp.ne.s32.totalorder %s201, %s202
      %p211 = scmp.eq.s32.totalorder %s23, 0
      %p212 = por %p210, %p211
      %p213 = scmp.ne.s32.totalorder %s201, %s202
      %p214 = scmp.eq.s32.totalorder %s24, 1
      %p215 = por %p213, %p214
      %p217 = scmp.ne.s32.totalorder %s202, %s216
      %p218 = scmp.eq.s32.totalorder %s24, 0
      %p219 = por %p217, %p218
      %s220 = ssub.s32 %s18, %s25
      %p221 = scmp.eq.s32.totalorder %s220, 0
      %s223 = sadd.s32 %s222, 1
      %s224 = scalar_select %p221, %s222, %s223
      %p227 = pneg %p221
      %p228 = scmp.eq.s32.totalorder %s18, 1
      %p229 = por %p227, %p228
      %p230 = scmp.ne.s32.totalorder %s222, %s225
      %p231 = scmp.eq.s32.totalorder %s18, 0
      %p232 = por %p230, %p231
      %p233 = scmp.ne.s32.totalorder %s222, %s225
      %p234 = scmp.eq.s32.totalorder %s23, 1
      %p235 = por %p233, %p234
      %p236 = scmp.ne.s32.totalorder %s225, %s226
      %p237 = scmp.eq.s32.totalorder %s23, 0
      %p238 = por %p236, %p237
      %p239 = scmp.ne.s32.totalorder %s225, %s226
      %p240 = scmp.eq.s32.totalorder %s24, 1
      %p241 = por %p239, %p240
      %p243 = scmp.ne.s32.totalorder %s226, %s242
      %p244 = scmp.eq.s32.totalorder %s24, 0
      %p245 = por %p243, %p244
      %p246 = scmp.le.s32.totalorder 1, %s18
      %p247 = scmp.lt.s32.totalorder %s18, 3
      %p248 = pnand %p246, %p247
      %p249 = pneg %p248
      // Predicated region
      $region9: #{cnn_forward.1} parent=5 // pred_check
        _
      $region10: #{cnn_forward.1} parent=5 // pred_check_branch
        %251 = sbr.rel (%p248) target = $region12
      $region11: #{cnn_forward.1} parent=5 // pred_region
        %s252 = ssub.s32 %s18, 1
        // Predicated region
        $region13: #{cnn_forward.1} parent=11 // pred_check
          %p253 = pneg %p65
        $region14: #{cnn_forward.1} parent=11 // pred_check_branch
          %255 = sbr.rel (%p253) target = $region16
        $region15: #{cnn_forward.1} parent=11 // pred_region
          _
        $region16: #{cnn_forward.1} parent=11 // pred_fallthru
          _
        // Predicated region
        $region17: #{cnn_forward.1} parent=11 // pred_check
          %p256 = pneg %p86
        $region18: #{cnn_forward.1} parent=11 // pred_check_branch
          %258 = sbr.rel (%p256) target = $region20
        $region19: #{cnn_forward.1} parent=11 // pred_region
          _
        $region20: #{cnn_forward.1} parent=11 // pred_fallthru
          _
        // Predicated region
        $region21: #{cnn_forward.1} parent=11 // pred_check
          %p259 = pneg %p107
        $region22: #{cnn_forward.1} parent=11 // pred_check_branch
          %261 = sbr.rel (%p259) target = $region24
        $region23: #{cnn_forward.1} parent=11 // pred_region
          _
        $region24: #{cnn_forward.1} parent=11 // pred_fallthru
          _
        // Predicated region
        $region25: #{cnn_forward.1} parent=11 // pred_check
          %p262 = pneg %p128
        $region26: #{cnn_forward.1} parent=11 // pred_check_branch
          %264 = sbr.rel (%p262) target = $region28
        $region27: #{cnn_forward.1} parent=11 // pred_region
          _
        $region28: #{cnn_forward.1} parent=11 // pred_fallthru
          _
        // Predicated region
        $region29: #{cnn_forward.1} parent=11 // pred_check
          %p265 = pneg %p149
        $region30: #{cnn_forward.1} parent=11 // pred_check_branch
          %267 = sbr.rel (%p265) target = $region32
        $region31: #{cnn_forward.1} parent=11 // pred_region
          _
        $region32: #{cnn_forward.1} parent=11 // pred_fallthru
          _
        // Predicated region
        $region33: #{cnn_forward.1} parent=11 // pred_check
          %p268 = pneg %p170
        $region34: #{cnn_forward.1} parent=11 // pred_check_branch
          %270 = sbr.rel (%p268) target = $region36
        $region35: #{cnn_forward.1} parent=11 // pred_region
          _
        $region36: #{cnn_forward.1} parent=11 // pred_fallthru
          _
        // Predicated region
        $region37: #{cnn_forward.1} parent=11 // pred_check
          %p271 = pneg %p191
        $region38: #{cnn_forward.1} parent=11 // pred_check_branch
          %273 = sbr.rel (%p271) target = $region40
        $region39: #{cnn_forward.1} parent=11 // pred_region
          _
        $region40: #{cnn_forward.1} parent=11 // pred_fallthru
          _
        // Predicated region
        $region41: #{cnn_forward.1} parent=11 // pred_check
          %p274 = pneg %p212
        $region42: #{cnn_forward.1} parent=11 // pred_check_branch
          %276 = sbr.rel (%p274) target = $region44
        $region43: #{cnn_forward.1} parent=11 // pred_region
          _
        $region44: #{cnn_forward.1} parent=11 // pred_fallthru
          _
      $region12: #{cnn_forward.1} parent=5 // pred_fallthru
        _
      %p277 = scmp.lt.s32.totalorder %s18, 2
      // Predicated region
      $region45: #{cnn_forward.1} parent=5 // pred_check
        %p278 = pneg %p277
      $region46: #{cnn_forward.1} parent=5 // pred_check_branch
        %280 = sbr.rel (%p278) target = $region48
      $region47: #{cnn_forward.1} parent=5 // pred_region
        // Predicated region
        $region49: #{cnn_forward.1} parent=47 // pred_check
          %p281 = pneg %p38
        $region50: #{cnn_forward.1} parent=47 // pred_check_branch
          %283 = sbr.rel (%p281) target = $region52
        $region51: #{cnn_forward.1} parent=47 // pred_region
          %p284 = scmp.lt.s32.totalorder %s18, 1
          %s285 = scalar_select %p284, %s18, 1
          %s286 = smul.addr %s285, 7
          %s287 = scalar_lea.vmem %s0, %s286
        $region52: #{cnn_forward.1} parent=47 // pred_fallthru
          _
      $region48: #{cnn_forward.1} parent=5 // pred_fallthru
        _
      %p288 = scmp.le.s32.totalorder 1, %s18
      %p289 = scmp.lt.s32.totalorder %s18, 3
      %p290 = pnand %p288, %p289
      %p291 = pneg %p290
      // Predicated region
      $region53: #{cnn_forward.1} parent=5 // pred_check
        _
      $region54: #{cnn_forward.1} parent=5 // pred_check_branch
        %293 = sbr.rel (%p290) target = $region56
      $region55: #{cnn_forward.1} parent=5 // pred_region
        %s294 = ssub.s32 %s18, 1
        %p295 = scmp.lt.s32.totalorder %s23, 1
        %s296 = scalar_select %p295, %s23, 1
        %s297 = smul.addr %s296, 7
        %s298 = scalar_lea.vmem %s0, %s297
        %p299 = pneg %p44
        %p300 = pneg %p41
        %p301 = pneg %p65
        %p302 = pneg %p62
        %p303 = pneg %p86
        %p304 = pneg %p83
        %p305 = pneg %p107
        %p306 = pneg %p104
        %p307 = pneg %p128
        %p308 = pneg %p125
        %p309 = pneg %p149
        %p310 = pneg %p146
        %p311 = pneg %p170
        %p312 = pneg %p167
        %p313 = pneg %p191
        %p314 = pneg %p188
        %p315 = pneg %p212
        %p316 = pneg %p209
        %p317 = pneg %p238
        %p318 = pneg %p235
        %s319 = sand.u32 %s225, 1
        %s320 = scalar_lea.sflag [#allocation10], %s319
        %s321 = sand.u32 %s225, 1
        %s322 = scalar_lea.vmem [#allocation9], %s321
        %p323 = scmp.lt.s32.totalorder %s23, 1
        %s324 = scalar_select %p323, %s23, 1
        %s325 = smul.addr %s324, 7
        %s326 = scalar_lea.vmem %s0, %s325
        %v327 = vld [vmem:[%s326] sm:$0x3f]
        %v328 = vlaneseq
        %vm329 = vcmp.ge.s32.totalorder %v328, 0
        %vm330 = vcmp.lt.s32.totalorder %v328, 668
        %vm331 = vmand %vm329, %vm330
        %332 = vst.msk [vmem:[#allocation2] ss:$8 sm:$0xf] %vm331, %v327
        %333 = vst.msk [vmem:[#allocation2] ss:$8 sm:$0x30] %vm331, %v327
        %v334 = vld [vmem:[%s326] sm:$0x3f]
        %336 = vrot.lane.b32.xlu0 %v334, 127
        %v337 = vpop.permute.xlu0 %336
        %v338 = vrot.slane %v337, 1
        %vm339 = vcmask 1039360
        %v340 = vsel %vm339, %v337, %v338
        %s342 = scalar_lea.vmem [#allocation2], 1
        %343 = vst.msk [vmem:[%s342] ss:$8 sm:$0xf] %vm331, %v340
        %344 = vst.msk [vmem:[%s342] ss:$8 sm:$0x30] %vm331, %v340
        %v345 = vld [vmem:[%s326] sm:$0x3f]
        %347 = vrot.lane.b32.xlu0 %v345, 126
        %v348 = vpop.permute.xlu0 %347
        %v349 = vrot.slane %v348, 1
        %vm350 = vcmask 1031168
        %v351 = vsel %vm350, %v348, %v349
        %s353 = scalar_lea.vmem [#allocation2], 2
        %354 = vst.msk [vmem:[%s353] ss:$8 sm:$0xf] %vm331, %v351
        %355 = vst.msk [vmem:[%s353] ss:$8 sm:$0x30] %vm331, %v351
        %v356 = vld [vmem:[%s326] sm:$0x3f]
        %358 = vrot.lane.b32.xlu0 %v356, 125
        %v359 = vpop.permute.xlu0 %358
        %v360 = vrot.slane %v359, 1
        %vm361 = vcmask 1022976
        %v362 = vsel %vm361, %v359, %v360
        %s364 = scalar_lea.vmem [#allocation2], 3
        %365 = vst.msk [vmem:[%s364] ss:$8 sm:$0xf] %vm331, %v362
        %366 = vst.msk [vmem:[%s364] ss:$8 sm:$0x30] %vm331, %v362
        %v367 = vld [vmem:[%s326] sm:$0x3f]
        %369 = vrot.lane.b32.xlu0 %v367, 124
        %v370 = vpop.permute.xlu0 %369
        %v371 = vrot.slane %v370, 1
        %vm372 = vcmask 1014784
        %v373 = vsel %vm372, %v370, %v371
        %s375 = scalar_lea.vmem [#allocation2], 4
        %376 = vst.msk [vmem:[%s375] ss:$8 sm:$0xf] %vm331, %v373
        %377 = vst.msk [vmem:[%s375] ss:$8 sm:$0x30] %vm331, %v373
        %v378 = vld [vmem:[%s326] sm:$0x3f]
        %380 = vrot.lane.b32.xlu0 %v378, 100
        %v381 = vpop.permute.xlu0 %380
        %v382 = vrot.slane %v381, 1
        %vm383 = vcmask 818176
        %v384 = vsel %vm383, %v381, %v382
        %s386 = scalar_lea.vmem [#allocation2], 5
        %387 = vst.msk [vmem:[%s386] ss:$8 sm:$0xf] %vm331, %v384
        %388 = vst.msk [vmem:[%s386] ss:$8 sm:$0x30] %vm331, %v384
        %v389 = vld [vmem:[%s326] sm:$0x3f]
        %391 = vrot.lane.b32.xlu0 %v389, 99
        %v392 = vpop.permute.xlu0 %391
        %v393 = vrot.slane %v392, 1
        %vm394 = vcmask 809984
        %v395 = vsel %vm394, %v392, %v393
        %s397 = scalar_lea.vmem [#allocation2], 6
        %398 = vst.msk [vmem:[%s397] ss:$8 sm:$0xf] %vm331, %v395
        %399 = vst.msk [vmem:[%s397] ss:$8 sm:$0x30] %vm331, %v395
        %v400 = vld [vmem:[%s326] sm:$0x3f]
        %402 = vrot.lane.b32.xlu0 %v400, 98
        %v403 = vpop.permute.xlu0 %402
        %v404 = vrot.slane %v403, 1
        %vm405 = vcmask 801792
        %v406 = vsel %vm405, %v403, %v404
        %s408 = scalar_lea.vmem [#allocation2], 7
        %409 = vst.msk [vmem:[%s408] ss:$8 sm:$0xf] %vm331, %v406
        %410 = vst.msk [vmem:[%s408] ss:$8 sm:$0x30] %vm331, %v406
        %v411 = vld [vmem:[%s326] sm:$0x3f]
        %413 = vrot.lane.b32.xlu0 %v411, 97
        %v414 = vpop.permute.xlu0 %413
        %v415 = vrot.slane %v414, 1
        %vm416 = vcmask 793600
        %v417 = vsel %vm416, %v414, %v415
        %s419 = scalar_lea.vmem [#allocation2], 48
        %420 = vst.msk [vmem:[%s419] ss:$8 sm:$0xf] %vm331, %v417
        %421 = vst.msk [vmem:[%s419] ss:$8 sm:$0x30] %vm331, %v417
        %v422 = vld [vmem:[%s326] sm:$0x3f]
        %424 = vrot.lane.b32.xlu0 %v422, 96
        %v425 = vpop.permute.xlu0 %424
        %v426 = vrot.slane %v425, 1
        %vm427 = vcmask 785408
        %v428 = vsel %vm427, %v425, %v426
        %s430 = scalar_lea.vmem [#allocation2], 49
        %431 = vst.msk [vmem:[%s430] ss:$8 sm:$0xf] %vm331, %v428
        %432 = vst.msk [vmem:[%s430] ss:$8 sm:$0x30] %vm331, %v428
        %v433 = vld [vmem:[%s326] sm:$0x3f]
        %435 = vrot.lane.b32.xlu0 %v433, 72
        %v436 = vpop.permute.xlu0 %435
        %v437 = vrot.slane %v436, 1
        %vm438 = vcmask 588800
        %v439 = vsel %vm438, %v436, %v437
        %s441 = scalar_lea.vmem [#allocation2], 50
        %442 = vst.msk [vmem:[%s441] ss:$8 sm:$0xf] %vm331, %v439
        %443 = vst.msk [vmem:[%s441] ss:$8 sm:$0x30] %vm331, %v439
        %v444 = vld [vmem:[%s326] sm:$0x3f]
        %446 = vrot.lane.b32.xlu0 %v444, 71
        %v447 = vpop.permute.xlu0 %446
        %v448 = vrot.slane %v447, 1
        %vm449 = vcmask 580608
        %v450 = vsel %vm449, %v447, %v448
        %s452 = scalar_lea.vmem [#allocation2], 51
        %453 = vst.msk [vmem:[%s452] ss:$8 sm:$0xf] %vm331, %v450
        %454 = vst.msk [vmem:[%s452] ss:$8 sm:$0x30] %vm331, %v450
        %v455 = vld [vmem:[%s326] sm:$0x3f]
        %457 = vrot.lane.b32.xlu0 %v455, 70
        %v458 = vpop.permute.xlu0 %457
        %v459 = vrot.slane %v458, 1
        %vm460 = vcmask 572416
        %v461 = vsel %vm460, %v458, %v459
        %s463 = scalar_lea.vmem [#allocation2], 52
        %464 = vst.msk [vmem:[%s463] ss:$8 sm:$0xf] %vm331, %v461
        %465 = vst.msk [vmem:[%s463] ss:$8 sm:$0x30] %vm331, %v461
        %v466 = vld [vmem:[%s326] sm:$0x3f]
        %468 = vrot.lane.b32.xlu0 %v466, 69
        %v469 = vpop.permute.xlu0 %468
        %v470 = vrot.slane %v469, 1
        %vm471 = vcmask 564224
        %v472 = vsel %vm471, %v469, %v470
        %s474 = scalar_lea.vmem [#allocation2], 53
        %475 = vst.msk [vmem:[%s474] ss:$8 sm:$0xf] %vm331, %v472
        %476 = vst.msk [vmem:[%s474] ss:$8 sm:$0x30] %vm331, %v472
        %v477 = vld [vmem:[%s326] sm:$0x3f]
        %479 = vrot.lane.b32.xlu0 %v477, 68
        %v480 = vpop.permute.xlu0 %479
        %v481 = vrot.slane %v480, 1
        %vm482 = vcmask 556032
        %v483 = vsel %vm482, %v480, %v481
        %s485 = scalar_lea.vmem [#allocation2], 54
        %486 = vst.msk [vmem:[%s485] ss:$8 sm:$0xf] %vm331, %v483
        %487 = vst.msk [vmem:[%s485] ss:$8 sm:$0x30] %vm331, %v483
        %v488 = vld [vmem:[%s326] sm:$0x3f]
        %490 = vrot.lane.b32.xlu0 %v488, 44
        %v491 = vpop.permute.xlu0 %490
        %v492 = vrot.slane %v491, 1
        %vm493 = vcmask 359424
        %v494 = vsel %vm493, %v491, %v492
        %s496 = scalar_lea.vmem [#allocation2], 55
        %497 = vst.msk [vmem:[%s496] ss:$8 sm:$0xf] %vm331, %v494
        %498 = vst.msk [vmem:[%s496] ss:$8 sm:$0x30] %vm331, %v494
        %v499 = vld [vmem:[%s326] sm:$0x3f]
        %501 = vrot.lane.b32.xlu0 %v499, 43
        %v502 = vpop.permute.xlu0 %501
        %v503 = vrot.slane %v502, 1
        %vm504 = vcmask 351232
        %v505 = vsel %vm504, %v502, %v503
        %s507 = scalar_lea.vmem [#allocation2], 96
        %508 = vst.msk [vmem:[%s507] ss:$8 sm:$0xf] %vm331, %v505
        %509 = vst.msk [vmem:[%s507] ss:$8 sm:$0x30] %vm331, %v505
        %v510 = vld [vmem:[%s326] sm:$0x3f]
        %512 = vrot.lane.b32.xlu0 %v510, 42
        %v513 = vpop.permute.xlu0 %512
        %v514 = vrot.slane %v513, 1
        %vm515 = vcmask 343040
        %v516 = vsel %vm515, %v513, %v514
        %s518 = scalar_lea.vmem [#allocation2], 97
        %519 = vst.msk [vmem:[%s518] ss:$8 sm:$0xf] %vm331, %v516
        %520 = vst.msk [vmem:[%s518] ss:$8 sm:$0x30] %vm331, %v516
        %v521 = vld [vmem:[%s326] sm:$0x3f]
        %523 = vrot.lane.b32.xlu0 %v521, 41
        %v524 = vpop.permute.xlu0 %523
        %v525 = vrot.slane %v524, 1
        %vm526 = vcmask 334848
        %v527 = vsel %vm526, %v524, %v525
        %s529 = scalar_lea.vmem [#allocation2], 98
        %530 = vst.msk [vmem:[%s529] ss:$8 sm:$0xf] %vm331, %v527
        %531 = vst.msk [vmem:[%s529] ss:$8 sm:$0x30] %vm331, %v527
        %v532 = vld [vmem:[%s326] sm:$0x3f]
        %534 = vrot.lane.b32.xlu0 %v532, 40
        %v535 = vpop.permute.xlu0 %534
        %v536 = vrot.slane %v535, 1
        %vm537 = vcmask 326656
        %v538 = vsel %vm537, %v535, %v536
        %s540 = scalar_lea.vmem [#allocation2], 99
        %541 = vst.msk [vmem:[%s540] ss:$8 sm:$0xf] %vm331, %v538
        %542 = vst.msk [vmem:[%s540] ss:$8 sm:$0x30] %vm331, %v538
        %v543 = vld [vmem:[%s326] sm:$0x7f]
        %545 = vrot.lane.b32.xlu0 %v543, 16
        %v546 = vpop.permute.xlu0 %545
        %v547 = vrot.slane %v546, 1
        %vm548 = vcmask 130048
        %v549 = vsel %vm548, %v546, %v547
        %s551 = scalar_lea.vmem [#allocation2], 100
        %552 = vst.msk [vmem:[%s551] ss:$8 sm:$0xf] %vm331, %v549
        %553 = vst.msk [vmem:[%s551] ss:$8 sm:$0x30] %vm331, %v549
        %v554 = vld [vmem:[%s326] sm:$0x7f]
        %556 = vrot.lane.b32.xlu0 %v554, 15
        %v557 = vpop.permute.xlu0 %556
        %v558 = vrot.slane %v557, 1
        %vm559 = vcmask 121856
        %v560 = vsel %vm559, %v557, %v558
        %s562 = scalar_lea.vmem [#allocation2], 101
        %563 = vst.msk [vmem:[%s562] ss:$8 sm:$0xf] %vm331, %v560
        %564 = vst.msk [vmem:[%s562] ss:$8 sm:$0x30] %vm331, %v560
        %v565 = vld [vmem:[%s326] sm:$0x7f]
        %567 = vrot.lane.b32.xlu0 %v565, 14
        %v568 = vpop.permute.xlu0 %567
        %v569 = vrot.slane %v568, 1
        %vm570 = vcmask 113664
        %v571 = vsel %vm570, %v568, %v569
        %s573 = scalar_lea.vmem [#allocation2], 102
        %574 = vst.msk [vmem:[%s573] ss:$8 sm:$0xf] %vm331, %v571
        %575 = vst.msk [vmem:[%s573] ss:$8 sm:$0x30] %vm331, %v571
        %v576 = vld [vmem:[%s326] sm:$0x7f]
        %578 = vrot.lane.b32.xlu0 %v576, 13
        %v579 = vpop.permute.xlu0 %578
        %v580 = vrot.slane %v579, 1
        %vm581 = vcmask 105472
        %v582 = vsel %vm581, %v579, %v580
        %s584 = scalar_lea.vmem [#allocation2], 103
        %585 = vst.msk [vmem:[%s584] ss:$8 sm:$0xf] %vm331, %v582
        %586 = vst.msk [vmem:[%s584] ss:$8 sm:$0x30] %vm331, %v582
        %v587 = vld [vmem:[%s326] sm:$0x7f]
        %589 = vrot.lane.b32.xlu0 %v587, 12
        %v590 = vpop.permute.xlu0 %589
        %v591 = vrot.slane %v590, 1
        %vm592 = vcmask 97280
        %v593 = vsel %vm592, %v590, %v591
        %s595 = scalar_lea.vmem [#allocation2], 144
        %596 = vst.msk [vmem:[%s595] ss:$8 sm:$0xf] %vm331, %v593
        %597 = vst.msk [vmem:[%s595] ss:$8 sm:$0x30] %vm331, %v593
        %v598 = vld [vmem:[%s1] sm:$0xff]
        %v599 = vld [vmem:[%s1 + $0x8] sm:$0xff]
        %v600 = vld [vmem:[#allocation2] sm:$0xff]
        %v601 = vld [vmem:[#allocation2 + $0x8] sm:$0xff]
        %v602 = vld [vmem:[#allocation2 + $0x10] sm:$0xff]
        %v603 = vld [vmem:[#allocation2 + $0x18] sm:$0xff]
        %v604 = vld [vmem:[#allocation2 + $0x20] sm:$0xff]
        %v605 = vld [vmem:[#allocation2 + $0x28] sm:$0xff]
        %v606 = vld [vmem:[#allocation2 + $0x30] sm:$0xff]
        %v607 = vld [vmem:[#allocation2 + $0x38] sm:$0xff]
        %v608 = vld [vmem:[#allocation2 + $0x40] sm:$0xff]
        %v609 = vld [vmem:[#allocation2 + $0x48] sm:$0xff]
        %v610 = vld [vmem:[#allocation2 + $0x50] sm:$0xff]
        %v611 = vld [vmem:[#allocation2 + $0x58] sm:$0xff]
        %v612 = vld [vmem:[#allocation2 + $0x60] sm:$0xff]
        %v613 = vld [vmem:[#allocation2 + $0x68] sm:$0xff]
        %v614 = vld [vmem:[#allocation2 + $0x70] sm:$0xff]
        %v615 = vld [vmem:[#allocation2 + $0x78] sm:$0xff]
        %v616 = vld [vmem:[#allocation2 + $0x80] sm:$0xff]
        %v617 = vld [vmem:[#allocation2 + $0x88] sm:$0xff]
        %v618 = vld [vmem:[#allocation2 + $0x90] sm:$0x1]
        %v619 = vld [vmem:[#allocation2 + $0x98] sm:$0x1]
        %v620 = vld [vmem:[#allocation2 + $0xa0] sm:$0x1]
        %v621 = vld [vmem:[#allocation2 + $0xa8] sm:$0x1]
        %v622 = vld [vmem:[#allocation2 + $0xb0] sm:$0x1]
        %v623 = vld [vmem:[#allocation2 + $0xb8] sm:$0x1]
        %v624 = vld [vmem:[%s2] sm:$0xff]
        %v625 = vld [vmem:[%s2 + $0x8] sm:$0xff]
        %627 = vset.pattern.permute.xlu0 0
        %628 = vperm.xlu0 %627, %v624
        %v629 = vpop.permute.xlu0 %628
        %632 = vset.pattern.permute.xlu0 0
        %633 = vperm.xlu0 %632, %v625
        %v634 = vpop.permute.xlu0 %633
        %vm636 = vcmask 203776
        %v638 = vsel %vm636, %v598, 0
        %v641 = vsel %vm636, %v599, 0
        %vm643 = vcmask 1040384
        %v645 = vsel %vm643, %v618, 0
        %v648 = vsel %vm643, %v619, 0
        %v651 = vsel %vm643, %v620, 0
        %v654 = vsel %vm643, %v621, 0
        %v657 = vsel %vm643, %v622, 0
        %v660 = vsel %vm643, %v623, 0
        %662 = vmatprep.subr.mxu0 %v601
        %663 = vmatpush1.msra.mxu0 %v600
        %664 = vmatprep.subr.mxu0 %v607
        %665 = vmatpush1.msra.mxu0 %v606
        %666 = vmatprep.subr.mxu0 %v613
        %667 = vmatpush1.msra.mxu0 %v612
        %668 = vmatprep.subr.mxu0 %v648
        %669 = vmatpush1.msra.mxu0 %v645
        %670 = vmatprep.subr.mxu0 0.0
        %671 = vmatpush1.msra.mxu0 0.0
        %672 = vmatprep.subr.mxu0 0.0
        %673 = vmatpush1.msra.mxu0 0.0
        %674 = vmatprep.subr.mxu0 0.0
        %675 = vmatpush1.msra.mxu0 0.0
        %676 = vmatprep.subr.mxu0 0.0
        %677 = vmatpush1.msra.mxu0 0.0
        %678 = vmatprep.subr.mxu0 0.0
        %679 = vmatpush1.msra.mxu0 0.0
        %680 = vmatprep.subr.mxu0 0.0
        %681 = vmatpush1.msra.mxu0 0.0
        %682 = vmatprep.subr.mxu0 0.0
        %683 = vmatpush1.msra.mxu0 0.0
        %684 = vmatprep.subr.mxu0 0.0
        %685 = vmatpush1.msra.mxu0 0.0
        %686 = vmatprep.subr.mxu0 0.0
        %687 = vmatpush1.msra.mxu0 0.0
        %688 = vmatprep.subr.mxu0 0.0
        %689 = vmatpush1.msra.mxu0 0.0
        %690 = vmatprep.subr.mxu0 0.0
        %691 = vmatpush1.msra.mxu0 0.0
        %692 = vmatprep.subr.mxu0 0.0
        %693 = vmatpush1.msra.mxu0 0.0
        %694 = vmatprep.subr.mxu0 0.0
        %695 = vmatpush1.msra.mxu0 0.0
        %696 = vmatprep.subr.mxu0 0.0
        %697 = vmatpush1.msra.mxu0 0.0
        %698 = vmatprep.subr.mxu0 0.0
        %699 = vmatpush1.msra.mxu0 0.0
        %700 = vmatprep.subr.mxu0 0.0
        %701 = vmatpush1.msra.mxu0 0.0
        %702 = vmatprep.subr.mxu0 0.0
        %703 = vmatpush1.msra.mxu0 0.0
        %704 = vmatprep.subr.mxu0 0.0
        %705 = vmatpush1.msra.mxu0 0.0
        %706 = vmatprep.subr.mxu0 0.0
        %707 = vmatpush1.msra.mxu0 0.0
        %708 = vmatprep.subr.mxu0 0.0
        %709 = vmatpush1.msra.mxu0 0.0
        %710 = vmatprep.subr.mxu0 0.0
        %711 = vmatpush1.msra.mxu0 0.0
        %712 = vmatprep.subr.mxu0 0.0
        %713 = vmatpush1.msra.mxu0 0.0
        %714 = vmatprep.subr.mxu0 0.0
        %715 = vmatpush1.msra.mxu0 0.0
        %716 = vmatprep.subr.mxu0 0.0
        %717 = vmatpush1.msra.mxu0 0.0
        %718 = vmatprep.subr.mxu0 0.0
        %719 = vmatpush1.msra.mxu0 0.0
        %720 = vmatprep.subr.mxu0 0.0
        %721 = vmatpush1.msra.mxu0 0.0
        %722 = vmatprep.subr.mxu0 0.0
        %723 = vmatpush1.msra.mxu0 0.0
        %724 = vmatprep.subr.mxu0 0.0
        %725 = vmatpush1.msra.mxu0 0.0
        %726 = vmatprep.mubr.f32.mxu0 0.0
        %727 = vmatmul.mubr.f32.gmra.mrb[0].mxu0 %v638
        %v728 = vpop.f32.mrb[0].mxu0
        %v729 = vadd.f32 %v629, %v728
        %v730 = vpop.f32.mrb[0].mxu0
        %v731 = vadd.f32 %v629, %v730
        %732 = vmatprep.mubr.f32.mxu0 0.0
        %733 = vmatmul.mubr.f32.gmra.mrb[0].mxu0 %v641
        %v734 = vpop.f32.mrb[0].mxu0
        %v735 = vadd.f32 %v634, %v734
        %v736 = vpop.f32.mrb[0].mxu0
        %v737 = vadd.f32 %v634, %v736
        %738 = vdwg.mxu0
        %739 = vmatprep.subr.mxu0 %v603
        %740 = vmatpush1.msra.mxu0 %v602
        %741 = vmatprep.subr.mxu0 %v609
        %742 = vmatpush1.msra.mxu0 %v608
        %743 = vmatprep.subr.mxu0 %v615
        %744 = vmatpush1.msra.mxu0 %v614
        %745 = vmatprep.subr.mxu0 %v654
        %746 = vmatpush1.msra.mxu0 %v651
        %747 = vmatprep.subr.mxu0 0.0
        %748 = vmatpush1.msra.mxu0 0.0
        %749 = vmatprep.subr.mxu0 0.0
        %750 = vmatpush1.msra.mxu0 0.0
        %751 = vmatprep.subr.mxu0 0.0
        %752 = vmatpush1.msra.mxu0 0.0
        %753 = vmatprep.subr.mxu0 0.0
        %754 = vmatpush1.msra.mxu0 0.0
        %755 = vmatprep.subr.mxu0 0.0
        %756 = vmatpush1.msra.mxu0 0.0
        %757 = vmatprep.subr.mxu0 0.0
        %758 = vmatpush1.msra.mxu0 0.0
        %759 = vmatprep.subr.mxu0 0.0
        %760 = vmatpush1.msra.mxu0 0.0
        %761 = vmatprep.subr.mxu0 0.0
        %762 = vmatpush1.msra.mxu0 0.0
        %763 = vmatprep.subr.mxu0 0.0
        %764 = vmatpush1.msra.mxu0 0.0
        %765 = vmatprep.subr.mxu0 0.0
        %766 = vmatpush1.msra.mxu0 0.0
        %767 = vmatprep.subr.mxu0 0.0
        %768 = vmatpush1.msra.mxu0 0.0
        %769 = vmatprep.subr.mxu0 0.0
        %770 = vmatpush1.msra.mxu0 0.0
        %771 = vmatprep.subr.mxu0 0.0
        %772 = vmatpush1.msra.mxu0 0.0
        %773 = vmatprep.subr.mxu0 0.0
        %774 = vmatpush1.msra.mxu0 0.0
        %775 = vmatprep.subr.mxu0 0.0
        %776 = vmatpush1.msra.mxu0 0.0
        %777 = vmatprep.subr.mxu0 0.0
        %778 = vmatpush1.msra.mxu0 0.0
        %779 = vmatprep.subr.mxu0 0.0
        %780 = vmatpush1.msra.mxu0 0.0
        %781 = vmatprep.subr.mxu0 0.0
        %782 = vmatpush1.msra.mxu0 0.0
        %783 = vmatprep.subr.mxu0 0.0
        %784 = vmatpush1.msra.mxu0 0.0
        %785 = vmatprep.subr.mxu0 0.0
        %786 = vmatpush1.msra.mxu0 0.0
        %787 = vmatprep.subr.mxu0 0.0
        %788 = vmatpush1.msra.mxu0 0.0
        %789 = vmatprep.subr.mxu0 0.0
        %790 = vmatpush1.msra.mxu0 0.0
        %791 = vmatprep.subr.mxu0 0.0
        %792 = vmatpush1.msra.mxu0 0.0
        %793 = vmatprep.subr.mxu0 0.0
        %794 = vmatpush1.msra.mxu0 0.0
        %795 = vmatprep.subr.mxu0 0.0
        %796 = vmatpush1.msra.mxu0 0.0
        %797 = vmatprep.subr.mxu0 0.0
        %798 = vmatpush1.msra.mxu0 0.0
        %799 = vmatprep.subr.mxu0 0.0
        %800 = vmatpush1.msra.mxu0 0.0
        %801 = vmatprep.subr.mxu0 0.0
        %802 = vmatpush1.msra.mxu0 0.0
        %803 = vmatprep.mubr.f32.mxu0 0.0
        %804 = vmatmul.mubr.f32.gmra.mrb[0].mxu0 %v638
        %v805 = vpop.f32.mrb[0].mxu0
        %v806 = vadd.f32 %v629, %v805
        %v807 = vpop.f32.mrb[0].mxu0
        %v808 = vadd.f32 %v629, %v807
        %809 = vmatprep.mubr.f32.mxu0 0.0
        %810 = vmatmul.mubr.f32.gmra.mrb[0].mxu0 %v641
        %v811 = vpop.f32.mrb[0].mxu0
        %v812 = vadd.f32 %v634, %v811
        %v813 = vpop.f32.mrb[0].mxu0
        %v814 = vadd.f32 %v634, %v813
        %815 = vdwg.mxu0
        %816 = vmatprep.subr.mxu0 %v605
        %817 = vmatpush1.msra.mxu0 %v604
        %818 = vmatprep.subr.mxu0 %v611
        %819 = vmatpush1.msra.mxu0 %v610
        %820 = vmatprep.subr.mxu0 %v617
        %821 = vmatpush1.msra.mxu0 %v616
        %822 = vmatprep.subr.mxu0 %v660
        %823 = vmatpush1.msra.mxu0 %v657
        %824 = vmatprep.subr.mxu0 0.0
        %825 = vmatpush1.msra.mxu0 0.0
        %826 = vmatprep.subr.mxu0 0.0
        %827 = vmatpush1.msra.mxu0 0.0
        %828 = vmatprep.subr.mxu0 0.0
        %829 = vmatpush1.msra.mxu0 0.0
        %830 = vmatprep.subr.mxu0 0.0
        %831 = vmatpush1.msra.mxu0 0.0
        %832 = vmatprep.subr.mxu0 0.0
        %833 = vmatpush1.msra.mxu0 0.0
        %834 = vmatprep.subr.mxu0 0.0
        %835 = vmatpush1.msra.mxu0 0.0
        %836 = vmatprep.subr.mxu0 0.0
        %837 = vmatpush1.msra.mxu0 0.0
        %838 = vmatprep.subr.mxu0 0.0
        %839 = vmatpush1.msra.mxu0 0.0
        %840 = vmatprep.subr.mxu0 0.0
        %841 = vmatpush1.msra.mxu0 0.0
        %842 = vmatprep.subr.mxu0 0.0
        %843 = vmatpush1.msra.mxu0 0.0
        %844 = vmatprep.subr.mxu0 0.0
        %845 = vmatpush1.msra.mxu0 0.0
        %846 = vmatprep.subr.mxu0 0.0
        %847 = vmatpush1.msra.mxu0 0.0
        %848 = vmatprep.subr.mxu0 0.0
        %849 = vmatpush1.msra.mxu0 0.0
        %850 = vmatprep.subr.mxu0 0.0
        %851 = vmatpush1.msra.mxu0 0.0
        %852 = vmatprep.subr.mxu0 0.0
        %853 = vmatpush1.msra.mxu0 0.0
        %854 = vmatprep.subr.mxu0 0.0
        %855 = vmatpush1.msra.mxu0 0.0
        %856 = vmatprep.subr.mxu0 0.0
        %857 = vmatpush1.msra.mxu0 0.0
        %858 = vmatprep.subr.mxu0 0.0
        %859 = vmatpush1.msra.mxu0 0.0
        %860 = vmatprep.subr.mxu0 0.0
        %861 = vmatpush1.msra.mxu0 0.0
        %862 = vmatprep.subr.mxu0 0.0
        %863 = vmatpush1.msra.mxu0 0.0
        %864 = vmatprep.subr.mxu0 0.0
        %865 = vmatpush1.msra.mxu0 0.0
        %866 = vmatprep.subr.mxu0 0.0
        %867 = vmatpush1.msra.mxu0 0.0
        %868 = vmatprep.subr.mxu0 0.0
        %869 = vmatpush1.msra.mxu0 0.0
        %870 = vmatprep.subr.mxu0 0.0
        %871 = vmatpush1.msra.mxu0 0.0
        %872 = vmatprep.subr.mxu0 0.0
        %873 = vmatpush1.msra.mxu0 0.0
        %874 = vmatprep.subr.mxu0 0.0
        %875 = vmatpush1.msra.mxu0 0.0
        %876 = vmatprep.subr.mxu0 0.0
        %877 = vmatpush1.msra.mxu0 0.0
        %878 = vmatprep.subr.mxu0 0.0
        %879 = vmatpush1.msra.mxu0 0.0
        %880 = vmatprep.mubr.f32.mxu0 0.0
        %881 = vmatmul.mubr.f32.gmra.mrb[0].mxu0 %v638
        %v882 = vpop.f32.mrb[0].mxu0
        %v883 = vadd.f32 %v629, %v882
        %v884 = vpop.f32.mrb[0].mxu0
        %v885 = vadd.f32 %v629, %v884
        %886 = vmatprep.mubr.f32.mxu0 0.0
        %887 = vmatmul.mubr.f32.gmra.mrb[0].mxu0 %v641
        %v888 = vpop.f32.mrb[0].mxu0
        %v889 = vadd.f32 %v634, %v888
        %v890 = vpop.f32.mrb[0].mxu0
        %v891 = vadd.f32 %v634, %v890
        %892 = vdwg.mxu0
        %v893 = vmax.f32 %v729, 0.0
        %v894 = vmax.f32 %v731, 0.0
        %v895 = vmax.f32 %v806, 0.0
        %v896 = vmax.f32 %v808, 0.0
        %v897 = vmax.f32 %v883, 0.0
        %v898 = vmax.f32 %v885, 0.0
        %v899 = vmax.f32 %v735, 0.0
        %v900 = vmax.f32 %v737, 0.0
        %v901 = vmax.f32 %v812, 0.0
        %v902 = vmax.f32 %v814, 0.0
        %v903 = vmax.f32 %v889, 0.0
        %v904 = vmax.f32 %v891, 0.0
        %905 = vst [vmem:[#allocation3] sm:$0xff] %v893
        %906 = vst [vmem:[#allocation3 + $0x8] sm:$0xff] %v894
        %907 = vst [vmem:[#allocation3 + $0x10] sm:$0xff] %v895
        %908 = vst [vmem:[#allocation3 + $0x18] sm:$0xff] %v896
        %909 = vst [vmem:[#allocation3 + $0x20] sm:$0xff] %v897
        %vm910 = vcmask 228352
        %911 = vst.msk [vmem:[#allocation3 + $0x28] sm:$0xff] %vm910, %v898
        %912 = vst [vmem:[#allocation3 + $0x30] sm:$0xff] %v899
        %913 = vst [vmem:[#allocation3 + $0x38] sm:$0xff] %v900
        %914 = vst [vmem:[#allocation3 + $0x40] sm:$0xff] %v901
        %915 = vst [vmem:[#allocation3 + $0x48] sm:$0xff] %v902
        %916 = vst [vmem:[#allocation3 + $0x50] sm:$0xff] %v903
        %917 = vst.msk [vmem:[#allocation3 + $0x58] sm:$0xff] %vm910, %v904
        %v918 = vld [vmem:[#allocation3] sm:$0xff]
        %v919 = vld [vmem:[#allocation3 + $0x8] sm:$0xff]
        %v920 = vld [vmem:[#allocation3 + $0x10] sm:$0xff]
        %v921 = vld [vmem:[#allocation3 + $0x18] sm:$0xff]
        %v922 = vld [vmem:[#allocation3 + $0x20] sm:$0xff]
        %v923 = vld [vmem:[#allocation3 + $0x30] sm:$0xff]
        %v924 = vld [vmem:[#allocation3 + $0x38] sm:$0xff]
        %v925 = vld [vmem:[#allocation3 + $0x40] sm:$0xff]
        %v926 = vld [vmem:[#allocation3 + $0x48] sm:$0xff]
        %v927 = vld [vmem:[#allocation3 + $0x50] sm:$0xff]
        %938 = vrot.lane.b32.xlu0 %v918, 127
        %v939 = vpop.permute.xlu0 %938
        %940 = vrot.lane.b32.xlu0 %v919, 127
        %v941 = vpop.permute.xlu0 %940
        %942 = vrot.lane.b32.xlu0 %v920, 127
        %v943 = vpop.permute.xlu0 %942
        %944 = vrot.lane.b32.xlu0 %v921, 127
        %v945 = vpop.permute.xlu0 %944
        %946 = vrot.lane.b32.xlu0 %v922, 127
        %v947 = vpop.permute.xlu0 %946
        %948 = vrot.lane.b32.xlu0 %v923, 127
        %v949 = vpop.permute.xlu0 %948
        %950 = vrot.lane.b32.xlu0 %v924, 127
        %v951 = vpop.permute.xlu0 %950
        %952 = vrot.lane.b32.xlu0 %v925, 127
        %v953 = vpop.permute.xlu0 %952
        %954 = vrot.lane.b32.xlu0 %v926, 127
        %v955 = vpop.permute.xlu0 %954
        %956 = vrot.lane.b32.xlu0 %v927, 127
        %v957 = vpop.permute.xlu0 %956
        %v958 = vsel %vm339, %v939, %v941
        %v959 = vsel %vm339, %v941, %v943
        %v960 = vsel %vm339, %v943, %v945
        %v961 = vsel %vm339, %v945, %v947
        %v962 = vsel %vm339, %v949, %v951
        %v963 = vsel %vm339, %v951, %v953
        %v964 = vsel %vm339, %v953, %v955
        %v965 = vsel %vm339, %v955, %v957
        %v976 = vmax.f32 %v918, %v958
        %v977 = vmax.f32 %v919, %v959
        %v978 = vmax.f32 %v920, %v960
        %v979 = vmax.f32 %v921, %v961
        %v980 = vmax.f32 %v922, %v947
        %v981 = vmax.f32 %v923, %v962
        %v982 = vmax.f32 %v924, %v963
        %v983 = vmax.f32 %v925, %v964
        %v984 = vmax.f32 %v926, %v965
        %v985 = vmax.f32 %v927, %v957
        %v986 = vld [vmem:[#allocation3 + $0x28] sm:$0xff]
        %v987 = vld [vmem:[#allocation3 + $0x58] sm:$0xff]
        %990 = vrot.lane.b32.xlu0 %v986, 127
        %v991 = vpop.permute.xlu0 %990
        %992 = vrot.lane.b32.xlu0 %v987, 127
        %v993 = vpop.permute.xlu0 %992
        %v994 = vsel %vm339, %v947, %v991
        %v995 = vsel %vm339, %v957, %v993
        %v1000 = vmax.f32 %v922, %v994
        %v1001 = vmax.f32 %v986, %v991
        %v1002 = vmax.f32 %v927, %v995
        %v1003 = vmax.f32 %v987, %v993
        %1016 = vrot.lane.b32.xlu0 %v976, 100
        %v1017 = vpop.permute.xlu0 %1016
        %1018 = vrot.lane.b32.xlu0 %v977, 100
        %v1019 = vpop.permute.xlu0 %1018
        %1020 = vrot.lane.b32.xlu0 %v978, 100
        %v1021 = vpop.permute.xlu0 %1020
        %1022 = vrot.lane.b32.xlu0 %v979, 100
        %v1023 = vpop.permute.xlu0 %1022
        %1024 = vrot.lane.b32.xlu0 %v1000, 100
        %v1025 = vpop.permute.xlu0 %1024
        %1026 = vrot.lane.b32.xlu0 %v1001, 100
        %v1027 = vpop.permute.xlu0 %1026
        %1028 = vrot.lane.b32.xlu0 %v981, 100
        %v1029 = vpop.permute.xlu0 %1028
        %1030 = vrot.lane.b32.xlu0 %v982, 100
        %v1031 = vpop.permute.xlu0 %1030
        %1032 = vrot.lane.b32.xlu0 %v983, 100
        %v1033 = vpop.permute.xlu0 %1032
        %1034 = vrot.lane.b32.xlu0 %v984, 100
        %v1035 = vpop.permute.xlu0 %1034
        %1036 = vrot.lane.b32.xlu0 %v1002, 100
        %v1037 = vpop.permute.xlu0 %1036
        %1038 = vrot.lane.b32.xlu0 %v1003, 100
        %v1039 = vpop.permute.xlu0 %1038
        %v1040 = vsel %vm383, %v1017, %v1019
        %v1041 = vsel %vm383, %v1019, %v1021
        %v1042 = vsel %vm383, %v1021, %v1023
        %v1043 = vsel %vm383, %v1023, %v1025
        %v1044 = vsel %vm383, %v1025, %v1027
        %v1045 = vsel %vm383, %v1029, %v1031
        %v1046 = vsel %vm383, %v1031, %v1033
        %v1047 = vsel %vm383, %v1033, %v1035
        %v1048 = vsel %vm383, %v1035, %v1037
        %v1049 = vsel %vm383, %v1037, %v1039
        %v1060 = vmax.f32 %v976, %v1040
        %v1061 = vmax.f32 %v977, %v1041
        %v1062 = vmax.f32 %v978, %v1042
        %v1063 = vmax.f32 %v979, %v1043
        %v1064 = vmax.f32 %v980, %v1044
        %v1065 = vmax.f32 %v981, %v1045
        %v1066 = vmax.f32 %v982, %v1046
        %v1067 = vmax.f32 %v983, %v1047
        %v1068 = vmax.f32 %v984, %v1048
        %v1069 = vmax.f32 %v985, %v1049
        %v1070 = vld [vmem:[%s7] sm:$0xff]
        %v1071 = vld [vmem:[%s7 + $0x8] sm:$0xff]
        %v1072 = vld [vmem:[%s7 + $0x10] sm:$0xff]
        %v1073 = vld [vmem:[%s7 + $0x18] sm:$0xff]
        %v1074 = vld [vmem:[%s7 + $0x20] sm:$0xff]
        %v1075 = vld [vmem:[%s7 + $0x28] sm:$0xff]
        %v1076 = vld [vmem:[%s7 + $0x30] sm:$0xff]
        %v1077 = vld [vmem:[%s7 + $0x38] sm:$0xff]
        %v1078 = vld [vmem:[%s7 + $0x40] sm:$0xff]
        %v1079 = vld [vmem:[%s7 + $0x48] sm:$0xff]
        %v1080 = vld [vmem:[%s7 + $0x50] sm:$0xff]
        %v1081 = vld [vmem:[%s7 + $0x58] sm:$0xff]
        %v1082 = vld [vmem:[%s7 + $0x60] sm:$0xff]
        %v1083 = vld [vmem:[%s7 + $0x68] sm:$0xff]
        %v1084 = vld [vmem:[%s7 + $0x70] sm:$0xff]
        %v1085 = vld [vmem:[%s7 + $0x78] sm:$0xff]
        %v1086 = vld [vmem:[%s7 + $0x80] sm:$0xff]
        %v1087 = vld [vmem:[%s7 + $0x88] sm:$0xff]
        %v1088 = vld [vmem:[%s7 + $0x90] sm:$0xff]
        %v1089 = vld [vmem:[%s7 + $0x98] sm:$0xff]
        %v1090 = vld [vmem:[%s7 + $0xa0] sm:$0xff]
        %v1091 = vld [vmem:[%s7 + $0xa8] sm:$0xff]
        %v1092 = vld [vmem:[%s7 + $0xb0] sm:$0xff]
        %v1093 = vld [vmem:[%s7 + $0xb8] sm:$0xff]
        %v1094 = vld [vmem:[%s7 + $0xc0] sm:$0xff]
        %v1095 = vld [vmem:[%s7 + $0xc8] sm:$0xff]
        %v1096 = vld [vmem:[%s7 + $0xd0] sm:$0xff]
        %v1097 = vld [vmem:[%s7 + $0xd8] sm:$0xff]
        %v1098 = vld [vmem:[%s7 + $0xe0] sm:$0xff]
        %v1099 = vld [vmem:[%s7 + $0xe8] sm:$0xff]
        %v1100 = vld [vmem:[%s7 + $0xf0] sm:$0xff]
        %v1101 = vld [vmem:[%s7 + $0xf8] sm:$0xff]
        %v1102 = vld [vmem:[%s7 + $0x100] sm:$0xff]
        %v1103 = vld [vmem:[%s7 + $0x108] sm:$0xff]
        %v1104 = vld [vmem:[%s7 + $0x110] sm:$0xff]
        %v1105 = vld [vmem:[%s7 + $0x118] sm:$0xff]
        %v1106 = vld [vmem:[%s7 + $0x120] sm:$0xff]
        %v1107 = vld [vmem:[%s7 + $0x128] sm:$0xff]
        %v1108 = vld [vmem:[%s7 + $0x130] sm:$0xff]
        %v1109 = vld [vmem:[%s7 + $0x138] sm:$0xff]
        %v1110 = vld [vmem:[%s7 + $0x140] sm:$0xff]
        %v1111 = vld [vmem:[%s7 + $0x148] sm:$0xff]
        %v1112 = vld [vmem:[%s7 + $0x150] sm:$0xff]
        %v1113 = vld [vmem:[%s7 + $0x158] sm:$0xff]
        %v1114 = vld [vmem:[%s7 + $0x160] sm:$0xff]
        %v1115 = vld [vmem:[%s7 + $0x168] sm:$0xff]
        %v1116 = vld [vmem:[%s7 + $0x170] sm:$0xff]
        %v1117 = vld [vmem:[%s7 + $0x178] sm:$0xff]
        %v1118 = vld [vmem:[%s7 + $0x180] sm:$0xff]
        %v1119 = vld [vmem:[%s7 + $0x188] sm:$0xff]
        %v1120 = vld [vmem:[%s7 + $0x190] sm:$0xff]
        %v1121 = vld [vmem:[%s7 + $0x198] sm:$0xff]
        %v1122 = vld [vmem:[%s7 + $0x1a0] sm:$0xff]
        %v1123 = vld [vmem:[%s7 + $0x1a8] sm:$0xff]
        %v1124 = vld [vmem:[%s7 + $0x1b0] sm:$0xff]
        %v1125 = vld [vmem:[%s7 + $0x1b8] sm:$0xff]
        %v1126 = vld [vmem:[%s7 + $0x1c0] sm:$0xff]
        %v1127 = vld [vmem:[%s7 + $0x1c8] sm:$0xff]
        %v1128 = vld [vmem:[%s7 + $0x1d0] sm:$0xff]
        %v1129 = vld [vmem:[%s7 + $0x1d8] sm:$0xff]
        %v1130 = vld [vmem:[%s7 + $0x1e0] sm:$0xff]
        %v1131 = vld [vmem:[%s7 + $0x1e8] sm:$0xff]
        %v1132 = vld [vmem:[%s7 + $0x1f0] sm:$0xff]
        %v1133 = vld [vmem:[%s7 + $0x1f8] sm:$0xff]
        %v1134 = vld [vmem:[%s7 + $0x200] sm:$0xff]
        %v1135 = vld [vmem:[%s7 + $0x208] sm:$0xff]
        %v1136 = vld [vmem:[%s7 + $0x210] sm:$0xff]
        %v1137 = vld [vmem:[%s7 + $0x218] sm:$0xff]
        %v1138 = vld [vmem:[%s7 + $0x220] sm:$0xff]
        %v1139 = vld [vmem:[%s7 + $0x228] sm:$0xff]
        %v1140 = vld [vmem:[%s7 + $0x230] sm:$0xff]
        %v1141 = vld [vmem:[%s7 + $0x238] sm:$0xff]
        %v1142 = vld [vmem:[%s7 + $0x240] sm:$0xff]
        %v1143 = vld [vmem:[%s7 + $0x248] sm:$0xff]
        %v1144 = vld [vmem:[%s7 + $0x250] sm:$0xff]
        %v1145 = vld [vmem:[%s7 + $0x258] sm:$0xff]
        %v1146 = vld [vmem:[%s7 + $0x260] sm:$0xff]
        %v1147 = vld [vmem:[%s7 + $0x268] sm:$0xff]
        %v1148 = vld [vmem:[%s7 + $0x270] sm:$0xff]
        %v1149 = vld [vmem:[%s7 + $0x278] sm:$0xff]
        %v1150 = vld [vmem:[%s7 + $0x280] sm:$0xff]
        %v1151 = vld [vmem:[%s7 + $0x288] sm:$0xff]
        %v1152 = vld [vmem:[%s7 + $0x290] sm:$0xff]
        %v1153 = vld [vmem:[%s7 + $0x298] sm:$0xff]
        %v1154 = vld [vmem:[%s7 + $0x2a0] sm:$0xff]
        %v1155 = vld [vmem:[%s7 + $0x2a8] sm:$0xff]
        %v1156 = vld [vmem:[%s7 + $0x2b0] sm:$0xff]
        %v1157 = vld [vmem:[%s7 + $0x2b8] sm:$0xff]
        %v1158 = vld [vmem:[%s7 + $0x2c0] sm:$0xff]
        %v1159 = vld [vmem:[%s7 + $0x2c8] sm:$0xff]
        %v1160 = vld [vmem:[%s7 + $0x2d0] sm:$0xff]
        %v1161 = vld [vmem:[%s7 + $0x2d8] sm:$0xff]
        %v1162 = vld [vmem:[%s7 + $0x2e0] sm:$0xff]
        %v1163 = vld [vmem:[%s7 + $0x2e8] sm:$0xff]
        %v1164 = vld [vmem:[%s7 + $0x2f0] sm:$0xff]
        %v1165 = vld [vmem:[%s7 + $0x2f8] sm:$0xff]
        %v1166 = vld [vmem:[%s7 + $0x300] sm:$0xff]
        %v1167 = vld [vmem:[%s7 + $0x308] sm:$0xff]
        %v1168 = vld [vmem:[%s7 + $0x310] sm:$0xff]
        %v1169 = vld [vmem:[%s7 + $0x318] sm:$0xff]
        %v1170 = vld [vmem:[%s7 + $0x320] sm:$0xff]
        %v1171 = vld [vmem:[%s7 + $0x328] sm:$0xff]
        %v1172 = vld [vmem:[%s7 + $0x330] sm:$0xff]
        %v1173 = vld [vmem:[%s7 + $0x338] sm:$0xff]
        %v1174 = vld [vmem:[%s7 + $0x340] sm:$0xff]
        %v1175 = vld [vmem:[%s7 + $0x348] sm:$0xff]
        %v1176 = vld [vmem:[%s7 + $0x350] sm:$0xff]
        %v1177 = vld [vmem:[%s7 + $0x358] sm:$0xff]
        %v1178 = vld [vmem:[%s7 + $0x360] sm:$0xff]
        %v1179 = vld [vmem:[%s7 + $0x368] sm:$0xff]
        %v1180 = vld [vmem:[%s7 + $0x370] sm:$0xff]
        %v1181 = vld [vmem:[%s7 + $0x378] sm:$0xff]
        %v1182 = vld [vmem:[%s7 + $0x380] sm:$0xff]
        %v1183 = vld [vmem:[%s7 + $0x388] sm:$0xff]
        %v1184 = vld [vmem:[%s7 + $0x390] sm:$0xff]
        %v1185 = vld [vmem:[%s7 + $0x398] sm:$0xff]
        %v1186 = vld [vmem:[%s7 + $0x3a0] sm:$0xff]
        %v1187 = vld [vmem:[%s7 + $0x3a8] sm:$0xff]
        %v1188 = vld [vmem:[%s7 + $0x3b0] sm:$0xff]
        %v1189 = vld [vmem:[%s7 + $0x3b8] sm:$0xff]
        %v1190 = vld [vmem:[%s7 + $0x3c0] sm:$0xff]
        %v1191 = vld [vmem:[%s7 + $0x3c8] sm:$0xff]
        %v1192 = vld [vmem:[%s7 + $0x3d0] sm:$0xff]
        %v1193 = vld [vmem:[%s7 + $0x3d8] sm:$0xff]
        %v1194 = vld [vmem:[%s7 + $0x3e0] sm:$0xff]
        %v1195 = vld [vmem:[%s7 + $0x3e8] sm:$0xff]
        %v1196 = vld [vmem:[%s7 + $0x3f0] sm:$0xff]
        %v1197 = vld [vmem:[%s7 + $0x3f8] sm:$0xff]
        %v1198 = vld [vmem:[%s7 + $0x400] sm:$0xff]
        %v1199 = vld [vmem:[%s7 + $0x408] sm:$0xff]
        %v1200 = vld [vmem:[%s7 + $0x410] sm:$0xff]
        %v1201 = vld [vmem:[%s7 + $0x418] sm:$0xff]
        %v1202 = vld [vmem:[%s7 + $0x420] sm:$0xff]
        %v1203 = vld [vmem:[%s7 + $0x428] sm:$0xff]
        %v1204 = vld [vmem:[%s7 + $0x430] sm:$0xff]
        %v1205 = vld [vmem:[%s7 + $0x438] sm:$0xff]
        %v1206 = vld [vmem:[%s7 + $0x440] sm:$0xff]
        %v1207 = vld [vmem:[%s7 + $0x448] sm:$0xff]
        %v1208 = vld [vmem:[%s7 + $0x450] sm:$0xff]
        %v1209 = vld [vmem:[%s7 + $0x458] sm:$0xff]
        %v1210 = vld [vmem:[%s7 + $0x460] sm:$0xff]
        %v1211 = vld [vmem:[%s7 + $0x468] sm:$0xff]
        %v1212 = vld [vmem:[%s7 + $0x470] sm:$0xff]
        %v1213 = vld [vmem:[%s7 + $0x478] sm:$0xff]
        %v1214 = vld [vmem:[%s7 + $0x480] sm:$0xff]
        %v1215 = vld [vmem:[%s7 + $0x488] sm:$0xff]
        %v1216 = vld [vmem:[%s7 + $0x490] sm:$0xff]
        %v1217 = vld [vmem:[%s7 + $0x498] sm:$0xff]
        %v1218 = vld [vmem:[%s7 + $0x4a0] sm:$0xff]
        %v1219 = vld [vmem:[%s7 + $0x4a8] sm:$0xff]
        %v1220 = vld [vmem:[%s7 + $0x4b0] sm:$0xff]
        %v1221 = vld [vmem:[%s7 + $0x4b8] sm:$0xff]
        %v1222 = vld [vmem:[%s7 + $0x4c0] sm:$0xff]
        %v1223 = vld [vmem:[%s7 + $0x4c8] sm:$0xff]
        %v1224 = vld [vmem:[%s7 + $0x4d0] sm:$0xff]
        %v1225 = vld [vmem:[%s7 + $0x4d8] sm:$0xff]
        %v1226 = vld [vmem:[%s7 + $0x4e0] sm:$0xff]
        %v1227 = vld [vmem:[%s7 + $0x4e8] sm:$0xff]
        %v1228 = vld [vmem:[%s7 + $0x4f0] sm:$0x7f]
        %v1229 = vld [vmem:[%s7 + $0x4f8] sm:$0x7f]
        %v1231 = vsel %vm339, %v1064, 0
        %v1234 = vsel %vm339, %v1069, 0
        %vm1236 = vcmask 1046528
        %v1238 = vsel %vm1236, %v1228, 0
        %v1241 = vsel %vm1236, %v1229, 0
        %1243 = vmatprep.subr.mxu0 %v1071
        %1244 = vmatpush1.msra.mxu0 %v1070
        %1245 = vmatprep.subr.mxu0 %v1073
        %1246 = vmatpush1.msra.mxu0 %v1072
        %1247 = vmatprep.subr.mxu0 %v1075
        %1248 = vmatpush1.msra.mxu0 %v1074
        %1249 = vmatprep.subr.mxu0 %v1077
        %1250 = vmatpush1.msra.mxu0 %v1076
        %1251 = vmatprep.subr.mxu0 %v1079
        %1252 = vmatpush1.msra.mxu0 %v1078
        %1253 = vmatprep.subr.mxu0 %v1081
        %1254 = vmatpush1.msra.mxu0 %v1080
        %1255 = vmatprep.subr.mxu0 %v1083
        %1256 = vmatpush1.msra.mxu0 %v1082
        %1257 = vmatprep.subr.mxu0 %v1085
        %1258 = vmatpush1.msra.mxu0 %v1084
        %1259 = vmatprep.subr.mxu0 %v1087
        %1260 = vmatpush1.msra.mxu0 %v1086
        %1261 = vmatprep.subr.mxu0 %v1089
        %1262 = vmatpush1.msra.mxu0 %v1088
        %1263 = vmatprep.subr.mxu0 %v1091
        %1264 = vmatpush1.msra.mxu0 %v1090
        %1265 = vmatprep.subr.mxu0 %v1093
        %1266 = vmatpush1.msra.mxu0 %v1092
        %1267 = vmatprep.subr.mxu0 %v1095
        %1268 = vmatpush1.msra.mxu0 %v1094
        %1269 = vmatprep.subr.mxu0 %v1097
        %1270 = vmatpush1.msra.mxu0 %v1096
        %1271 = vmatprep.subr.mxu0 %v1099
        %1272 = vmatpush1.msra.mxu0 %v1098
        %1273 = vmatprep.subr.mxu0 %v1101
        %1274 = vmatpush1.msra.mxu0 %v1100
        %1275 = vmatprep.subr.mxu0 %v1103
        %1276 = vmatpush1.msra.mxu0 %v1102
        %1277 = vmatprep.subr.mxu0 %v1105
        %1278 = vmatpush1.msra.mxu0 %v1104
        %1279 = vmatprep.subr.mxu0 %v1107
        %1280 = vmatpush1.msra.mxu0 %v1106
        %1281 = vmatprep.subr.mxu0 %v1109
        %1282 = vmatpush1.msra.mxu0 %v1108
        %1283 = vmatprep.subr.mxu0 %v1111
        %1284 = vmatpush1.msra.mxu0 %v1110
        %1285 = vmatprep.subr.mxu0 %v1113
        %1286 = vmatpush1.msra.mxu0 %v1112
        %1287 = vmatprep.subr.mxu0 %v1115
        %1288 = vmatpush1.msra.mxu0 %v1114
        %1289 = vmatprep.subr.mxu0 %v1117
        %1290 = vmatpush1.msra.mxu0 %v1116
        %1291 = vmatprep.subr.mxu0 %v1119
        %1292 = vmatpush1.msra.mxu0 %v1118
        %1293 = vmatprep.subr.mxu0 %v1121
        %1294 = vmatpush1.msra.mxu0 %v1120
        %1295 = vmatprep.subr.mxu0 %v1123
        %1296 = vmatpush1.msra.mxu0 %v1122
        %1297 = vmatprep.subr.mxu0 %v1125
        %1298 = vmatpush1.msra.mxu0 %v1124
        %1299 = vmatprep.subr.mxu0 %v1127
        %1300 = vmatpush1.msra.mxu0 %v1126
        %1301 = vmatprep.subr.mxu0 %v1129
        %1302 = vmatpush1.msra.mxu0 %v1128
        %1303 = vmatprep.subr.mxu0 %v1131
        %1304 = vmatpush1.msra.mxu0 %v1130
        %1305 = vmatprep.subr.mxu0 %v1133
        %1306 = vmatpush1.msra.mxu0 %v1132
        %1307 = vmatprep.mubr.f32.mxu0 %v1061
        %1308 = vmatmul.mubr.f32.gmra.mrb[0].mxu0 %v1060
        %v1309 = vpop.f32.mrb[0].mxu0
        %v1310 = vadd.f32 0.0, %v1309
        %v1311 = vpop.f32.mrb[0].mxu0
        %v1312 = vadd.f32 0.0, %v1311
        %1313 = vmatprep.mubr.f32.mxu0 %v1066
        %1314 = vmatmul.mubr.f32.gmra.mrb[0].mxu0 %v1065
        %v1315 = vpop.f32.mrb[0].mxu0
        %v1316 = vadd.f32 0.0, %v1315
        %v1317 = vpop.f32.mrb[0].mxu0
        %v1318 = vadd.f32 0.0, %v1317
        %1319 = vdwg.mxu0
        %1320 = vmatprep.subr.mxu0 %v1135
        %1321 = vmatpush1.msra.mxu0 %v1134
        %1322 = vmatprep.subr.mxu0 %v1137
        %1323 = vmatpush1.msra.mxu0 %v1136
        %1324 = vmatprep.subr.mxu0 %v1139
        %1325 = vmatpush1.msra.mxu0 %v1138
        %1326 = vmatprep.subr.mxu0 %v1141
        %1327 = vmatpush1.msra.mxu0 %v1140
        %1328 = vmatprep.subr.mxu0 %v1143
        %1329 = vmatpush1.msra.mxu0 %v1142
        %1330 = vmatprep.subr.mxu0 %v1145
        %1331 = vmatpush1.msra.mxu0 %v1144
        %1332 = vmatprep.subr.mxu0 %v1147
        %1333 = vmatpush1.msra.mxu0 %v1146
        %1334 = vmatprep.subr.mxu0 %v1149
        %1335 = vmatpush1.msra.mxu0 %v1148
        %1336 = vmatprep.subr.mxu0 %v1151
        %1337 = vmatpush1.msra.mxu0 %v1150
        %1338 = vmatprep.subr.mxu0 %v1153
        %1339 = vmatpush1.msra.mxu0 %v1152
        %1340 = vmatprep.subr.mxu0 %v1155
        %1341 = vmatpush1.msra.mxu0 %v1154
        %1342 = vmatprep.subr.mxu0 %v1157
        %1343 = vmatpush1.msra.mxu0 %v1156
        %1344 = vmatprep.subr.mxu0 %v1159
        %1345 = vmatpush1.msra.mxu0 %v1158
        %1346 = vmatprep.subr.mxu0 %v1161
        %1347 = vmatpush1.msra.mxu0 %v1160
        %1348 = vmatprep.subr.mxu0 %v1163
        %1349 = vmatpush1.msra.mxu0 %v1162
        %1350 = vmatprep.subr.mxu0 %v1165
        %1351 = vmatpush1.msra.mxu0 %v1164
        %1352 = vmatprep.subr.mxu0 %v1167
        %1353 = vmatpush1.msra.mxu0 %v1166
        %1354 = vmatprep.subr.mxu0 %v1169
        %1355 = vmatpush1.msra.mxu0 %v1168
        %1356 = vmatprep.subr.mxu0 %v1171
        %1357 = vmatpush1.msra.mxu0 %v1170
        %1358 = vmatprep.subr.mxu0 %v1173
        %1359 = vmatpush1.msra.mxu0 %v1172
        %1360 = vmatprep.subr.mxu0 %v1175
        %1361 = vmatpush1.msra.mxu0 %v1174
        %1362 = vmatprep.subr.mxu0 %v1177
        %1363 = vmatpush1.msra.mxu0 %v1176
        %1364 = vmatprep.subr.mxu0 %v1179
        %1365 = vmatpush1.msra.mxu0 %v1178
        %1366 = vmatprep.subr.mxu0 %v1181
        %1367 = vmatpush1.msra.mxu0 %v1180
        %1368 = vmatprep.subr.mxu0 %v1183
        %1369 = vmatpush1.msra.mxu0 %v1182
        %1370 = vmatprep.subr.mxu0 %v1185
        %1371 = vmatpush1.msra.mxu0 %v1184
        %1372 = vmatprep.subr.mxu0 %v1187
        %1373 = vmatpush1.msra.mxu0 %v1186
        %1374 = vmatprep.subr.mxu0 %v1189
        %1375 = vmatpush1.msra.mxu0 %v1188
        %1376 = vmatprep.subr.mxu0 %v1191
        %1377 = vmatpush1.msra.mxu0 %v1190
        %1378 = vmatprep.subr.mxu0 %v1193
        %1379 = vmatpush1.msra.mxu0 %v1192
        %1380 = vmatprep.subr.mxu0 %v1195
        %1381 = vmatpush1.msra.mxu0 %v1194
        %1382 = vmatprep.subr.mxu0 %v1197
        %1383 = vmatpush1.msra.mxu0 %v1196
        %1384 = vmatprep.mubr.f32.mxu0 %v1063
        %1385 = vmatmul.mubr.f32.gmra.mrb[0].mxu0 %v1062
        %v1386 = vpop.f32.mrb[0].mxu0
        %v1387 = vadd.f32 %v1310, %v1386
        %v1388 = vpop.f32.mrb[0].mxu0
        %v1389 = vadd.f32 %v1312, %v1388
        %1390 = vmatprep.mubr.f32.mxu0 %v1068
        %1391 = vmatmul.mubr.f32.gmra.mrb[0].mxu0 %v1067
        %v1392 = vpop.f32.mrb[0].mxu0
        %v1393 = vadd.f32 %v1316, %v1392
        %v1394 = vpop.f32.mrb[0].mxu0
        %v1395 = vadd.f32 %v1318, %v1394
        %1396 = vdwg.mxu0
        %1397 = vmatprep.subr.mxu0 %v1199
        %1398 = vmatpush1.msra.mxu0 %v1198
        %1399 = vmatprep.subr.mxu0 %v1201
        %1400 = vmatpush1.msra.mxu0 %v1200
        %1401 = vmatprep.subr.mxu0 %v1203
        %1402 = vmatpush1.msra.mxu0 %v1202
        %1403 = vmatprep.subr.mxu0 %v1205
        %1404 = vmatpush1.msra.mxu0 %v1204
        %1405 = vmatprep.subr.mxu0 %v1207
        %1406 = vmatpush1.msra.mxu0 %v1206
        %1407 = vmatprep.subr.mxu0 %v1209
        %1408 = vmatpush1.msra.mxu0 %v1208
        %1409 = vmatprep.subr.mxu0 %v1211
        %1410 = vmatpush1.msra.mxu0 %v1210
        %1411 = vmatprep.subr.mxu0 %v1213
        %1412 = vmatpush1.msra.mxu0 %v1212
        %1413 = vmatprep.subr.mxu0 %v1215
        %1414 = vmatpush1.msra.mxu0 %v1214
        %1415 = vmatprep.subr.mxu0 %v1217
        %1416 = vmatpush1.msra.mxu0 %v1216
        %1417 = vmatprep.subr.mxu0 %v1219
        %1418 = vmatpush1.msra.mxu0 %v1218
        %1419 = vmatprep.subr.mxu0 %v1221
        %1420 = vmatpush1.msra.mxu0 %v1220
        %1421 = vmatprep.subr.mxu0 %v1223
        %1422 = vmatpush1.msra.mxu0 %v1222
        %1423 = vmatprep.subr.mxu0 %v1225
        %1424 = vmatpush1.msra.mxu0 %v1224
        %1425 = vmatprep.subr.mxu0 %v1227
        %1426 = vmatpush1.msra.mxu0 %v1226
        %1427 = vmatprep.subr.mxu0 %v1241
        %1428 = vmatpush1.msra.mxu0 %v1238
        %1429 = vmatprep.subr.mxu0 0.0
        %1430 = vmatpush1.msra.mxu0 0.0
        %1431 = vmatprep.subr.mxu0 0.0
        %1432 = vmatpush1.msra.mxu0 0.0
        %1433 = vmatprep.subr.mxu0 0.0
        %1434 = vmatpush1.msra.mxu0 0.0
        %1435 = vmatprep.subr.mxu0 0.0
        %1436 = vmatpush1.msra.mxu0 0.0
        %1437 = vmatprep.subr.mxu0 0.0
        %1438 = vmatpush1.msra.mxu0 0.0
        %1439 = vmatprep.subr.mxu0 0.0
        %1440 = vmatpush1.msra.mxu0 0.0
        %1441 = vmatprep.subr.mxu0 0.0
        %1442 = vmatpush1.msra.mxu0 0.0
        %1443 = vmatprep.subr.mxu0 0.0
        %1444 = vmatpush1.msra.mxu0 0.0
        %1445 = vmatprep.subr.mxu0 0.0
        %1446 = vmatpush1.msra.mxu0 0.0
        %1447 = vmatprep.subr.mxu0 0.0
        %1448 = vmatpush1.msra.mxu0 0.0
        %1449 = vmatprep.subr.mxu0 0.0
        %1450 = vmatpush1.msra.mxu0 0.0
        %1451 = vmatprep.subr.mxu0 0.0
        %1452 = vmatpush1.msra.mxu0 0.0
        %1453 = vmatprep.subr.mxu0 0.0
        %1454 = vmatpush1.msra.mxu0 0.0
        %1455 = vmatprep.subr.mxu0 0.0
        %1456 = vmatpush1.msra.mxu0 0.0
        %1457 = vmatprep.subr.mxu0 0.0
        %1458 = vmatpush1.msra.mxu0 0.0
        %1459 = vmatprep.subr.mxu0 0.0
        %1460 = vmatpush1.msra.mxu0 0.0
        %1461 = vmatprep.mubr.f32.mxu0 0.0
        %1462 = vmatmul.mubr.f32.gmra.mrb[0].mxu0 %v1231
        %v1463 = vpop.f32.mrb[0].mxu0
        %v1464 = vadd.f32 %v1387, %v1463
        %v1465 = vpop.f32.mrb[0].mxu0
        %v1466 = vadd.f32 %v1389, %v1465
        %1467 = vmatprep.mubr.f32.mxu0 0.0
        %1468 = vmatmul.mubr.f32.gmra.mrb[0].mxu0 %v1234
        %v1469 = vpop.f32.mrb[0].mxu0
        %v1470 = vadd.f32 %v1393, %v1469
        %v1471 = vpop.f32.mrb[0].mxu0
        %v1472 = vadd.f32 %v1395, %v1471
        %1473 = vdwg.mxu0
        %1474 = vst [vmem:[#allocation4] sm:$0xff] %v1464
        %1475 = vst.msk [vmem:[#allocation4 + $0x8] sm:$0xff] %vm548, %v1466
        %1476 = vst [vmem:[#allocation4 + $0x10] sm:$0xff] %v1470
        %1477 = vst.msk [vmem:[#allocation4 + $0x18] sm:$0xff] %vm548, %v1472
        %v1478 = vld [vmem:[#allocation4] sm:$0xff]
        %v1479 = vld [vmem:[#allocation4 + $0x10] sm:$0xff]
        %vm1480 = vcmask 752640
        %1481 = vst.msk [vmem:[#allocation5] sm:$0xff] %vm1480, %v1478
        %1482 = vst.msk [vmem:[#allocation5 + $0x8] sm:$0xff] %vm1480, %v1479
        %v1483 = vld [vmem:[#allocation4] sm:$0xff]
        %v1484 = vld [vmem:[#allocation4 + $0x10] sm:$0xff]
        %1487 = vrot.lane.b32.xlu0 %v1483, 127
        %v1488 = vpop.permute.xlu0 %1487
        %1489 = vrot.lane.b32.xlu0 %v1484, 127
        %v1490 = vpop.permute.xlu0 %1489
        %1493 = vst.msk [vmem:[#allocation5 + $0x10] sm:$0xff] %vm1480, %v1488
        %1494 = vst.msk [vmem:[#allocation5 + $0x18] sm:$0xff] %vm1480, %v1490
        %v1495 = vld [vmem:[#allocation4] sm:$0xff]
        %v1496 = vld [vmem:[#allocation4 + $0x10] sm:$0xff]
        %1499 = vrot.lane.b32.xlu0 %v1495, 126
        %v1500 = vpop.permute.xlu0 %1499
        %1501 = vrot.lane.b32.xlu0 %v1496, 126
        %v1502 = vpop.permute.xlu0 %1501
        %1505 = vst.msk [vmem:[#allocation5 + $0x20] sm:$0xff] %vm1480, %v1500
        %1506 = vst.msk [vmem:[#allocation5 + $0x28] sm:$0xff] %vm1480, %v1502
        %v1507 = vld [vmem:[#allocation4] sm:$0xff]
        %v1508 = vld [vmem:[#allocation4 + $0x10] sm:$0xff]
        %1511 = vrot.lane.b32.xlu0 %v1507, 125
        %v1512 = vpop.permute.xlu0 %1511
        %1513 = vrot.lane.b32.xlu0 %v1508, 125
        %v1514 = vpop.permute.xlu0 %1513
        %1517 = vst.msk [vmem:[#allocation5 + $0x30] sm:$0xff] %vm1480, %v1512
        %1518 = vst.msk [vmem:[#allocation5 + $0x38] sm:$0xff] %vm1480, %v1514
        %v1519 = vld [vmem:[#allocation4] sm:$0xff]
        %v1520 = vld [vmem:[#allocation4 + $0x10] sm:$0xff]
        %1523 = vrot.lane.b32.xlu0 %v1519, 124
        %v1524 = vpop.permute.xlu0 %1523
        %1525 = vrot.lane.b32.xlu0 %v1520, 124
        %v1526 = vpop.permute.xlu0 %1525
        %1529 = vst.msk [vmem:[#allocation5 + $0x40] sm:$0xff] %vm1480, %v1524
        %1530 = vst.msk [vmem:[#allocation5 + $0x48] sm:$0xff] %vm1480, %v1526
        %v1531 = vld [vmem:[#allocation4] sm:$0xff]
        %v1532 = vld [vmem:[#allocation4 + $0x10] sm:$0xff]
        %1535 = vrot.lane.b32.xlu0 %v1531, 116
        %v1536 = vpop.permute.xlu0 %1535
        %1537 = vrot.lane.b32.xlu0 %v1532, 116
        %v1538 = vpop.permute.xlu0 %1537
        %1541 = vst.msk [vmem:[#allocation5 + $0x50] sm:$0xff] %vm1480, %v1536
        %1542 = vst.msk [vmem:[#allocation5 + $0x58] sm:$0xff] %vm1480, %v1538
        %v1543 = vld [vmem:[#allocation4] sm:$0xff]
        %v1544 = vld [vmem:[#allocation4 + $0x10] sm:$0xff]
        %1547 = vrot.lane.b32.xlu0 %v1543, 115
        %v1548 = vpop.permute.xlu0 %1547
        %1549 = vrot.lane.b32.xlu0 %v1544, 115
        %v1550 = vpop.permute.xlu0 %1549
        %1553 = vst.msk [vmem:[#allocation5 + $0x60] sm:$0xff] %vm1480, %v1548
        %1554 = vst.msk [vmem:[#allocation5 + $0x68] sm:$0xff] %vm1480, %v1550
        %v1555 = vld [vmem:[#allocation4] sm:$0xff]
        %v1556 = vld [vmem:[#allocation4 + $0x10] sm:$0xff]
        %1559 = vrot.lane.b32.xlu0 %v1555, 114
        %v1560 = vpop.permute.xlu0 %1559
        %1561 = vrot.lane.b32.xlu0 %v1556, 114
        %v1562 = vpop.permute.xlu0 %1561
        %1565 = vst.msk [vmem:[#allocation5 + $0x70] sm:$0xff] %vm1480, %v1560
        %1566 = vst.msk [vmem:[#allocation5 + $0x78] sm:$0xff] %vm1480, %v1562
        %v1567 = vld [vmem:[#allocation4] sm:$0xff]
        %v1568 = vld [vmem:[#allocation4 + $0x10] sm:$0xff]
        %1571 = vrot.lane.b32.xlu0 %v1567, 113
        %v1572 = vpop.permute.xlu0 %1571
        %1573 = vrot.lane.b32.xlu0 %v1568, 113
        %v1574 = vpop.permute.xlu0 %1573
        %1577 = vst.msk [vmem:[#allocation5 + $0x80] sm:$0xff] %vm1480, %v1572
        %1578 = vst.msk [vmem:[#allocation5 + $0x88] sm:$0xff] %vm1480, %v1574
        %v1579 = vld [vmem:[#allocation4] sm:$0xff]
        %v1580 = vld [vmem:[#allocation4 + $0x10] sm:$0xff]
        %1583 = vrot.lane.b32.xlu0 %v1579, 112
        %v1584 = vpop.permute.xlu0 %1583
        %1585 = vrot.lane.b32.xlu0 %v1580, 112
        %v1586 = vpop.permute.xlu0 %1585
        %1589 = vst.msk [vmem:[#allocation5 + $0x90] sm:$0xff] %vm1480, %v1584
        %1590 = vst.msk [vmem:[#allocation5 + $0x98] sm:$0xff] %vm1480, %v1586
        %v1591 = vld [vmem:[#allocation4] sm:$0xff]
        %v1592 = vld [vmem:[#allocation4 + $0x10] sm:$0xff]
        %1595 = vrot.lane.b32.xlu0 %v1591, 104
        %v1596 = vpop.permute.xlu0 %1595
        %1597 = vrot.lane.b32.xlu0 %v1592, 104
        %v1598 = vpop.permute.xlu0 %1597
        %1601 = vst.msk [vmem:[#allocation5 + $0xa0] sm:$0xff] %vm1480, %v1596
        %1602 = vst.msk [vmem:[#allocation5 + $0xa8] sm:$0xff] %vm1480, %v1598
        %v1603 = vld [vmem:[#allocation4] sm:$0xff]
        %v1604 = vld [vmem:[#allocation4 + $0x10] sm:$0xff]
        %1607 = vrot.lane.b32.xlu0 %v1603, 103
        %v1608 = vpop.permute.xlu0 %1607
        %1609 = vrot.lane.b32.xlu0 %v1604, 103
        %v1610 = vpop.permute.xlu0 %1609
        %1613 = vst.msk [vmem:[#allocation5 + $0xb0] sm:$0xff] %vm1480, %v1608
        %1614 = vst.msk [vmem:[#allocation5 + $0xb8] sm:$0xff] %vm1480, %v1610
        %v1615 = vld [vmem:[#allocation4] sm:$0xff]
        %v1616 = vld [vmem:[#allocation4 + $0x10] sm:$0xff]
        %1619 = vrot.lane.b32.xlu0 %v1615, 102
        %v1620 = vpop.permute.xlu0 %1619
        %1621 = vrot.lane.b32.xlu0 %v1616, 102
        %v1622 = vpop.permute.xlu0 %1621
        %1625 = vst.msk [vmem:[#allocation5 + $0xc0] sm:$0xff] %vm1480, %v1620
        %1626 = vst.msk [vmem:[#allocation5 + $0xc8] sm:$0xff] %vm1480, %v1622
        %v1627 = vld [vmem:[#allocation4] sm:$0xff]
        %v1628 = vld [vmem:[#allocation4 + $0x10] sm:$0xff]
        %1631 = vrot.lane.b32.xlu0 %v1627, 101
        %v1632 = vpop.permute.xlu0 %1631
        %1633 = vrot.lane.b32.xlu0 %v1628, 101
        %v1634 = vpop.permute.xlu0 %1633
        %1637 = vst.msk [vmem:[#allocation5 + $0xd0] sm:$0xff] %vm1480, %v1632
        %1638 = vst.msk [vmem:[#allocation5 + $0xd8] sm:$0xff] %vm1480, %v1634
        %v1639 = vld [vmem:[#allocation4] sm:$0xff]
        %v1640 = vld [vmem:[#allocation4 + $0x10] sm:$0xff]
        %1643 = vrot.lane.b32.xlu0 %v1639, 100
        %v1644 = vpop.permute.xlu0 %1643
        %1645 = vrot.lane.b32.xlu0 %v1640, 100
        %v1646 = vpop.permute.xlu0 %1645
        %1649 = vst.msk [vmem:[#allocation5 + $0xe0] sm:$0xff] %vm1480, %v1644
        %1650 = vst.msk [vmem:[#allocation5 + $0xe8] sm:$0xff] %vm1480, %v1646
        %v1651 = vld [vmem:[#allocation4] sm:$0xff]
        %v1652 = vld [vmem:[#allocation4 + $0x10] sm:$0xff]
        %1655 = vrot.lane.b32.xlu0 %v1651, 92
        %v1656 = vpop.permute.xlu0 %1655
        %1657 = vrot.lane.b32.xlu0 %v1652, 92
        %v1658 = vpop.permute.xlu0 %1657
        %1661 = vst.msk [vmem:[#allocation5 + $0xf0] sm:$0xff] %vm1480, %v1656
        %1662 = vst.msk [vmem:[#allocation5 + $0xf8] sm:$0xff] %vm1480, %v1658
        %v1663 = vld [vmem:[#allocation4] sm:$0xff]
        %v1664 = vld [vmem:[#allocation4 + $0x8] sm:$0xff]
        %v1665 = vld [vmem:[#allocation4 + $0x10] sm:$0xff]
        %v1666 = vld [vmem:[#allocation4 + $0x18] sm:$0xff]
        %1671 = vrot.lane.b32.xlu0 %v1663, 91
        %v1672 = vpop.permute.xlu0 %1671
        %1673 = vrot.lane.b32.xlu0 %v1664, 91
        %v1674 = vpop.permute.xlu0 %1673
        %1675 = vrot.lane.b32.xlu0 %v1665, 91
        %v1676 = vpop.permute.xlu0 %1675
        %1677 = vrot.lane.b32.xlu0 %v1666, 91
        %v1678 = vpop.permute.xlu0 %1677
        %vm1679 = vcmask 744448
        %v1680 = vsel %vm1679, %v1672, %v1674
        %v1681 = vsel %vm1679, %v1676, %v1678
        %1684 = vst.msk [vmem:[#allocation5 + $0x100] sm:$0xff] %vm1480, %v1680
        %1685 = vst.msk [vmem:[#allocation5 + $0x108] sm:$0xff] %vm1480, %v1681
        %v1686 = vld [vmem:[#allocation4] sm:$0xff]
        %v1687 = vld [vmem:[#allocation4 + $0x8] sm:$0xff]
        %v1688 = vld [vmem:[#allocation4 + $0x10] sm:$0xff]
        %v1689 = vld [vmem:[#allocation4 + $0x18] sm:$0xff]
        %1694 = vrot.lane.b32.xlu0 %v1686, 90
        %v1695 = vpop.permute.xlu0 %1694
        %1696 = vrot.lane.b32.xlu0 %v1687, 90
        %v1697 = vpop.permute.xlu0 %1696
        %1698 = vrot.lane.b32.xlu0 %v1688, 90
        %v1699 = vpop.permute.xlu0 %1698
        %1700 = vrot.lane.b32.xlu0 %v1689, 90
        %v1701 = vpop.permute.xlu0 %1700
        %vm1702 = vcmask 736256
        %v1703 = vsel %vm1702, %v1695, %v1697
        %v1704 = vsel %vm1702, %v1699, %v1701
        %1707 = vst.msk [vmem:[#allocation5 + $0x110] sm:$0xff] %vm1480, %v1703
        %1708 = vst.msk [vmem:[#allocation5 + $0x118] sm:$0xff] %vm1480, %v1704
        %v1709 = vld [vmem:[#allocation4] sm:$0xff]
        %v1710 = vld [vmem:[#allocation4 + $0x8] sm:$0xff]
        %v1711 = vld [vmem:[#allocation4 + $0x10] sm:$0xff]
        %v1712 = vld [vmem:[#allocation4 + $0x18] sm:$0xff]
        %1717 = vrot.lane.b32.xlu0 %v1709, 89
        %v1718 = vpop.permute.xlu0 %1717
        %1719 = vrot.lane.b32.xlu0 %v1710, 89
        %v1720 = vpop.permute.xlu0 %1719
        %1721 = vrot.lane.b32.xlu0 %v1711, 89
        %v1722 = vpop.permute.xlu0 %1721
        %1723 = vrot.lane.b32.xlu0 %v1712, 89
        %v1724 = vpop.permute.xlu0 %1723
        %vm1725 = vcmask 728064
        %v1726 = vsel %vm1725, %v1718, %v1720
        %v1727 = vsel %vm1725, %v1722, %v1724
        %1730 = vst.msk [vmem:[#allocation5 + $0x120] sm:$0xff] %vm1480, %v1726
        %1731 = vst.msk [vmem:[#allocation5 + $0x128] sm:$0xff] %vm1480, %v1727
        %v1732 = vld [vmem:[#allocation4] sm:$0xff]
        %v1733 = vld [vmem:[#allocation4 + $0x8] sm:$0xff]
        %v1734 = vld [vmem:[#allocation4 + $0x10] sm:$0xff]
        %v1735 = vld [vmem:[#allocation4 + $0x18] sm:$0xff]
        %1740 = vrot.lane.b32.xlu0 %v1732, 88
        %v1741 = vpop.permute.xlu0 %1740
        %1742 = vrot.lane.b32.xlu0 %v1733, 88
        %v1743 = vpop.permute.xlu0 %1742
        %1744 = vrot.lane.b32.xlu0 %v1734, 88
        %v1745 = vpop.permute.xlu0 %1744
        %1746 = vrot.lane.b32.xlu0 %v1735, 88
        %v1747 = vpop.permute.xlu0 %1746
        %vm1748 = vcmask 719872
        %v1749 = vsel %vm1748, %v1741, %v1743
        %v1750 = vsel %vm1748, %v1745, %v1747
        %1753 = vst.msk [vmem:[#allocation5 + $0x130] sm:$0xff] %vm1480, %v1749
        %1754 = vst.msk [vmem:[#allocation5 + $0x138] sm:$0xff] %vm1480, %v1750
        %v1755 = vld [vmem:[#allocation4] sm:$0xff]
        %v1756 = vld [vmem:[#allocation4 + $0x8] sm:$0xff]
        %v1757 = vld [vmem:[#allocation4 + $0x10] sm:$0xff]
        %v1758 = vld [vmem:[#allocation4 + $0x18] sm:$0xff]
        %1763 = vrot.lane.b32.xlu0 %v1755, 80
        %v1764 = vpop.permute.xlu0 %1763
        %1765 = vrot.lane.b32.xlu0 %v1756, 80
        %v1766 = vpop.permute.xlu0 %1765
        %1767 = vrot.lane.b32.xlu0 %v1757, 80
        %v1768 = vpop.permute.xlu0 %1767
        %1769 = vrot.lane.b32.xlu0 %v1758, 80
        %v1770 = vpop.permute.xlu0 %1769
        %vm1771 = vcmask 654336
        %v1772 = vsel %vm1771, %v1764, %v1766
        %v1773 = vsel %vm1771, %v1768, %v1770
        %1776 = vst.msk [vmem:[#allocation5 + $0x140] sm:$0xff] %vm1480, %v1772
        %1777 = vst.msk [vmem:[#allocation5 + $0x148] sm:$0xff] %vm1480, %v1773
        %v1778 = vld [vmem:[#allocation4] sm:$0xff]
        %v1779 = vld [vmem:[#allocation4 + $0x8] sm:$0xff]
        %v1780 = vld [vmem:[#allocation4 + $0x10] sm:$0xff]
        %v1781 = vld [vmem:[#allocation4 + $0x18] sm:$0xff]
        %1786 = vrot.lane.b32.xlu0 %v1778, 79
        %v1787 = vpop.permute.xlu0 %1786
        %1788 = vrot.lane.b32.xlu0 %v1779, 79
        %v1789 = vpop.permute.xlu0 %1788
        %1790 = vrot.lane.b32.xlu0 %v1780, 79
        %v1791 = vpop.permute.xlu0 %1790
        %1792 = vrot.lane.b32.xlu0 %v1781, 79
        %v1793 = vpop.permute.xlu0 %1792
        %vm1794 = vcmask 646144
        %v1795 = vsel %vm1794, %v1787, %v1789
        %v1796 = vsel %vm1794, %v1791, %v1793
        %1799 = vst.msk [vmem:[#allocation5 + $0x150] sm:$0xff] %vm1480, %v1795
        %1800 = vst.msk [vmem:[#allocation5 + $0x158] sm:$0xff] %vm1480, %v1796
        %v1801 = vld [vmem:[#allocation4] sm:$0xff]
        %v1802 = vld [vmem:[#allocation4 + $0x8] sm:$0xff]
        %v1803 = vld [vmem:[#allocation4 + $0x10] sm:$0xff]
        %v1804 = vld [vmem:[#allocation4 + $0x18] sm:$0xff]
        %1809 = vrot.lane.b32.xlu0 %v1801, 78
        %v1810 = vpop.permute.xlu0 %1809
        %1811 = vrot.lane.b32.xlu0 %v1802, 78
        %v1812 = vpop.permute.xlu0 %1811
        %1813 = vrot.lane.b32.xlu0 %v1803, 78
        %v1814 = vpop.permute.xlu0 %1813
        %1815 = vrot.lane.b32.xlu0 %v1804, 78
        %v1816 = vpop.permute.xlu0 %1815
        %vm1817 = vcmask 637952
        %v1818 = vsel %vm1817, %v1810, %v1812
        %v1819 = vsel %vm1817, %v1814, %v1816
        %1822 = vst.msk [vmem:[#allocation5 + $0x160] sm:$0xff] %vm1480, %v1818
        %1823 = vst.msk [vmem:[#allocation5 + $0x168] sm:$0xff] %vm1480, %v1819
        %v1824 = vld [vmem:[#allocation4] sm:$0xff]
        %v1825 = vld [vmem:[#allocation4 + $0x8] sm:$0xff]
        %v1826 = vld [vmem:[#allocation4 + $0x10] sm:$0xff]
        %v1827 = vld [vmem:[#allocation4 + $0x18] sm:$0xff]
        %1832 = vrot.lane.b32.xlu0 %v1824, 77
        %v1833 = vpop.permute.xlu0 %1832
        %1834 = vrot.lane.b32.xlu0 %v1825, 77
        %v1835 = vpop.permute.xlu0 %1834
        %1836 = vrot.lane.b32.xlu0 %v1826, 77
        %v1837 = vpop.permute.xlu0 %1836
        %1838 = vrot.lane.b32.xlu0 %v1827, 77
        %v1839 = vpop.permute.xlu0 %1838
        %vm1840 = vcmask 629760
        %v1841 = vsel %vm1840, %v1833, %v1835
        %v1842 = vsel %vm1840, %v1837, %v1839
        %1845 = vst.msk [vmem:[#allocation5 + $0x170] sm:$0xff] %vm1480, %v1841
        %1846 = vst.msk [vmem:[#allocation5 + $0x178] sm:$0xff] %vm1480, %v1842
        %v1847 = vld [vmem:[#allocation4] sm:$0xff]
        %v1848 = vld [vmem:[#allocation4 + $0x8] sm:$0xff]
        %v1849 = vld [vmem:[#allocation4 + $0x10] sm:$0xff]
        %v1850 = vld [vmem:[#allocation4 + $0x18] sm:$0xff]
        %1855 = vrot.lane.b32.xlu0 %v1847, 76
        %v1856 = vpop.permute.xlu0 %1855
        %1857 = vrot.lane.b32.xlu0 %v1848, 76
        %v1858 = vpop.permute.xlu0 %1857
        %1859 = vrot.lane.b32.xlu0 %v1849, 76
        %v1860 = vpop.permute.xlu0 %1859
        %1861 = vrot.lane.b32.xlu0 %v1850, 76
        %v1862 = vpop.permute.xlu0 %1861
        %vm1863 = vcmask 621568
        %v1864 = vsel %vm1863, %v1856, %v1858
        %v1865 = vsel %vm1863, %v1860, %v1862
        %1868 = vst.msk [vmem:[#allocation5 + $0x180] sm:$0xff] %vm1480, %v1864
        %1869 = vst.msk [vmem:[#allocation5 + $0x188] sm:$0xff] %vm1480, %v1865
        %v1870 = vld [vmem:[%s3] sm:$0xff]
        %v1871 = vld [vmem:[%s3 + $0x8] sm:$0xff]
        %v1872 = vld [vmem:[%s3 + $0x10] sm:$0xff]
        %v1873 = vld [vmem:[%s3 + $0x18] sm:$0xff]
        %v1874 = vld [vmem:[%s3 + $0x20] sm:$0xff]
        %v1875 = vld [vmem:[%s3 + $0x28] sm:$0xff]
        %v1876 = vld [vmem:[%s3 + $0x30] sm:$0xff]
        %v1877 = vld [vmem:[%s3 + $0x38] sm:$0xff]
        %v1878 = vld [vmem:[%s3 + $0x40] sm:$0xff]
        %v1879 = vld [vmem:[%s3 + $0x48] sm:$0xff]
        %v1880 = vld [vmem:[%s3 + $0x50] sm:$0xff]
        %v1881 = vld [vmem:[%s3 + $0x58] sm:$0xff]
        %v1882 = vld [vmem:[%s3 + $0x60] sm:$0xff]
        %v1883 = vld [vmem:[%s3 + $0x68] sm:$0xff]
        %v1884 = vld [vmem:[%s3 + $0x70] sm:$0xff]
        %v1885 = vld [vmem:[%s3 + $0x78] sm:$0xff]
        %v1886 = vld [vmem:[#allocation5] sm:$0xff]
        %v1887 = vld [vmem:[#allocation5 + $0x8] sm:$0xff]
        %v1888 = vld [vmem:[#allocation5 + $0x10] sm:$0xff]
        %v1889 = vld [vmem:[#allocation5 + $0x18] sm:$0xff]
        %v1890 = vld [vmem:[#allocation5 + $0x20] sm:$0xff]
        %v1891 = vld [vmem:[#allocation5 + $0x28] sm:$0xff]
        %v1892 = vld [vmem:[#allocation5 + $0x30] sm:$0xff]
        %v1893 = vld [vmem:[#allocation5 + $0x38] sm:$0xff]
        %v1894 = vld [vmem:[#allocation5 + $0x40] sm:$0xff]
        %v1895 = vld [vmem:[#allocation5 + $0x48] sm:$0xff]
        %v1896 = vld [vmem:[#allocation5 + $0x50] sm:$0xff]
        %v1897 = vld [vmem:[#allocation5 + $0x58] sm:$0xff]
        %v1898 = vld [vmem:[#allocation5 + $0x60] sm:$0xff]
        %v1899 = vld [vmem:[#allocation5 + $0x68] sm:$0xff]
        %v1900 = vld [vmem:[#allocation5 + $0x70] sm:$0xff]
        %v1901 = vld [vmem:[#allocation5 + $0x78] sm:$0xff]
        %v1902 = vld [vmem:[#allocation5 + $0x80] sm:$0xff]
        %v1903 = vld [vmem:[#allocation5 + $0x88] sm:$0xff]
        %v1904 = vld [vmem:[#allocation5 + $0x90] sm:$0xff]
        %v1905 = vld [vmem:[#allocation5 + $0x98] sm:$0xff]
        %v1906 = vld [vmem:[#allocation5 + $0xa0] sm:$0xff]
        %v1907 = vld [vmem:[#allocation5 + $0xa8] sm:$0xff]
        %v1908 = vld [vmem:[#allocation5 + $0xb0] sm:$0xff]
        %v1909 = vld [vmem:[#allocation5 + $0xb8] sm:$0xff]
        %v1910 = vld [vmem:[#allocation5 + $0xc0] sm:$0xff]
        %v1911 = vld [vmem:[#allocation5 + $0xc8] sm:$0xff]
        %v1912 = vld [vmem:[#allocation5 + $0xd0] sm:$0xff]
        %v1913 = vld [vmem:[#allocation5 + $0xd8] sm:$0xff]
        %v1914 = vld [vmem:[#allocation5 + $0xe0] sm:$0xff]
        %v1915 = vld [vmem:[#allocation5 + $0xe8] sm:$0xff]
        %v1916 = vld [vmem:[#allocation5 + $0xf0] sm:$0xff]
        %v1917 = vld [vmem:[#allocation5 + $0xf8] sm:$0xff]
        %v1918 = vld [vmem:[#allocation5 + $0x100] sm:$0xff]
        %v1919 = vld [vmem:[#allocation5 + $0x108] sm:$0xff]
        %v1920 = vld [vmem:[#allocation5 + $0x110] sm:$0xff]
        %v1921 = vld [vmem:[#allocation5 + $0x118] sm:$0xff]
        %v1922 = vld [vmem:[#allocation5 + $0x120] sm:$0xff]
        %v1923 = vld [vmem:[#allocation5 + $0x128] sm:$0xff]
        %v1924 = vld [vmem:[#allocation5 + $0x130] sm:$0xff]
        %v1925 = vld [vmem:[#allocation5 + $0x138] sm:$0xff]
        %v1926 = vld [vmem:[#allocation5 + $0x140] sm:$0xff]
        %v1927 = vld [vmem:[#allocation5 + $0x148] sm:$0xff]
        %v1928 = vld [vmem:[#allocation5 + $0x150] sm:$0xff]
        %v1929 = vld [vmem:[#allocation5 + $0x158] sm:$0xff]
        %v1930 = vld [vmem:[#allocation5 + $0x160] sm:$0xff]
        %v1931 = vld [vmem:[#allocation5 + $0x168] sm:$0xff]
        %v1932 = vld [vmem:[#allocation5 + $0x170] sm:$0xff]
        %v1933 = vld [vmem:[#allocation5 + $0x178] sm:$0xff]
        %v1934 = vld [vmem:[#allocation5 + $0x180] sm:$0xff]
        %v1935 = vld [vmem:[#allocation5 + $0x188] sm:$0xff]
        %v1936 = vld [vmem:[%s4] sm:$0xff]
        %v1937 = vld [vmem:[%s4 + $0x8] sm:$0xff]
        %v1938 = vld [vmem:[%s4 + $0x10] sm:$0xff]
        %v1939 = vld [vmem:[%s4 + $0x18] sm:$0xff]
        %1941 = vset.pattern.permute.xlu0 0
        %1942 = vperm.xlu0 %1941, %v1936
        %v1943 = vpop.permute.xlu0 %1942
        %1946 = vset.pattern.permute.xlu0 0
        %1947 = vperm.xlu0 %1946, %v1937
        %v1948 = vpop.permute.xlu0 %1947
        %1951 = vset.pattern.permute.xlu0 0
        %1952 = vperm.xlu0 %1951, %v1938
        %v1953 = vpop.permute.xlu0 %1952
        %1956 = vset.pattern.permute.xlu0 0
        %1957 = vperm.xlu0 %1956, %v1939
        %v1958 = vpop.permute.xlu0 %1957
        %v1961 = vsel %vm548, %v1873, 0
        %v1964 = vsel %vm548, %v1877, 0
        %v1967 = vsel %vm548, %v1881, 0
        %v1970 = vsel %vm548, %v1885, 0
        %1972 = vmatprep.subr.mxu0 0.0
        %1973 = vmatpush1.msra.mxu0 %v1886
        %1974 = vmatprep.subr.mxu0 0.0
        %1975 = vmatpush1.msra.mxu0 %v1887
        %1976 = vmatprep.subr.mxu0 0.0
        %1977 = vmatpush1.msra.mxu0 %v1888
        %1978 = vmatprep.subr.mxu0 0.0
        %1979 = vmatpush1.msra.mxu0 %v1889
        %1980 = vmatprep.subr.mxu0 0.0
        %1981 = vmatpush1.msra.mxu0 %v1890
        %1982 = vmatprep.subr.mxu0 0.0
        %1983 = vmatpush1.msra.mxu0 %v1891
        %1984 = vmatprep.subr.mxu0 0.0
        %1985 = vmatpush1.msra.mxu0 %v1892
        %1986 = vmatprep.subr.mxu0 0.0
        %1987 = vmatpush1.msra.mxu0 %v1893
        %1988 = vmatprep.subr.mxu0 0.0
        %1989 = vmatpush1.msra.mxu0 %v1894
        %1990 = vmatprep.subr.mxu0 0.0
        %1991 = vmatpush1.msra.mxu0 %v1895
        %1992 = vmatprep.subr.mxu0 0.0
        %1993 = vmatpush1.msra.mxu0 %v1896
        %1994 = vmatprep.subr.mxu0 0.0
        %1995 = vmatpush1.msra.mxu0 %v1897
        %1996 = vmatprep.subr.mxu0 0.0
        %1997 = vmatpush1.msra.mxu0 %v1898
        %1998 = vmatprep.subr.mxu0 0.0
        %1999 = vmatpush1.msra.mxu0 %v1899
        %2000 = vmatprep.subr.mxu0 0.0
        %2001 = vmatpush1.msra.mxu0 %v1900
        %2002 = vmatprep.subr.mxu0 0.0
        %2003 = vmatpush1.msra.mxu0 %v1901
        %2004 = vmatprep.subr.mxu0 0.0
        %2005 = vmatpush1.msra.mxu0 %v1902
        %2006 = vmatprep.subr.mxu0 0.0
        %2007 = vmatpush1.msra.mxu0 %v1903
        %2008 = vmatprep.subr.mxu0 0.0
        %2009 = vmatpush1.msra.mxu0 %v1904
        %2010 = vmatprep.subr.mxu0 0.0
        %2011 = vmatpush1.msra.mxu0 %v1905
        %2012 = vmatprep.subr.mxu0 0.0
        %2013 = vmatpush1.msra.mxu0 %v1906
        %2014 = vmatprep.subr.mxu0 0.0
        %2015 = vmatpush1.msra.mxu0 %v1907
        %2016 = vmatprep.subr.mxu0 0.0
        %2017 = vmatpush1.msra.mxu0 %v1908
        %2018 = vmatprep.subr.mxu0 0.0
        %2019 = vmatpush1.msra.mxu0 %v1909
        %2020 = vmatprep.subr.mxu0 0.0
        %2021 = vmatpush1.msra.mxu0 %v1910
        %2022 = vmatprep.subr.mxu0 0.0
        %2023 = vmatpush1.msra.mxu0 %v1911
        %2024 = vmatprep.subr.mxu0 0.0
        %2025 = vmatpush1.msra.mxu0 %v1912
        %2026 = vmatprep.subr.mxu0 0.0
        %2027 = vmatpush1.msra.mxu0 %v1913
        %2028 = vmatprep.subr.mxu0 0.0
        %2029 = vmatpush1.msra.mxu0 %v1914
        %2030 = vmatprep.subr.mxu0 0.0
        %2031 = vmatpush1.msra.mxu0 %v1915
        %2032 = vmatprep.subr.mxu0 0.0
        %2033 = vmatpush1.msra.mxu0 %v1916
        %2034 = vmatprep.subr.mxu0 0.0
        %2035 = vmatpush1.msra.mxu0 %v1917
        %2036 = vmatprep.mubr.f32.mxu0 %v1871
        %2037 = vmatmul.mubr.f32.gmra.mrb[0].mxu0 %v1870
        %v2038 = vpop.f32.mrb[0].mxu0
        %v2039 = vadd.f32 %v1943, %v2038
        %v2040 = vpop.f32.mrb[0].mxu0
        %2041 = vmatprep.mubr.f32.mxu0 %v1875
        %2042 = vmatmul.mubr.f32.gmra.mrb[0].mxu0 %v1874
        %v2043 = vpop.f32.mrb[0].mxu0
        %v2044 = vadd.f32 %v1948, %v2043
        %v2045 = vpop.f32.mrb[0].mxu0
        %2046 = vmatprep.mubr.f32.mxu0 %v1879
        %2047 = vmatmul.mubr.f32.gmra.mrb[0].mxu0 %v1878
        %v2048 = vpop.f32.mrb[0].mxu0
        %v2049 = vadd.f32 %v1953, %v2048
        %v2050 = vpop.f32.mrb[0].mxu0
        %2051 = vmatprep.mubr.f32.mxu0 %v1883
        %2052 = vmatmul.mubr.f32.gmra.mrb[0].mxu0 %v1882
        %v2053 = vpop.f32.mrb[0].mxu0
        %v2054 = vadd.f32 %v1958, %v2053
        %v2055 = vpop.f32.mrb[0].mxu0
        %2056 = vdwg.mxu0
        %2057 = vmatprep.subr.mxu0 0.0
        %2058 = vmatpush1.msra.mxu0 %v1918
        %2059 = vmatprep.subr.mxu0 0.0
        %2060 = vmatpush1.msra.mxu0 %v1919
        %2061 = vmatprep.subr.mxu0 0.0
        %2062 = vmatpush1.msra.mxu0 %v1920
        %2063 = vmatprep.subr.mxu0 0.0
        %2064 = vmatpush1.msra.mxu0 %v1921
        %2065 = vmatprep.subr.mxu0 0.0
        %2066 = vmatpush1.msra.mxu0 %v1922
        %2067 = vmatprep.subr.mxu0 0.0
        %2068 = vmatpush1.msra.mxu0 %v1923
        %2069 = vmatprep.subr.mxu0 0.0
        %2070 = vmatpush1.msra.mxu0 %v1924
        %2071 = vmatprep.subr.mxu0 0.0
        %2072 = vmatpush1.msra.mxu0 %v1925
        %2073 = vmatprep.subr.mxu0 0.0
        %2074 = vmatpush1.msra.mxu0 %v1926
        %2075 = vmatprep.subr.mxu0 0.0
        %2076 = vmatpush1.msra.mxu0 %v1927
        %2077 = vmatprep.subr.mxu0 0.0
        %2078 = vmatpush1.msra.mxu0 %v1928
        %2079 = vmatprep.subr.mxu0 0.0
        %2080 = vmatpush1.msra.mxu0 %v1929
        %2081 = vmatprep.subr.mxu0 0.0
        %2082 = vmatpush1.msra.mxu0 %v1930
        %2083 = vmatprep.subr.mxu0 0.0
        %2084 = vmatpush1.msra.mxu0 %v1931
        %2085 = vmatprep.subr.mxu0 0.0
        %2086 = vmatpush1.msra.mxu0 %v1932
        %2087 = vmatprep.subr.mxu0 0.0
        %2088 = vmatpush1.msra.mxu0 %v1933
        %2089 = vmatprep.subr.mxu0 0.0
        %2090 = vmatpush1.msra.mxu0 %v1934
        %2091 = vmatprep.subr.mxu0 0.0
        %2092 = vmatpush1.msra.mxu0 %v1935
        %2093 = vmatprep.subr.mxu0 0.0
        %2094 = vmatpush1.msra.mxu0 0.0
        %2095 = vmatprep.subr.mxu0 0.0
        %2096 = vmatpush1.msra.mxu0 0.0
        %2097 = vmatprep.subr.mxu0 0.0
        %2098 = vmatpush1.msra.mxu0 0.0
        %2099 = vmatprep.subr.mxu0 0.0
        %2100 = vmatpush1.msra.mxu0 0.0
        %2101 = vmatprep.subr.mxu0 0.0
        %2102 = vmatpush1.msra.mxu0 0.0
        %2103 = vmatprep.subr.mxu0 0.0
        %2104 = vmatpush1.msra.mxu0 0.0
        %2105 = vmatprep.subr.mxu0 0.0
        %2106 = vmatpush1.msra.mxu0 0.0
        %2107 = vmatprep.subr.mxu0 0.0
        %2108 = vmatpush1.msra.mxu0 0.0
        %2109 = vmatprep.subr.mxu0 0.0
        %2110 = vmatpush1.msra.mxu0 0.0
        %2111 = vmatprep.subr.mxu0 0.0
        %2112 = vmatpush1.msra.mxu0 0.0
        %2113 = vmatprep.subr.mxu0 0.0
        %2114 = vmatpush1.msra.mxu0 0.0
        %2115 = vmatprep.subr.mxu0 0.0
        %2116 = vmatpush1.msra.mxu0 0.0
        %2117 = vmatprep.subr.mxu0 0.0
        %2118 = vmatpush1.msra.mxu0 0.0
        %2119 = vmatprep.subr.mxu0 0.0
        %2120 = vmatpush1.msra.mxu0 0.0
        %2121 = vmatprep.mubr.f32.mxu0 %v1961
        %2122 = vmatmul.mubr.f32.gmra.mrb[0].mxu0 %v1872
        %v2123 = vpop.f32.mrb[0].mxu0
        %v2124 = vadd.f32 %v2039, %v2123
        %v2125 = vpop.f32.mrb[0].mxu0
        %2126 = vmatprep.mubr.f32.mxu0 %v1964
        %2127 = vmatmul.mubr.f32.gmra.mrb[0].mxu0 %v1876
        %v2128 = vpop.f32.mrb[0].mxu0
        %v2129 = vadd.f32 %v2044, %v2128
        %v2130 = vpop.f32.mrb[0].mxu0
        %2131 = vmatprep.mubr.f32.mxu0 %v1967
        %2132 = vmatmul.mubr.f32.gmra.mrb[0].mxu0 %v1880
        %v2133 = vpop.f32.mrb[0].mxu0
        %v2134 = vadd.f32 %v2049, %v2133
        %v2135 = vpop.f32.mrb[0].mxu0
        %2136 = vmatprep.mubr.f32.mxu0 %v1970
        %2137 = vmatmul.mubr.f32.gmra.mrb[0].mxu0 %v1884
        %v2138 = vpop.f32.mrb[0].mxu0
        %v2139 = vadd.f32 %v2054, %v2138
        %v2140 = vpop.f32.mrb[0].mxu0
        %2141 = vdwg.mxu0
        %v2142 = vmax.f32 %v2124, 0.0
        %v2143 = vmax.f32 %v2129, 0.0
        %v2144 = vmax.f32 %v2134, 0.0
        %v2145 = vmax.f32 %v2139, 0.0
        %2146 = vst.msk [vmem:[#allocation6] sm:$0xff] %vm1480, %v2142
        %2147 = vst.msk [vmem:[#allocation6 + $0x8] sm:$0xff] %vm1480, %v2143
        %2148 = vst.msk [vmem:[#allocation6 + $0x10] sm:$0xff] %vm1480, %v2144
        %2149 = vst.msk [vmem:[#allocation6 + $0x18] sm:$0xff] %vm1480, %v2145
        %v2150 = vld [vmem:[#allocation6] sm:$0xff]
        %v2151 = vld [vmem:[#allocation6 + $0x8] sm:$0xff]
        %v2152 = vld [vmem:[#allocation6 + $0x10] sm:$0xff]
        %v2153 = vld [vmem:[#allocation6 + $0x18] sm:$0xff]
        %2158 = vrot.lane.b32.xlu0 %v2150, 127
        %v2159 = vpop.permute.xlu0 %2158
        %2160 = vrot.lane.b32.xlu0 %v2151, 127
        %v2161 = vpop.permute.xlu0 %2160
        %2162 = vrot.lane.b32.xlu0 %v2152, 127
        %v2163 = vpop.permute.xlu0 %2162
        %2164 = vrot.lane.b32.xlu0 %v2153, 127
        %v2165 = vpop.permute.xlu0 %2164
        %v2170 = vmax.f32 %v2150, %v2159
        %v2171 = vmax.f32 %v2151, %v2161
        %v2172 = vmax.f32 %v2152, %v2163
        %v2173 = vmax.f32 %v2153, %v2165
        %2178 = vrot.lane.b32.xlu0 %v2170, 116
        %v2179 = vpop.permute.xlu0 %2178
        %2180 = vrot.lane.b32.xlu0 %v2171, 116
        %v2181 = vpop.permute.xlu0 %2180
        %2182 = vrot.lane.b32.xlu0 %v2172, 116
        %v2183 = vpop.permute.xlu0 %2182
        %2184 = vrot.lane.b32.xlu0 %v2173, 116
        %v2185 = vpop.permute.xlu0 %2184
        %v2190 = vmax.f32 %v2170, %v2179
        %v2191 = vmax.f32 %v2171, %v2181
        %v2192 = vmax.f32 %v2172, %v2183
        %v2193 = vmax.f32 %v2173, %v2185
        %v2194 = vld [vmem:[%s8] sm:$0xff]
        %v2195 = vld [vmem:[%s8 + $0x8] sm:$0xff]
        %v2196 = vld [vmem:[%s8 + $0x10] sm:$0xff]
        %v2197 = vld [vmem:[%s8 + $0x18] sm:$0xff]
        %v2198 = vld [vmem:[%s8 + $0x20] sm:$0xff]
        %v2199 = vld [vmem:[%s8 + $0x28] sm:$0xff]
        %v2200 = vld [vmem:[%s8 + $0x30] sm:$0xff]
        %v2201 = vld [vmem:[%s8 + $0x38] sm:$0xff]
        %v2202 = vld [vmem:[%s8 + $0x40] sm:$0xff]
        %v2203 = vld [vmem:[%s8 + $0x48] sm:$0x7f]
        %v2205 = vsel %vm1794, %v2190, 0
        %v2208 = vsel %vm1794, %v2191, 0
        %v2211 = vsel %vm1794, %v2192, 0
        %v2214 = vsel %vm1794, %v2193, 0
        %v2217 = vsel %vm1236, %v2203, 0
        %2219 = vmatprep.subr.mxu0 0.0
        %2220 = vmatpush1.msra.mxu0 %v2194
        %2221 = vmatprep.subr.mxu0 0.0
        %2222 = vmatpush1.msra.mxu0 %v2195
        %2223 = vmatprep.subr.mxu0 0.0
        %2224 = vmatpush1.msra.mxu0 %v2196
        %2225 = vmatprep.subr.mxu0 0.0
        %2226 = vmatpush1.msra.mxu0 %v2197
        %2227 = vmatprep.subr.mxu0 0.0
        %2228 = vmatpush1.msra.mxu0 %v2198
        %2229 = vmatprep.subr.mxu0 0.0
        %2230 = vmatpush1.msra.mxu0 %v2199
        %2231 = vmatprep.subr.mxu0 0.0
        %2232 = vmatpush1.msra.mxu0 %v2200
        %2233 = vmatprep.subr.mxu0 0.0
        %2234 = vmatpush1.msra.mxu0 %v2201
        %2235 = vmatprep.subr.mxu0 0.0
        %2236 = vmatpush1.msra.mxu0 %v2202
        %2237 = vmatprep.subr.mxu0 0.0
        %2238 = vmatpush1.msra.mxu0 %v2217
        %2239 = vmatprep.subr.mxu0 0.0
        %2240 = vmatpush1.msra.mxu0 0.0
        %2241 = vmatprep.subr.mxu0 0.0
        %2242 = vmatpush1.msra.mxu0 0.0
        %2243 = vmatprep.subr.mxu0 0.0
        %2244 = vmatpush1.msra.mxu0 0.0
        %2245 = vmatprep.subr.mxu0 0.0
        %2246 = vmatpush1.msra.mxu0 0.0
        %2247 = vmatprep.subr.mxu0 0.0
        %2248 = vmatpush1.msra.mxu0 0.0
        %2249 = vmatprep.subr.mxu0 0.0
        %2250 = vmatpush1.msra.mxu0 0.0
        %2251 = vmatprep.subr.mxu0 0.0
        %2252 = vmatpush1.msra.mxu0 0.0
        %2253 = vmatprep.subr.mxu0 0.0
        %2254 = vmatpush1.msra.mxu0 0.0
        %2255 = vmatprep.subr.mxu0 0.0
        %2256 = vmatpush1.msra.mxu0 0.0
        %2257 = vmatprep.subr.mxu0 0.0
        %2258 = vmatpush1.msra.mxu0 0.0
        %2259 = vmatprep.subr.mxu0 0.0
        %2260 = vmatpush1.msra.mxu0 0.0
        %2261 = vmatprep.subr.mxu0 0.0
        %2262 = vmatpush1.msra.mxu0 0.0
        %2263 = vmatprep.subr.mxu0 0.0
        %2264 = vmatpush1.msra.mxu0 0.0
        %2265 = vmatprep.subr.mxu0 0.0
        %2266 = vmatpush1.msra.mxu0 0.0
        %2267 = vmatprep.subr.mxu0 0.0
        %2268 = vmatpush1.msra.mxu0 0.0
        %2269 = vmatprep.subr.mxu0 0.0
        %2270 = vmatpush1.msra.mxu0 0.0
        %2271 = vmatprep.subr.mxu0 0.0
        %2272 = vmatpush1.msra.mxu0 0.0
        %2273 = vmatprep.subr.mxu0 0.0
        %2274 = vmatpush1.msra.mxu0 0.0
        %2275 = vmatprep.subr.mxu0 0.0
        %2276 = vmatpush1.msra.mxu0 0.0
        %2277 = vmatprep.subr.mxu0 0.0
        %2278 = vmatpush1.msra.mxu0 0.0
        %2279 = vmatprep.subr.mxu0 0.0
        %2280 = vmatpush1.msra.mxu0 0.0
        %2281 = vmatprep.subr.mxu0 0.0
        %2282 = vmatpush1.msra.mxu0 0.0
        %2283 = vmatprep.mubr.f32.mxu0 0.0
        %2284 = vmatmul.mubr.f32.gmra.mrb[0].mxu0 %v2205
        %v2285 = vpop.f32.mrb[0].mxu0
        %v2286 = vadd.f32 0.0, %v2285
        %v2287 = vpop.f32.mrb[0].mxu0
        %2288 = vmatprep.mubr.f32.mxu0 0.0
        %2289 = vmatmul.mubr.f32.gmra.mrb[0].mxu0 %v2208
        %v2290 = vpop.f32.mrb[0].mxu0
        %v2291 = vadd.f32 0.0, %v2290
        %v2292 = vpop.f32.mrb[0].mxu0
        %2293 = vmatprep.mubr.f32.mxu0 0.0
        %2294 = vmatmul.mubr.f32.gmra.mrb[0].mxu0 %v2211
        %v2295 = vpop.f32.mrb[0].mxu0
        %v2296 = vadd.f32 0.0, %v2295
        %v2297 = vpop.f32.mrb[0].mxu0
        %2298 = vmatprep.mubr.f32.mxu0 0.0
        %2299 = vmatmul.mubr.f32.gmra.mrb[0].mxu0 %v2214
        %v2300 = vpop.f32.mrb[0].mxu0
        %v2301 = vadd.f32 0.0, %v2300
        %v2302 = vpop.f32.mrb[0].mxu0
        %2303 = vdwg.mxu0
        %2304 = vst.msk [vmem:[#allocation7] sm:$0xff] %vm548, %v2286
        %2305 = vst.msk [vmem:[#allocation7 + $0x8] sm:$0xff] %vm548, %v2291
        %2306 = vst.msk [vmem:[#allocation7 + $0x10] sm:$0xff] %vm548, %v2296
        %2307 = vst.msk [vmem:[#allocation7 + $0x18] sm:$0xff] %vm548, %v2301
        %v2308 = vld [vmem:[#allocation7] sm:$0x1]
        %vm2309 = vcmp.lt.s32.totalorder %v328, 16
        %vm2310 = vmand %vm329, %vm2309
        %2311 = vst.msk [vmem:[#allocation8] sm:$0x1] %vm2310, %v2308
        %v2312 = vld [vmem:[#allocation7 + $0x1] sm:$0x1]
        %v2315 = vunpack.c.l.s4 1966171168
        %v2316 = vunpack.c.0.s8 %v2315
        %v2317 = vlaneseq
        %v2318 = vshrl.u32 %v2317, 7
        %v2319 = vsub.s32 %v2316, %v2318
        %v2320 = vrot.slane %v2312, %v2319
        %v2322 = vunpack.c.l.s4 1966171168
        %v2323 = vunpack.c.0.s8 %v2322
        %v2324 = vlaneseq
        %v2325 = vshrl.u32 %v2324, 7
        %v2326 = vsub.s32 %v2323, %v2325
        %v2327 = vrot.slane %v2320, %v2326
        %2328 = vrot.lane.b32.xlu0 %v2327, 16
        %v2329 = vpop.permute.xlu0 %2328
        %vm2331 = vcmp.ge.s32.totalorder %v328, 16
        %vm2332 = vcmp.lt.s32.totalorder %v328, 32
        %vm2333 = vmand %vm2331, %vm2332
        %2334 = vst.msk [vmem:[#allocation8] sm:$0x1] %vm2333, %v2329
        %v2335 = vld [vmem:[#allocation7 + $0x2] sm:$0x1]
        %v2338 = vunpack.c.l.s4 1966171168
        %v2339 = vunpack.c.0.s8 %v2338
        %v2340 = vlaneseq
        %v2341 = vshrl.u32 %v2340, 7
        %v2342 = vsub.s32 %v2339, %v2341
        %v2343 = vrot.slane %v2335, %v2342
        %v2345 = vunpack.c.l.s4 1966171168
        %v2346 = vunpack.c.0.s8 %v2345
        %v2347 = vlaneseq
        %v2348 = vshrl.u32 %v2347, 7
        %v2349 = vsub.s32 %v2346, %v2348
        %v2350 = vrot.slane %v2343, %v2349
        %2351 = vrot.lane.b32.xlu0 %v2350, 32
        %v2352 = vpop.permute.xlu0 %2351
        %vm2354 = vcmp.ge.s32.totalorder %v328, 32
        %vm2355 = vcmp.lt.s32.totalorder %v328, 48
        %vm2356 = vmand %vm2354, %vm2355
        %2357 = vst.msk [vmem:[#allocation8] sm:$0x1] %vm2356, %v2352
        %v2358 = vld [vmem:[#allocation7 + $0x3] sm:$0x1]
        %v2361 = vunpack.c.l.s4 1966171168
        %v2362 = vunpack.c.0.s8 %v2361
        %v2363 = vlaneseq
        %v2364 = vshrl.u32 %v2363, 7
        %v2365 = vsub.s32 %v2362, %v2364
        %v2366 = vrot.slane %v2358, %v2365
        %v2368 = vunpack.c.l.s4 1966171168
        %v2369 = vunpack.c.0.s8 %v2368
        %v2370 = vlaneseq
        %v2371 = vshrl.u32 %v2370, 7
        %v2372 = vsub.s32 %v2369, %v2371
        %v2373 = vrot.slane %v2366, %v2372
        %2374 = vrot.lane.b32.xlu0 %v2373, 48
        %v2375 = vpop.permute.xlu0 %2374
        %vm2377 = vcmp.ge.s32.totalorder %v328, 48
        %vm2378 = vcmp.lt.s32.totalorder %v328, 64
        %vm2379 = vmand %vm2377, %vm2378
        %2380 = vst.msk [vmem:[#allocation8] sm:$0x1] %vm2379, %v2375
        %v2381 = vld [vmem:[#allocation7 + $0x4] sm:$0x1]
        %v2384 = vunpack.c.l.s4 1966171168
        %v2385 = vunpack.c.0.s8 %v2384
        %v2386 = vlaneseq
        %v2387 = vshrl.u32 %v2386, 7
        %v2388 = vsub.s32 %v2385, %v2387
        %v2389 = vrot.slane %v2381, %v2388
        %v2391 = vunpack.c.l.s4 1966171168
        %v2392 = vunpack.c.0.s8 %v2391
        %v2393 = vlaneseq
        %v2394 = vshrl.u32 %v2393, 7
        %v2395 = vsub.s32 %v2392, %v2394
        %v2396 = vrot.slane %v2389, %v2395
        %2397 = vrot.lane.b32.xlu0 %v2396, 64
        %v2398 = vpop.permute.xlu0 %2397
        %vm2400 = vcmp.ge.s32.totalorder %v328, 64
        %vm2401 = vcmp.lt.s32.totalorder %v328, 80
        %vm2402 = vmand %vm2400, %vm2401
        %2403 = vst.msk [vmem:[#allocation8] sm:$0x1] %vm2402, %v2398
        %v2404 = vld [vmem:[#allocation7 + $0x5] sm:$0x1]
        %v2407 = vunpack.c.l.s4 1966171168
        %v2408 = vunpack.c.0.s8 %v2407
        %v2409 = vlaneseq
        %v2410 = vshrl.u32 %v2409, 7
        %v2411 = vsub.s32 %v2408, %v2410
        %v2412 = vrot.slane %v2404, %v2411
        %v2414 = vunpack.c.l.s4 1966171168
        %v2415 = vunpack.c.0.s8 %v2414
        %v2416 = vlaneseq
        %v2417 = vshrl.u32 %v2416, 7
        %v2418 = vsub.s32 %v2415, %v2417
        %v2419 = vrot.slane %v2412, %v2418
        %2420 = vrot.lane.b32.xlu0 %v2419, 80
        %v2421 = vpop.permute.xlu0 %2420
        %vm2423 = vcmp.ge.s32.totalorder %v328, 80
        %vm2424 = vcmp.lt.s32.totalorder %v328, 96
        %vm2425 = vmand %vm2423, %vm2424
        %2426 = vst.msk [vmem:[#allocation8] sm:$0x1] %vm2425, %v2421
        %v2427 = vld [vmem:[#allocation7 + $0x6] sm:$0x1]
        %v2430 = vunpack.c.l.s4 1966171168
        %v2431 = vunpack.c.0.s8 %v2430
        %v2432 = vlaneseq
        %v2433 = vshrl.u32 %v2432, 7
        %v2434 = vsub.s32 %v2431, %v2433
        %v2435 = vrot.slane %v2427, %v2434
        %v2437 = vunpack.c.l.s4 1966171168
        %v2438 = vunpack.c.0.s8 %v2437
        %v2439 = vlaneseq
        %v2440 = vshrl.u32 %v2439, 7
        %v2441 = vsub.s32 %v2438, %v2440
        %v2442 = vrot.slane %v2435, %v2441
        %2443 = vrot.lane.b32.xlu0 %v2442, 96
        %v2444 = vpop.permute.xlu0 %2443
        %vm2446 = vcmp.ge.s32.totalorder %v328, 96
        %vm2447 = vcmp.lt.s32.totalorder %v328, 112
        %vm2448 = vmand %vm2446, %vm2447
        %2449 = vst.msk [vmem:[#allocation8] sm:$0x1] %vm2448, %v2444
        %v2450 = vld [vmem:[#allocation7 + $0x7] sm:$0x1]
        %v2453 = vunpack.c.l.s4 1966171168
        %v2454 = vunpack.c.0.s8 %v2453
        %v2455 = vlaneseq
        %v2456 = vshrl.u32 %v2455, 7
        %v2457 = vsub.s32 %v2454, %v2456
        %v2458 = vrot.slane %v2450, %v2457
        %v2460 = vunpack.c.l.s4 1966171168
        %v2461 = vunpack.c.0.s8 %v2460
        %v2462 = vlaneseq
        %v2463 = vshrl.u32 %v2462, 7
        %v2464 = vsub.s32 %v2461, %v2463
        %v2465 = vrot.slane %v2458, %v2464
        %2466 = vrot.lane.b32.xlu0 %v2465, 112
        %v2467 = vpop.permute.xlu0 %2466
        %vm2469 = vcmp.ge.s32.totalorder %v328, 112
        %vm2470 = vcmp.lt.s32.totalorder %v328, 128
        %vm2471 = vmand %vm2469, %vm2470
        %2472 = vst.msk [vmem:[#allocation8] sm:$0x1] %vm2471, %v2467
        %v2473 = vld [vmem:[#allocation7 + $0x8] sm:$0x1]
        %2474 = vst.msk [vmem:[#allocation8 + $0x1] sm:$0x1] %vm2310, %v2473
        %v2475 = vld [vmem:[#allocation7 + $0x9] sm:$0x1]
        %v2478 = vunpack.c.l.s4 1966171168
        %v2479 = vunpack.c.0.s8 %v2478
        %v2480 = vlaneseq
        %v2481 = vshrl.u32 %v2480, 7
        %v2482 = vsub.s32 %v2479, %v2481
        %v2483 = vrot.slane %v2475, %v2482
        %v2485 = vunpack.c.l.s4 1966171168
        %v2486 = vunpack.c.0.s8 %v2485
        %v2487 = vlaneseq
        %v2488 = vshrl.u32 %v2487, 7
        %v2489 = vsub.s32 %v2486, %v2488
        %v2490 = vrot.slane %v2483, %v2489
        %2491 = vrot.lane.b32.xlu0 %v2490, 16
        %v2492 = vpop.permute.xlu0 %2491
        %2494 = vst.msk [vmem:[#allocation8 + $0x1] sm:$0x1] %vm2333, %v2492
        %v2495 = vld [vmem:[#allocation7 + $0xa] sm:$0x1]
        %v2498 = vunpack.c.l.s4 1966171168
        %v2499 = vunpack.c.0.s8 %v2498
        %v2500 = vlaneseq
        %v2501 = vshrl.u32 %v2500, 7
        %v2502 = vsub.s32 %v2499, %v2501
        %v2503 = vrot.slane %v2495, %v2502
        %v2505 = vunpack.c.l.s4 1966171168
        %v2506 = vunpack.c.0.s8 %v2505
        %v2507 = vlaneseq
        %v2508 = vshrl.u32 %v2507, 7
        %v2509 = vsub.s32 %v2506, %v2508
        %v2510 = vrot.slane %v2503, %v2509
        %2511 = vrot.lane.b32.xlu0 %v2510, 32
        %v2512 = vpop.permute.xlu0 %2511
        %2514 = vst.msk [vmem:[#allocation8 + $0x1] sm:$0x1] %vm2356, %v2512
        %v2515 = vld [vmem:[#allocation7 + $0xb] sm:$0x1]
        %v2518 = vunpack.c.l.s4 1966171168
        %v2519 = vunpack.c.0.s8 %v2518
        %v2520 = vlaneseq
        %v2521 = vshrl.u32 %v2520, 7
        %v2522 = vsub.s32 %v2519, %v2521
        %v2523 = vrot.slane %v2515, %v2522
        %v2525 = vunpack.c.l.s4 1966171168
        %v2526 = vunpack.c.0.s8 %v2525
        %v2527 = vlaneseq
        %v2528 = vshrl.u32 %v2527, 7
        %v2529 = vsub.s32 %v2526, %v2528
        %v2530 = vrot.slane %v2523, %v2529
        %2531 = vrot.lane.b32.xlu0 %v2530, 48
        %v2532 = vpop.permute.xlu0 %2531
        %2534 = vst.msk [vmem:[#allocation8 + $0x1] sm:$0x1] %vm2379, %v2532
        %v2535 = vld [vmem:[#allocation7 + $0xc] sm:$0x1]
        %v2538 = vunpack.c.l.s4 1966171168
        %v2539 = vunpack.c.0.s8 %v2538
        %v2540 = vlaneseq
        %v2541 = vshrl.u32 %v2540, 7
        %v2542 = vsub.s32 %v2539, %v2541
        %v2543 = vrot.slane %v2535, %v2542
        %v2545 = vunpack.c.l.s4 1966171168
        %v2546 = vunpack.c.0.s8 %v2545
        %v2547 = vlaneseq
        %v2548 = vshrl.u32 %v2547, 7
        %v2549 = vsub.s32 %v2546, %v2548
        %v2550 = vrot.slane %v2543, %v2549
        %2551 = vrot.lane.b32.xlu0 %v2550, 64
        %v2552 = vpop.permute.xlu0 %2551
        %2554 = vst.msk [vmem:[#allocation8 + $0x1] sm:$0x1] %vm2402, %v2552
        %v2555 = vld [vmem:[#allocation7 + $0xd] sm:$0x1]
        %v2558 = vunpack.c.l.s4 1966171168
        %v2559 = vunpack.c.0.s8 %v2558
        %v2560 = vlaneseq
        %v2561 = vshrl.u32 %v2560, 7
        %v2562 = vsub.s32 %v2559, %v2561
        %v2563 = vrot.slane %v2555, %v2562
        %v2565 = vunpack.c.l.s4 1966171168
        %v2566 = vunpack.c.0.s8 %v2565
        %v2567 = vlaneseq
        %v2568 = vshrl.u32 %v2567, 7
        %v2569 = vsub.s32 %v2566, %v2568
        %v2570 = vrot.slane %v2563, %v2569
        %2571 = vrot.lane.b32.xlu0 %v2570, 80
        %v2572 = vpop.permute.xlu0 %2571
        %2574 = vst.msk [vmem:[#allocation8 + $0x1] sm:$0x1] %vm2425, %v2572
        %v2575 = vld [vmem:[#allocation7 + $0xe] sm:$0x1]
        %v2578 = vunpack.c.l.s4 1966171168
        %v2579 = vunpack.c.0.s8 %v2578
        %v2580 = vlaneseq
        %v2581 = vshrl.u32 %v2580, 7
        %v2582 = vsub.s32 %v2579, %v2581
        %v2583 = vrot.slane %v2575, %v2582
        %v2585 = vunpack.c.l.s4 1966171168
        %v2586 = vunpack.c.0.s8 %v2585
        %v2587 = vlaneseq
        %v2588 = vshrl.u32 %v2587, 7
        %v2589 = vsub.s32 %v2586, %v2588
        %v2590 = vrot.slane %v2583, %v2589
        %2591 = vrot.lane.b32.xlu0 %v2590, 96
        %v2592 = vpop.permute.xlu0 %2591
        %2594 = vst.msk [vmem:[#allocation8 + $0x1] sm:$0x1] %vm2448, %v2592
        %v2595 = vld [vmem:[#allocation7 + $0xf] sm:$0x1]
        %v2598 = vunpack.c.l.s4 1966171168
        %v2599 = vunpack.c.0.s8 %v2598
        %v2600 = vlaneseq
        %v2601 = vshrl.u32 %v2600, 7
        %v2602 = vsub.s32 %v2599, %v2601
        %v2603 = vrot.slane %v2595, %v2602
        %v2605 = vunpack.c.l.s4 1966171168
        %v2606 = vunpack.c.0.s8 %v2605
        %v2607 = vlaneseq
        %v2608 = vshrl.u32 %v2607, 7
        %v2609 = vsub.s32 %v2606, %v2608
        %v2610 = vrot.slane %v2603, %v2609
        %2611 = vrot.lane.b32.xlu0 %v2610, 112
        %v2612 = vpop.permute.xlu0 %2611
        %2614 = vst.msk [vmem:[#allocation8 + $0x1] sm:$0x1] %vm2471, %v2612
        %v2615 = vld [vmem:[#allocation7 + $0x10] sm:$0x1]
        %2616 = vst.msk [vmem:[#allocation8 + $0x2] sm:$0x1] %vm2310, %v2615
        %v2617 = vld [vmem:[#allocation7 + $0x11] sm:$0x1]
        %v2620 = vunpack.c.l.s4 1966171168
        %v2621 = vunpack.c.0.s8 %v2620
        %v2622 = vlaneseq
        %v2623 = vshrl.u32 %v2622, 7
        %v2624 = vsub.s32 %v2621, %v2623
        %v2625 = vrot.slane %v2617, %v2624
        %v2627 = vunpack.c.l.s4 1966171168
        %v2628 = vunpack.c.0.s8 %v2627
        %v2629 = vlaneseq
        %v2630 = vshrl.u32 %v2629, 7
        %v2631 = vsub.s32 %v2628, %v2630
        %v2632 = vrot.slane %v2625, %v2631
        %2633 = vrot.lane.b32.xlu0 %v2632, 16
        %v2634 = vpop.permute.xlu0 %2633
        %2636 = vst.msk [vmem:[#allocation8 + $0x2] sm:$0x1] %vm2333, %v2634
        %v2637 = vld [vmem:[#allocation7 + $0x12] sm:$0x1]
        %v2640 = vunpack.c.l.s4 1966171168
        %v2641 = vunpack.c.0.s8 %v2640
        %v2642 = vlaneseq
        %v2643 = vshrl.u32 %v2642, 7
        %v2644 = vsub.s32 %v2641, %v2643
        %v2645 = vrot.slane %v2637, %v2644
        %v2647 = vunpack.c.l.s4 1966171168
        %v2648 = vunpack.c.0.s8 %v2647
        %v2649 = vlaneseq
        %v2650 = vshrl.u32 %v2649, 7
        %v2651 = vsub.s32 %v2648, %v2650
        %v2652 = vrot.slane %v2645, %v2651
        %2653 = vrot.lane.b32.xlu0 %v2652, 32
        %v2654 = vpop.permute.xlu0 %2653
        %2656 = vst.msk [vmem:[#allocation8 + $0x2] sm:$0x1] %vm2356, %v2654
        %v2657 = vld [vmem:[#allocation7 + $0x13] sm:$0x1]
        %v2660 = vunpack.c.l.s4 1966171168
        %v2661 = vunpack.c.0.s8 %v2660
        %v2662 = vlaneseq
        %v2663 = vshrl.u32 %v2662, 7
        %v2664 = vsub.s32 %v2661, %v2663
        %v2665 = vrot.slane %v2657, %v2664
        %v2667 = vunpack.c.l.s4 1966171168
        %v2668 = vunpack.c.0.s8 %v2667
        %v2669 = vlaneseq
        %v2670 = vshrl.u32 %v2669, 7
        %v2671 = vsub.s32 %v2668, %v2670
        %v2672 = vrot.slane %v2665, %v2671
        %2673 = vrot.lane.b32.xlu0 %v2672, 48
        %v2674 = vpop.permute.xlu0 %2673
        %2676 = vst.msk [vmem:[#allocation8 + $0x2] sm:$0x1] %vm2379, %v2674
        %v2677 = vld [vmem:[#allocation7 + $0x14] sm:$0x1]
        %v2680 = vunpack.c.l.s4 1966171168
        %v2681 = vunpack.c.0.s8 %v2680
        %v2682 = vlaneseq
        %v2683 = vshrl.u32 %v2682, 7
        %v2684 = vsub.s32 %v2681, %v2683
        %v2685 = vrot.slane %v2677, %v2684
        %v2687 = vunpack.c.l.s4 1966171168
        %v2688 = vunpack.c.0.s8 %v2687
        %v2689 = vlaneseq
        %v2690 = vshrl.u32 %v2689, 7
        %v2691 = vsub.s32 %v2688, %v2690
        %v2692 = vrot.slane %v2685, %v2691
        %2693 = vrot.lane.b32.xlu0 %v2692, 64
        %v2694 = vpop.permute.xlu0 %2693
        %2696 = vst.msk [vmem:[#allocation8 + $0x2] sm:$0x1] %vm2402, %v2694
        %v2697 = vld [vmem:[#allocation7 + $0x15] sm:$0x1]
        %v2700 = vunpack.c.l.s4 1966171168
        %v2701 = vunpack.c.0.s8 %v2700
        %v2702 = vlaneseq
        %v2703 = vshrl.u32 %v2702, 7
        %v2704 = vsub.s32 %v2701, %v2703
        %v2705 = vrot.slane %v2697, %v2704
        %v2707 = vunpack.c.l.s4 1966171168
        %v2708 = vunpack.c.0.s8 %v2707
        %v2709 = vlaneseq
        %v2710 = vshrl.u32 %v2709, 7
        %v2711 = vsub.s32 %v2708, %v2710
        %v2712 = vrot.slane %v2705, %v2711
        %2713 = vrot.lane.b32.xlu0 %v2712, 80
        %v2714 = vpop.permute.xlu0 %2713
        %2716 = vst.msk [vmem:[#allocation8 + $0x2] sm:$0x1] %vm2425, %v2714
        %v2717 = vld [vmem:[#allocation7 + $0x16] sm:$0x1]
        %v2720 = vunpack.c.l.s4 1966171168
        %v2721 = vunpack.c.0.s8 %v2720
        %v2722 = vlaneseq
        %v2723 = vshrl.u32 %v2722, 7
        %v2724 = vsub.s32 %v2721, %v2723
        %v2725 = vrot.slane %v2717, %v2724
        %v2727 = vunpack.c.l.s4 1966171168
        %v2728 = vunpack.c.0.s8 %v2727
        %v2729 = vlaneseq
        %v2730 = vshrl.u32 %v2729, 7
        %v2731 = vsub.s32 %v2728, %v2730
        %v2732 = vrot.slane %v2725, %v2731
        %2733 = vrot.lane.b32.xlu0 %v2732, 96
        %v2734 = vpop.permute.xlu0 %2733
        %2736 = vst.msk [vmem:[#allocation8 + $0x2] sm:$0x1] %vm2448, %v2734
        %v2737 = vld [vmem:[#allocation7 + $0x17] sm:$0x1]
        %v2740 = vunpack.c.l.s4 1966171168
        %v2741 = vunpack.c.0.s8 %v2740
        %v2742 = vlaneseq
        %v2743 = vshrl.u32 %v2742, 7
        %v2744 = vsub.s32 %v2741, %v2743
        %v2745 = vrot.slane %v2737, %v2744
        %v2747 = vunpack.c.l.s4 1966171168
        %v2748 = vunpack.c.0.s8 %v2747
        %v2749 = vlaneseq
        %v2750 = vshrl.u32 %v2749, 7
        %v2751 = vsub.s32 %v2748, %v2750
        %v2752 = vrot.slane %v2745, %v2751
        %2753 = vrot.lane.b32.xlu0 %v2752, 112
        %v2754 = vpop.permute.xlu0 %2753
        %2756 = vst.msk [vmem:[#allocation8 + $0x2] sm:$0x1] %vm2471, %v2754
        %v2757 = vld [vmem:[#allocation7 + $0x18] sm:$0x1]
        %2758 = vst.msk [vmem:[#allocation8 + $0x3] sm:$0x1] %vm2310, %v2757
        %v2759 = vld [vmem:[#allocation7 + $0x19] sm:$0x1]
        %v2762 = vunpack.c.l.s4 1966171168
        %v2763 = vunpack.c.0.s8 %v2762
        %v2764 = vlaneseq
        %v2765 = vshrl.u32 %v2764, 7
        %v2766 = vsub.s32 %v2763, %v2765
        %v2767 = vrot.slane %v2759, %v2766
        %v2769 = vunpack.c.l.s4 1966171168
        %v2770 = vunpack.c.0.s8 %v2769
        %v2771 = vlaneseq
        %v2772 = vshrl.u32 %v2771, 7
        %v2773 = vsub.s32 %v2770, %v2772
        %v2774 = vrot.slane %v2767, %v2773
        %2775 = vrot.lane.b32.xlu0 %v2774, 16
        %v2776 = vpop.permute.xlu0 %2775
        %2778 = vst.msk [vmem:[#allocation8 + $0x3] sm:$0x1] %vm2333, %v2776
        %v2779 = vld [vmem:[#allocation7 + $0x1a] sm:$0x1]
        %v2782 = vunpack.c.l.s4 1966171168
        %v2783 = vunpack.c.0.s8 %v2782
        %v2784 = vlaneseq
        %v2785 = vshrl.u32 %v2784, 7
        %v2786 = vsub.s32 %v2783, %v2785
        %v2787 = vrot.slane %v2779, %v2786
        %v2789 = vunpack.c.l.s4 1966171168
        %v2790 = vunpack.c.0.s8 %v2789
        %v2791 = vlaneseq
        %v2792 = vshrl.u32 %v2791, 7
        %v2793 = vsub.s32 %v2790, %v2792
        %v2794 = vrot.slane %v2787, %v2793
        %2795 = vrot.lane.b32.xlu0 %v2794, 32
        %v2796 = vpop.permute.xlu0 %2795
        %2798 = vst.msk [vmem:[#allocation8 + $0x3] sm:$0x1] %vm2356, %v2796
        %v2799 = vld [vmem:[#allocation7 + $0x1b] sm:$0x1]
        %v2802 = vunpack.c.l.s4 1966171168
        %v2803 = vunpack.c.0.s8 %v2802
        %v2804 = vlaneseq
        %v2805 = vshrl.u32 %v2804, 7
        %v2806 = vsub.s32 %v2803, %v2805
        %v2807 = vrot.slane %v2799, %v2806
        %v2809 = vunpack.c.l.s4 1966171168
        %v2810 = vunpack.c.0.s8 %v2809
        %v2811 = vlaneseq
        %v2812 = vshrl.u32 %v2811, 7
        %v2813 = vsub.s32 %v2810, %v2812
        %v2814 = vrot.slane %v2807, %v2813
        %2815 = vrot.lane.b32.xlu0 %v2814, 48
        %v2816 = vpop.permute.xlu0 %2815
        %2818 = vst.msk [vmem:[#allocation8 + $0x3] sm:$0x1] %vm2379, %v2816
        %v2819 = vld [vmem:[#allocation7 + $0x1c] sm:$0x1]
        %v2822 = vunpack.c.l.s4 1966171168
        %v2823 = vunpack.c.0.s8 %v2822
        %v2824 = vlaneseq
        %v2825 = vshrl.u32 %v2824, 7
        %v2826 = vsub.s32 %v2823, %v2825
        %v2827 = vrot.slane %v2819, %v2826
        %v2829 = vunpack.c.l.s4 1966171168
        %v2830 = vunpack.c.0.s8 %v2829
        %v2831 = vlaneseq
        %v2832 = vshrl.u32 %v2831, 7
        %v2833 = vsub.s32 %v2830, %v2832
        %v2834 = vrot.slane %v2827, %v2833
        %2835 = vrot.lane.b32.xlu0 %v2834, 64
        %v2836 = vpop.permute.xlu0 %2835
        %2838 = vst.msk [vmem:[#allocation8 + $0x3] sm:$0x1] %vm2402, %v2836
        %v2839 = vld [vmem:[#allocation7 + $0x1d] sm:$0x1]
        %v2842 = vunpack.c.l.s4 1966171168
        %v2843 = vunpack.c.0.s8 %v2842
        %v2844 = vlaneseq
        %v2845 = vshrl.u32 %v2844, 7
        %v2846 = vsub.s32 %v2843, %v2845
        %v2847 = vrot.slane %v2839, %v2846
        %v2849 = vunpack.c.l.s4 1966171168
        %v2850 = vunpack.c.0.s8 %v2849
        %v2851 = vlaneseq
        %v2852 = vshrl.u32 %v2851, 7
        %v2853 = vsub.s32 %v2850, %v2852
        %v2854 = vrot.slane %v2847, %v2853
        %2855 = vrot.lane.b32.xlu0 %v2854, 80
        %v2856 = vpop.permute.xlu0 %2855
        %2858 = vst.msk [vmem:[#allocation8 + $0x3] sm:$0x1] %vm2425, %v2856
        %v2859 = vld [vmem:[#allocation7 + $0x1e] sm:$0x1]
        %v2862 = vunpack.c.l.s4 1966171168
        %v2863 = vunpack.c.0.s8 %v2862
        %v2864 = vlaneseq
        %v2865 = vshrl.u32 %v2864, 7
        %v2866 = vsub.s32 %v2863, %v2865
        %v2867 = vrot.slane %v2859, %v2866
        %v2869 = vunpack.c.l.s4 1966171168
        %v2870 = vunpack.c.0.s8 %v2869
        %v2871 = vlaneseq
        %v2872 = vshrl.u32 %v2871, 7
        %v2873 = vsub.s32 %v2870, %v2872
        %v2874 = vrot.slane %v2867, %v2873
        %2875 = vrot.lane.b32.xlu0 %v2874, 96
        %v2876 = vpop.permute.xlu0 %2875
        %2878 = vst.msk [vmem:[#allocation8 + $0x3] sm:$0x1] %vm2448, %v2876
        %v2879 = vld [vmem:[#allocation7 + $0x1f] sm:$0x1]
        %v2882 = vunpack.c.l.s4 1966171168
        %v2883 = vunpack.c.0.s8 %v2882
        %v2884 = vlaneseq
        %v2885 = vshrl.u32 %v2884, 7
        %v2886 = vsub.s32 %v2883, %v2885
        %v2887 = vrot.slane %v2879, %v2886
        %v2889 = vunpack.c.l.s4 1966171168
        %v2890 = vunpack.c.0.s8 %v2889
        %v2891 = vlaneseq
        %v2892 = vshrl.u32 %v2891, 7
        %v2893 = vsub.s32 %v2890, %v2892
        %v2894 = vrot.slane %v2887, %v2893
        %2895 = vrot.lane.b32.xlu0 %v2894, 112
        %v2896 = vpop.permute.xlu0 %2895
        %2898 = vst.msk [vmem:[#allocation8 + $0x3] sm:$0x1] %vm2471, %v2896
        %v2899 = vld [vmem:[#allocation8] sm:$0xf]
        %v2900 = vld [vmem:[%s5] sm:$0xff]
        %v2901 = vld [vmem:[%s5 + $0x8] sm:$0xff]
        %v2902 = vld [vmem:[%s5 + $0x10] sm:$0xff]
        %v2903 = vld [vmem:[%s5 + $0x18] sm:$0xff]
        %v2904 = vld [vmem:[%s5 + $0x20] sm:$0xff]
        %v2905 = vld [vmem:[%s5 + $0x28] sm:$0xff]
        %v2906 = vld [vmem:[%s5 + $0x30] sm:$0xff]
        %v2907 = vld [vmem:[%s5 + $0x38] sm:$0xff]
        %v2908 = vld [vmem:[%s5 + $0x40] sm:$0xff]
        %v2909 = vld [vmem:[%s5 + $0x48] sm:$0xff]
        %v2910 = vld [vmem:[%s5 + $0x50] sm:$0xff]
        %v2911 = vld [vmem:[%s5 + $0x58] sm:$0xff]
        %v2912 = vld [vmem:[%s5 + $0x60] sm:$0xff]
        %v2913 = vld [vmem:[%s5 + $0x68] sm:$0xff]
        %v2914 = vld [vmem:[%s5 + $0x70] sm:$0xff]
        %v2915 = vld [vmem:[%s5 + $0x78] sm:$0xff]
        %v2916 = vld [vmem:[%s5 + $0x80] sm:$0xff]
        %v2917 = vld [vmem:[%s5 + $0x88] sm:$0xff]
        %v2918 = vld [vmem:[%s5 + $0x90] sm:$0xff]
        %v2919 = vld [vmem:[%s5 + $0x98] sm:$0xff]
        %v2920 = vld [vmem:[%s5 + $0xa0] sm:$0xff]
        %v2921 = vld [vmem:[%s5 + $0xa8] sm:$0xff]
        %v2922 = vld [vmem:[%s5 + $0xb0] sm:$0xff]
        %v2923 = vld [vmem:[%s5 + $0xb8] sm:$0xff]
        %v2924 = vld [vmem:[%s5 + $0xc0] sm:$0xff]
        %v2925 = vld [vmem:[%s5 + $0xc8] sm:$0xff]
        %v2926 = vld [vmem:[%s5 + $0xd0] sm:$0xff]
        %v2927 = vld [vmem:[%s5 + $0xd8] sm:$0xff]
        %v2928 = vld [vmem:[%s5 + $0xe0] sm:$0xff]
        %v2929 = vld [vmem:[%s5 + $0xe8] sm:$0xff]
        %v2930 = vld [vmem:[%s5 + $0xf0] sm:$0xff]
        %v2931 = vld [vmem:[%s5 + $0xf8] sm:$0xff]
        %v2932 = vld [vmem:[%s5 + $0x100] sm:$0xff]
        %v2933 = vld [vmem:[%s5 + $0x108] sm:$0xff]
        %v2934 = vld [vmem:[%s5 + $0x110] sm:$0xff]
        %v2935 = vld [vmem:[%s5 + $0x118] sm:$0xff]
        %v2936 = vld [vmem:[%s5 + $0x120] sm:$0xff]
        %v2937 = vld [vmem:[%s5 + $0x128] sm:$0xff]
        %v2938 = vld [vmem:[%s5 + $0x130] sm:$0xff]
        %v2939 = vld [vmem:[%s5 + $0x138] sm:$0xff]
        %v2940 = vld [vmem:[%s5 + $0x140] sm:$0xff]
        %v2941 = vld [vmem:[%s5 + $0x148] sm:$0xff]
        %v2942 = vld [vmem:[%s5 + $0x150] sm:$0xff]
        %v2943 = vld [vmem:[%s5 + $0x158] sm:$0xff]
        %v2944 = vld [vmem:[%s5 + $0x160] sm:$0xff]
        %v2945 = vld [vmem:[%s5 + $0x168] sm:$0xff]
        %v2946 = vld [vmem:[%s5 + $0x170] sm:$0xff]
        %v2947 = vld [vmem:[%s5 + $0x178] sm:$0xff]
        %v2948 = vld [vmem:[%s5 + $0x180] sm:$0xff]
        %v2949 = vld [vmem:[%s5 + $0x188] sm:$0xff]
        %v2950 = vld [vmem:[%s5 + $0x190] sm:$0xff]
        %v2951 = vld [vmem:[%s5 + $0x198] sm:$0xff]
        %v2952 = vld [vmem:[%s5 + $0x1a0] sm:$0xff]
        %v2953 = vld [vmem:[%s5 + $0x1a8] sm:$0xff]
        %v2954 = vld [vmem:[%s5 + $0x1b0] sm:$0xff]
        %v2955 = vld [vmem:[%s5 + $0x1b8] sm:$0xff]
        %v2956 = vld [vmem:[%s5 + $0x1c0] sm:$0xff]
        %v2957 = vld [vmem:[%s5 + $0x1c8] sm:$0xff]
        %v2958 = vld [vmem:[%s5 + $0x1d0] sm:$0xff]
        %v2959 = vld [vmem:[%s5 + $0x1d8] sm:$0xff]
        %v2960 = vld [vmem:[%s5 + $0x1e0] sm:$0xff]
        %v2961 = vld [vmem:[%s5 + $0x1e8] sm:$0xff]
        %v2962 = vld [vmem:[%s5 + $0x1f0] sm:$0xff]
        %v2963 = vld [vmem:[%s5 + $0x1f8] sm:$0xff]
        %v2964 = vld [vmem:[%s6] sm:$0x1]
        %v2966 = vlaneseq
        %v2967 = vshrl.u32 %v2966, 7
        %v2968 = vsub.s32 0, %v2967
        %v2969 = vrot.slane %v2899, %v2968
        %v2970 = vlaneseq
        %v2971 = vshrl.u32 %v2970, 7
        %v2972 = vsub.s32 1, %v2971
        %v2973 = vrot.slane %v2899, %v2972
        %v2974 = vlaneseq
        %v2975 = vshrl.u32 %v2974, 7
        %v2976 = vsub.s32 2, %v2975
        %v2977 = vrot.slane %v2899, %v2976
        %v2978 = vlaneseq
        %v2979 = vshrl.u32 %v2978, 7
        %v2980 = vsub.s32 3, %v2979
        %v2981 = vrot.slane %v2899, %v2980
        %2986 = vmatprep.subr.mxu0 0.0
        %2987 = vmatpush1.msra.mxu0 %v2900
        %2988 = vmatprep.subr.mxu0 0.0
        %2989 = vmatpush1.msra.mxu0 %v2901
        %2990 = vmatprep.subr.mxu0 0.0
        %2991 = vmatpush1.msra.mxu0 %v2902
        %2992 = vmatprep.subr.mxu0 0.0
        %2993 = vmatpush1.msra.mxu0 %v2903
        %2994 = vmatprep.subr.mxu0 0.0
        %2995 = vmatpush1.msra.mxu0 %v2904
        %2996 = vmatprep.subr.mxu0 0.0
        %2997 = vmatpush1.msra.mxu0 %v2905
        %2998 = vmatprep.subr.mxu0 0.0
        %2999 = vmatpush1.msra.mxu0 %v2906
        %3000 = vmatprep.subr.mxu0 0.0
        %3001 = vmatpush1.msra.mxu0 %v2907
        %3002 = vmatprep.subr.mxu0 0.0
        %3003 = vmatpush1.msra.mxu0 %v2908
        %3004 = vmatprep.subr.mxu0 0.0
        %3005 = vmatpush1.msra.mxu0 %v2909
        %3006 = vmatprep.subr.mxu0 0.0
        %3007 = vmatpush1.msra.mxu0 %v2910
        %3008 = vmatprep.subr.mxu0 0.0
        %3009 = vmatpush1.msra.mxu0 %v2911
        %3010 = vmatprep.subr.mxu0 0.0
        %3011 = vmatpush1.msra.mxu0 %v2912
        %3012 = vmatprep.subr.mxu0 0.0
        %3013 = vmatpush1.msra.mxu0 %v2913
        %3014 = vmatprep.subr.mxu0 0.0
        %3015 = vmatpush1.msra.mxu0 %v2914
        %3016 = vmatprep.subr.mxu0 0.0
        %3017 = vmatpush1.msra.mxu0 %v2915
        %3018 = vmatprep.subr.mxu0 0.0
        %3019 = vmatpush1.msra.mxu0 %v2916
        %3020 = vmatprep.subr.mxu0 0.0
        %3021 = vmatpush1.msra.mxu0 %v2917
        %3022 = vmatprep.subr.mxu0 0.0
        %3023 = vmatpush1.msra.mxu0 %v2918
        %3024 = vmatprep.subr.mxu0 0.0
        %3025 = vmatpush1.msra.mxu0 %v2919
        %3026 = vmatprep.subr.mxu0 0.0
        %3027 = vmatpush1.msra.mxu0 %v2920
        %3028 = vmatprep.subr.mxu0 0.0
        %3029 = vmatpush1.msra.mxu0 %v2921
        %3030 = vmatprep.subr.mxu0 0.0
        %3031 = vmatpush1.msra.mxu0 %v2922
        %3032 = vmatprep.subr.mxu0 0.0
        %3033 = vmatpush1.msra.mxu0 %v2923
        %3034 = vmatprep.subr.mxu0 0.0
        %3035 = vmatpush1.msra.mxu0 %v2924
        %3036 = vmatprep.subr.mxu0 0.0
        %3037 = vmatpush1.msra.mxu0 %v2925
        %3038 = vmatprep.subr.mxu0 0.0
        %3039 = vmatpush1.msra.mxu0 %v2926
        %3040 = vmatprep.subr.mxu0 0.0
        %3041 = vmatpush1.msra.mxu0 %v2927
        %3042 = vmatprep.subr.mxu0 0.0
        %3043 = vmatpush1.msra.mxu0 %v2928
        %3044 = vmatprep.subr.mxu0 0.0
        %3045 = vmatpush1.msra.mxu0 %v2929
        %3046 = vmatprep.subr.mxu0 0.0
        %3047 = vmatpush1.msra.mxu0 %v2930
        %3048 = vmatprep.subr.mxu0 0.0
        %3049 = vmatpush1.msra.mxu0 %v2931
        %3050 = vmatprep.mubr.f32.mxu0 %v2973
        %3051 = vmatmul.mubr.f32.gmra.mrb[0].mxu0 %v2969
        %v3052 = vpop.f32.mrb[0].mxu0
        %v3053 = vadd.f32 %v2964, %v3052
        %v3054 = vpop.f32.mrb[0].mxu0
        %3055 = vdwg.mxu0
        %3056 = vmatprep.subr.mxu0 0.0
        %3057 = vmatpush1.msra.mxu0 %v2932
        %3058 = vmatprep.subr.mxu0 0.0
        %3059 = vmatpush1.msra.mxu0 %v2933
        %3060 = vmatprep.subr.mxu0 0.0
        %3061 = vmatpush1.msra.mxu0 %v2934
        %3062 = vmatprep.subr.mxu0 0.0
        %3063 = vmatpush1.msra.mxu0 %v2935
        %3064 = vmatprep.subr.mxu0 0.0
        %3065 = vmatpush1.msra.mxu0 %v2936
        %3066 = vmatprep.subr.mxu0 0.0
        %3067 = vmatpush1.msra.mxu0 %v2937
        %3068 = vmatprep.subr.mxu0 0.0
        %3069 = vmatpush1.msra.mxu0 %v2938
        %3070 = vmatprep.subr.mxu0 0.0
        %3071 = vmatpush1.msra.mxu0 %v2939
        %3072 = vmatprep.subr.mxu0 0.0
        %3073 = vmatpush1.msra.mxu0 %v2940
        %3074 = vmatprep.subr.mxu0 0.0
        %3075 = vmatpush1.msra.mxu0 %v2941
        %3076 = vmatprep.subr.mxu0 0.0
        %3077 = vmatpush1.msra.mxu0 %v2942
        %3078 = vmatprep.subr.mxu0 0.0
        %3079 = vmatpush1.msra.mxu0 %v2943
        %3080 = vmatprep.subr.mxu0 0.0
        %3081 = vmatpush1.msra.mxu0 %v2944
        %3082 = vmatprep.subr.mxu0 0.0
        %3083 = vmatpush1.msra.mxu0 %v2945
        %3084 = vmatprep.subr.mxu0 0.0
        %3085 = vmatpush1.msra.mxu0 %v2946
        %3086 = vmatprep.subr.mxu0 0.0
        %3087 = vmatpush1.msra.mxu0 %v2947
        %3088 = vmatprep.subr.mxu0 0.0
        %3089 = vmatpush1.msra.mxu0 %v2948
        %3090 = vmatprep.subr.mxu0 0.0
        %3091 = vmatpush1.msra.mxu0 %v2949
        %3092 = vmatprep.subr.mxu0 0.0
        %3093 = vmatpush1.msra.mxu0 %v2950
        %3094 = vmatprep.subr.mxu0 0.0
        %3095 = vmatpush1.msra.mxu0 %v2951
        %3096 = vmatprep.subr.mxu0 0.0
        %3097 = vmatpush1.msra.mxu0 %v2952
        %3098 = vmatprep.subr.mxu0 0.0
        %3099 = vmatpush1.msra.mxu0 %v2953
        %3100 = vmatprep.subr.mxu0 0.0
        %3101 = vmatpush1.msra.mxu0 %v2954
        %3102 = vmatprep.subr.mxu0 0.0
        %3103 = vmatpush1.msra.mxu0 %v2955
        %3104 = vmatprep.subr.mxu0 0.0
        %3105 = vmatpush1.msra.mxu0 %v2956
        %3106 = vmatprep.subr.mxu0 0.0
        %3107 = vmatpush1.msra.mxu0 %v2957
        %3108 = vmatprep.subr.mxu0 0.0
        %3109 = vmatpush1.msra.mxu0 %v2958
        %3110 = vmatprep.subr.mxu0 0.0
        %3111 = vmatpush1.msra.mxu0 %v2959
        %3112 = vmatprep.subr.mxu0 0.0
        %3113 = vmatpush1.msra.mxu0 %v2960
        %3114 = vmatprep.subr.mxu0 0.0
        %3115 = vmatpush1.msra.mxu0 %v2961
        %3116 = vmatprep.subr.mxu0 0.0
        %3117 = vmatpush1.msra.mxu0 %v2962
        %3118 = vmatprep.subr.mxu0 0.0
        %3119 = vmatpush1.msra.mxu0 %v2963
        %3120 = vmatprep.mubr.f32.mxu0 %v2981
        %3121 = vmatmul.mubr.f32.gmra.mrb[0].mxu0 %v2977
        %v3122 = vpop.f32.mrb[0].mxu0
        %v3123 = vadd.f32 %v3053, %v3122
        %v3124 = vpop.f32.mrb[0].mxu0
        %3125 = vdwg.mxu0
        %vm3126 = vcmask 73728
        %3127 = vst.msk [vmem:[%s322] sm:$0x1] %vm3126, %v3123
        %s3128 = sand.u32 %s225, 1
        %s3129 = scalar_lea.sflag [#allocation10], %s3128
        %s3130 = sand.u32 %s225, 1
        %s3131 = scalar_lea.vmem [#allocation9], %s3130
        // Predicated region
        $region57: #{cnn_forward.1} parent=55 // pred_check
          %p3132 = pneg %p235
        $region58: #{cnn_forward.1} parent=55 // pred_check_branch
          %3134 = sbr.rel (%p3132) target = $region60
        $region59: #{cnn_forward.1} parent=55 // pred_region
          %s3136 = ssub.s32 16, 16
          %3137 = vsyncadd %s3129, %s3136
          %s3138 = smul.addr %s23, 16
          %s3139 = scalar_lea.hbm %s9, %s3138
          %s3141 = sshll.u32 %s3131, 4
          %s3142 = int_to_ptr.vmem [resolvable:$true] %s3141
          %3144 = dma.vmem_to_hbm [thread:$0]  %s3142, 16, %s3139, %s3129
        $region60: #{cnn_forward.1} parent=55 // pred_fallthru
          _
      $region56: #{cnn_forward.1} parent=5 // pred_fallthru
        _
      %p3145 = scmp.le.s32.totalorder 2, %s18
      // Predicated region
      $region61: #{cnn_forward.1} parent=5 // pred_check
        %p3146 = pneg %p3145
      $region62: #{cnn_forward.1} parent=5 // pred_check_branch
        %3148 = sbr.rel (%p3146) target = $region64
      $region63: #{cnn_forward.1} parent=5 // pred_region
        %s3149 = ssub.s32 %s18, 2
        // Predicated region
        $region65: #{cnn_forward.1} parent=63 // pred_check
          %p3150 = pneg %p241
        $region66: #{cnn_forward.1} parent=63 // pred_check_branch
          %3152 = sbr.rel (%p3150) target = $region68
        $region67: #{cnn_forward.1} parent=63 // pred_region
          %s3153 = sand.u32 %s226, 1
          %s3154 = scalar_lea.sflag [#allocation10], %s3153
          %s3155 = sand.u32 %s226, 1
          %s3156 = scalar_lea.vmem [#allocation9], %s3155
          %3157 = dma.done %s3154, 16
        $region68: #{cnn_forward.1} parent=63 // pred_fallthru
          _
      $region64: #{cnn_forward.1} parent=5 // pred_fallthru
        _
    $region6: #{cnn_forward.1} parent=1 // loop_footer
      %s22 = sadd.s32 1, %s18
    $region7: #{cnn_forward.1} parent=1 // loop_footer_branch
      %17 = sbr.rel target = $region3
    $region8: #{cnn_forward.1} parent=1 // loop_exit
      _
    %3158 = vsyncpa [#allocation10], 1
    %s3159 = scalar_lea.sflag [#allocation10], 1
    %3160 = vsyncpa %s3159, 1

</llo_original>
